<compile_context>
chip_gen: v6e
topology: v6e:2x2x1
jax: 0.10.0
libtpu: 0.0.40
codegen_flags: <defaults>
</compile_context>

<pallas_src>
import functools

import jax
import jax.numpy as jnp
from jax.experimental import pallas as pl
from jax.experimental.pallas import tpu as pltpu

EPS = 1e-5       # PyTorch InstanceNorm2d default eps
HIDDEN = 128     # hidden_dim in the PyTorch module
_TAPS = tuple((dy, dx) for dy in (-1, 0, 1) for dx in (-1, 0, 1))


# ----------------------------- fused kernel ----------------------------------
def _spade_fused_kernel(x_ref, seg_ref, mask_ref, ws_ref, bs_ref, wgb_ref,
                        bgb_ref, o_ref, segbuf_ref, actbuf_ref, *, W):
    # x_ref   : (1, C, HW)          input features, spatial flattened on lanes
    # seg_ref : (1, Cin_pad, HW)    nearest-resized segmap (channels zero-padded)
    # mask_ref: (9, HW)             per-tap validity mask (f32 0/1)
    # ws_ref  : (9, 128, Cin_pad)   shared conv weights, per tap, transposed
    # bs_ref  : (128, 1)
    # wgb_ref : (9, 2C, 128)        [gamma; beta] conv weights, per tap, transposed
    # bgb_ref : (2C, 1)
    # o_ref   : (1, C, HW)
    # segbuf_ref: VMEM (Cin_pad, HW + 2W + 2)  flat halo buffer for the segmap
    # actbuf_ref: VMEM (128,     HW + 2W + 2)  flat halo buffer for the activation
    C = o_ref.shape[1]
    HW = o_ref.shape[2]
    Ch = actbuf_ref.shape[0]
    halo = W + 1

    # ---- InstanceNorm2d (affine=False): per-channel stats over the lane axis,
    #      single pass (sum and sum of squares -> cross-lane XLU reduces).
    x = x_ref[0].astype(jnp.float32)                                  # (C, HW)
    mean = jnp.mean(x, axis=1, keepdims=True)
    var = jnp.mean(x * x, axis=1, keepdims=True) - mean * mean
    normalized = (x - mean) * jax.lax.rsqrt(var + EPS)

    masks = mask_ref[...]                                             # (9, HW)

    # ---- shared 3x3 conv (label_ch -> 128) + ReLU on the MXU.
    # Flat halo buffer gives each tap a contiguous lane window; invalid border
    # positions are zeroed on the (tiny) input patch before the matmul.
    segbuf_ref[...] = jnp.zeros_like(segbuf_ref)
    segbuf_ref[:, pl.ds(halo, HW)] = seg_ref[0]
    actv = jnp.broadcast_to(bs_ref[...], (Ch, HW)).astype(jnp.float32)  # bias init
    for t, (dy, dx) in enumerate(_TAPS):
        off = dy * W + dx + halo
        patch = segbuf_ref[:, pl.ds(off, HW)] * masks[t:t + 1, :]     # (Cin_pad, HW)
        actv = actv + jnp.dot(ws_ref[t], patch,
                              preferred_element_type=jnp.float32)     # (128, HW)
    actv = jnp.maximum(actv, 0.0)

    # ---- gamma & beta 3x3 convs fused: one (2C,128)@(128,HW) matmul per tap,
    # HW on the MXU output lanes, bias folded into the accumulator init,
    # border contributions masked on the small (2C, HW) partial result.
    actbuf_ref[...] = jnp.zeros_like(actbuf_ref)
    actbuf_ref[:, pl.ds(halo, HW)] = actv
    acc = jnp.broadcast_to(bgb_ref[...], (2 * C, HW)).astype(jnp.float32)
    for t, (dy, dx) in enumerate(_TAPS):
        off = dy * W + dx + halo
        patch = actbuf_ref[:, pl.ds(off, HW)]                         # (128, HW)
        part = jnp.dot(wgb_ref[t], patch,
                       preferred_element_type=jnp.float32)            # (2C, HW)
        acc = acc + part * masks[t:t + 1, :]

    gamma = acc[:C, :]
    beta = acc[C:, :]
    out = normalized * (1.0 + gamma) + beta                           # (C, HW)
    o_ref[...] = out[None].astype(o_ref.dtype)                        # lane-dense store


# ----------------------------- wrapper ---------------------------------------
def _nearest_resize_nchw(seg, H, W):
    # matches F.interpolate(mode='nearest'): src = floor(dst * in/out)
    _, _, h, w = seg.shape
    rows = (jnp.arange(H) * h) // H
    cols = (jnp.arange(W) * w) // W
    return seg[:, :, rows[:, None], cols[None, :]]


def _make_tap_masks(H, W):
    yy = jnp.repeat(jnp.arange(H), W)
    xx = jnp.tile(jnp.arange(W), H)
    rows = []
    for dy, dx in _TAPS:
        valid = (yy + dy >= 0) & (yy + dy < H) & (xx + dx >= 0) & (xx + dx < W)
        rows.append(valid)
    return jnp.stack(rows).astype(jnp.float32)                        # (9, HW)


def spade_forward(x_nchw, seg_nchw, params):
    N, C, H, W = x_nchw.shape
    HW = H * W
    Cin = seg_nchw.shape[1]
    Cin_pad = ((Cin + 7) // 8) * 8

    # nearest upsample (gather) stays in XLA glue; everything else is one kernel.
    seg = _nearest_resize_nchw(seg_nchw, H, W).astype(jnp.float32)    # (N,Cin,H,W)
    seg_flat = jnp.pad(seg.reshape(N, Cin, HW),
                       ((0, 0), (0, Cin_pad - Cin), (0, 0)))
    x_flat = x_nchw.reshape(N, C, HW).astype(jnp.float32)
    masks = _make_tap_masks(H, W)

    # One-time weight repacking: per tap, transposed so HW sits on MXU lanes;
    # gamma/beta concatenated into a single (2C, 128) weight per tap.
    wS, wG, wB = params["w_shared"], params["w_gamma"], params["w_beta"]
    ws_taps = jnp.stack([
        jnp.pad(wS[dy + 1, dx + 1], ((0, Cin_pad - Cin), (0, 0))).T
        for dy, dx in _TAPS
    ]).astype(jnp.float32)                                            # (9, 128, Cin_pad)
    wgb_taps = jnp.stack([
        jnp.concatenate([wG[dy + 1, dx + 1], wB[dy + 1, dx + 1]], axis=1).T
        for dy, dx in _TAPS
    ]).astype(jnp.float32)                                            # (9, 2C, 128)
    bS = params["b_shared"].reshape(HIDDEN, 1).astype(jnp.float32)
    bGB = jnp.concatenate([params["b_gamma"], params["b_beta"]]
                          ).reshape(2 * C, 1).astype(jnp.float32)

    kernel = functools.partial(_spade_fused_kernel, W=W)
    pw = HW + 2 * W + 2                                               # flat halo width

    out_flat = pl.pallas_call(
        kernel,
        out_shape=jax.ShapeDtypeStruct((N, C, HW), jnp.float32),
        grid=(N,),
        in_specs=[
            pl.BlockSpec((1, C, HW), lambda n: (n, 0, 0)),
            pl.BlockSpec((1, Cin_pad, HW), lambda n: (n, 0, 0)),
            pl.BlockSpec((9, HW), lambda n: (0, 0)),
            pl.BlockSpec((9, HIDDEN, Cin_pad), lambda n: (0, 0, 0)),
            pl.BlockSpec((HIDDEN, 1), lambda n: (0, 0)),
            pl.BlockSpec((9, 2 * C, HIDDEN), lambda n: (0, 0, 0)),
            pl.BlockSpec((2 * C, 1), lambda n: (0, 0)),
        ],
        out_specs=pl.BlockSpec((1, C, HW), lambda n: (n, 0, 0)),
        scratch_shapes=[
            pltpu.VMEM((Cin_pad, pw), jnp.float32),
            pltpu.VMEM((HIDDEN, pw), jnp.float32),
        ],
        compiler_params=pltpu.CompilerParams(
            dimension_semantics=("parallel",),
            vmem_limit_bytes=32 * 1024 * 1024,
        ),
    )(x_flat, seg_flat, masks, ws_taps, bS, wgb_taps, bGB)

    return out_flat.reshape(N, C, H, W)


# ---------------------------- pure-JAX reference -----------------------------
def spade_reference(x, seg, params):
    mean = x.mean(axis=(2, 3), keepdims=True)
    var = ((x - mean) ** 2).mean(axis=(2, 3), keepdims=True)
    normalized = (x - mean) / jnp.sqrt(var + EPS)
    seg = _nearest_resize_nchw(seg, x.shape[2], x.shape[3])

    def conv(z, w, b):
        w_oihw = jnp.transpose(w, (3, 2, 0, 1))
        out = jax.lax.conv_general_dilated(
            z, w_oihw, window_strides=(1, 1), padding="SAME",
            dimension_numbers=("NCHW", "OIHW", "NCHW"))
        return out + b[None, :, None, None]

    actv = jax.nn.relu(conv(seg, params["w_shared"], params["b_shared"]))
    gamma = conv(actv, params["w_gamma"], params["b_gamma"])
    beta = conv(actv, params["w_beta"], params["b_beta"])
    return normalized * (1.0 + gamma) + beta


# --------------------------------- main ---------------------------------------
if __name__ == "__main__":
    norm_channels, label_channels = 4, 3
    N, H, W = 2, 16, 16
    key = jax.random.PRNGKey(0)
    kx, ks, k1, k2, k3, k4, k5, k6 = jax.random.split(key, 8)

    x = jax.random.normal(kx, (N, norm_channels, H, W), jnp.float32)
    segmap = jax.random.normal(ks, (N, label_channels, 8, 8), jnp.float32)

    # Deterministic synthetic parameters (shapes from SPADE.__init__); conv
    # weights stored as (KH, KW, Cin, Cout).
    params = {
        "w_shared": jax.random.normal(k1, (3, 3, label_channels, HIDDEN), jnp.float32) * 0.1,
        "b_shared": jax.random.normal(k2, (HIDDEN,), jnp.float32) * 0.1,
        "w_gamma": jax.random.normal(k3, (3, 3, HIDDEN, norm_channels), jnp.float32) * 0.05,
        "b_gamma": jax.random.normal(k4, (norm_channels,), jnp.float32) * 0.05,
        "w_beta": jax.random.normal(k5, (3, 3, HIDDEN, norm_channels), jnp.float32) * 0.05,
        "b_beta": jax.random.normal(k6, (norm_channels,), jnp.float32) * 0.05,
    }

    out = jax.jit(spade_forward)(x, segmap, params)
    out = jax.block_until_ready(out)

    ref = spade_reference(x, segmap, params)
    assert out.shape == (N, norm_channels, H, W)
    err = float(jnp.max(jnp.abs(out - ref)))
    if err < 1e-3:
        print("KERNEL_OK")
    else:
        print(f"MISMATCH max_abs_err={err}")
</pallas_src>

<mosaic_0001>
module attributes {stable_mosaic.version = 11 : i64} {
  func.func @_spade_fused_kernel(%arg0: i32, %arg1: memref<1x4x256xf32, #tpu.memory_space<vmem>>, %arg2: memref<1x8x256xf32, #tpu.memory_space<vmem>>, %arg3: memref<9x256xf32, #tpu.memory_space<vmem>>, %arg4: memref<9x128x8xf32, #tpu.memory_space<vmem>>, %arg5: memref<128x1xf32, #tpu.memory_space<vmem>>, %arg6: memref<9x8x128xf32, #tpu.memory_space<vmem>>, %arg7: memref<8x1xf32, #tpu.memory_space<vmem>>, %arg8: memref<1x4x256xf32, #tpu.memory_space<vmem>>, %arg9: memref<8x290xf32, #tpu.memory_space<vmem>>, %arg10: memref<128x290xf32, #tpu.memory_space<vmem>>) attributes {dimension_semantics = [#tpu.dimension_semantics<parallel>], iteration_bounds = array<i64: 2>, scalar_prefetch = 0 : i64, scratch_operands = 2 : i64, tpu.core_type = #tpu.core_type<tc>, window_params = [{transform_indices = @transform_0, window_bounds = array<i64: 1, 4, 256>}, {transform_indices = @transform_1, window_bounds = array<i64: 1, 8, 256>}, {pipeline_mode = #tpu.pipeline_mode<synchronous>, transform_indices = @transform_2, window_bounds = array<i64: 9, 256>}, {pipeline_mode = #tpu.pipeline_mode<synchronous>, transform_indices = @transform_3, window_bounds = array<i64: 9, 128, 8>}, {pipeline_mode = #tpu.pipeline_mode<synchronous>, transform_indices = @transform_4, window_bounds = array<i64: 128, 1>}, {pipeline_mode = #tpu.pipeline_mode<synchronous>, transform_indices = @transform_5, window_bounds = array<i64: 9, 8, 128>}, {pipeline_mode = #tpu.pipeline_mode<synchronous>, transform_indices = @transform_6, window_bounds = array<i64: 8, 1>}, {transform_indices = @transform_7, window_bounds = array<i64: 1, 4, 256>}]} {
    %c0 = arith.constant 0 : index
    %c0_0 = arith.constant 0 : index
    %c0_1 = arith.constant 0 : index
    %0 = vector.load %arg1[%c0, %c0_0, %c0_1] : memref<1x4x256xf32, #tpu.memory_space<vmem>>, vector<1x4x256xf32>
    %1 = vector.shape_cast %0 : vector<1x4x256xf32> to vector<4x256xf32>
    %cst = arith.constant dense<0.000000e+00> : vector<4xf32>
    %2 = vector.multi_reduction <add>, %1, %cst [1] : vector<4x256xf32> to vector<4xf32>
    %3 = vector.shape_cast %2 : vector<4xf32> to vector<4x1xf32>
    %cst_2 = arith.constant 2.560000e+02 : f32
    %4 = vector.broadcast %cst_2 : f32 to vector<4x1xf32>
    %5 = arith.divf %3, %4 : vector<4x1xf32>
    %6 = arith.mulf %1, %1 : vector<4x256xf32>
    %cst_3 = arith.constant dense<0.000000e+00> : vector<4xf32>
    %7 = vector.multi_reduction <add>, %6, %cst_3 [1] : vector<4x256xf32> to vector<4xf32>
    %8 = vector.shape_cast %7 : vector<4xf32> to vector<4x1xf32>
    %cst_4 = arith.constant 2.560000e+02 : f32
    %9 = vector.broadcast %cst_4 : f32 to vector<4x1xf32>
    %10 = arith.divf %8, %9 : vector<4x1xf32>
    %11 = arith.mulf %5, %5 : vector<4x1xf32>
    %12 = arith.subf %10, %11 : vector<4x1xf32>
    %13 = vector.broadcast %5 : vector<4x1xf32> to vector<4x256xf32>
    %14 = arith.subf %1, %13 : vector<4x256xf32>
    %cst_5 = arith.constant 9.99999974E-6 : f32
    %15 = vector.broadcast %cst_5 : f32 to vector<4x1xf32>
    %16 = arith.addf %12, %15 : vector<4x1xf32>
    %17 = math.rsqrt %16 : vector<4x1xf32>
    %18 = vector.broadcast %17 : vector<4x1xf32> to vector<4x256xf32>
    %19 = arith.mulf %14, %18 : vector<4x256xf32>
    %c0_6 = arith.constant 0 : index
    %c0_7 = arith.constant 0 : index
    %20 = vector.load %arg3[%c0_6, %c0_7] : memref<9x256xf32, #tpu.memory_space<vmem>>, vector<9x256xf32>
    %cst_8 = arith.constant 0.000000e+00 : f32
    %21 = vector.broadcast %cst_8 : f32 to vector<8x290xf32>
    %c0_9 = arith.constant 0 : index
    %c0_10 = arith.constant 0 : index
    %22 = vector.load %arg9[%c0_9, %c0_10] : memref<8x290xf32, #tpu.memory_space<vmem>>, vector<8x290xf32>
    tpu.vector_store %arg9[%c0_9, %c0_10], %21 {strides = array<i32>} : memref<8x290xf32, #tpu.memory_space<vmem>>, vector<8x290xf32>,
    %c0_11 = arith.constant 0 : index
    %c0_12 = arith.constant 0 : index
    %c0_13 = arith.constant 0 : index
    %23 = vector.load %arg2[%c0_11, %c0_12, %c0_13] : memref<1x8x256xf32, #tpu.memory_space<vmem>>, vector<1x8x256xf32>
    %24 = vector.shape_cast %23 : vector<1x8x256xf32> to vector<8x256xf32>
    %c0_14 = arith.constant 0 : index
    %c17 = arith.constant 17 : index
    %25 = vector.load %arg9[%c0_14, %c17] : memref<8x290xf32, #tpu.memory_space<vmem>>, vector<8x256xf32>
    tpu.vector_store %arg9[%c0_14, %c17], %24 {strides = array<i32>} : memref<8x290xf32, #tpu.memory_space<vmem>>, vector<8x256xf32>,
    %c0_15 = arith.constant 0 : index
    %c0_16 = arith.constant 0 : index
    %26 = vector.load %arg5[%c0_15, %c0_16] : memref<128x1xf32, #tpu.memory_space<vmem>>, vector<128x1xf32>
    %27 = vector.shape_cast %26 : vector<128x1xf32> to vector<128x1xf32>
    %28 = vector.broadcast %27 : vector<128x1xf32> to vector<128x256xf32>
    %c0_17 = arith.constant 0 : index
    %c0_18 = arith.constant 0 : index
    %29 = vector.load %arg9[%c0_17, %c0_18] : memref<8x290xf32, #tpu.memory_space<vmem>>, vector<8x256xf32>
    %30 = vector.extract_strided_slice %20 {offsets = [0, 0], sizes = [1, 256], strides = [1, 1]} : vector<9x256xf32> to vector<1x256xf32>
    %31 = vector.broadcast %30 : vector<1x256xf32> to vector<8x256xf32>
    %32 = arith.mulf %29, %31 : vector<8x256xf32>
    %c0_19 = arith.constant 0 : index
    %c0_20 = arith.constant 0 : index
    %c0_21 = arith.constant 0 : index
    %33 = vector.load %arg4[%c0_19, %c0_20, %c0_21] : memref<9x128x8xf32, #tpu.memory_space<vmem>>, vector<1x128x8xf32>
    %34 = vector.shape_cast %33 : vector<1x128x8xf32> to vector<128x8xf32>
    %cst_22 = arith.constant dense<0.000000e+00> : vector<128x256xf32>
    %35 = tpu.matmul %34, %32, %cst_22 {dimension_numbers = #tpu.dot_dimension_numbers<[1], [0], [0], [1], [0, 0, 1, 1], [], []>} : vector<128x8xf32>, vector<8x256xf32>, vector<128x256xf32> -> vector<128x256xf32>
    %36 = arith.addf %28, %35 : vector<128x256xf32>
    %c0_23 = arith.constant 0 : index
    %c1 = arith.constant 1 : index
    %37 = vector.load %arg9[%c0_23, %c1] : memref<8x290xf32, #tpu.memory_space<vmem>>, vector<8x256xf32>
    %38 = vector.extract_strided_slice %20 {offsets = [1, 0], sizes = [1, 256], strides = [1, 1]} : vector<9x256xf32> to vector<1x256xf32>
    %39 = vector.broadcast %38 : vector<1x256xf32> to vector<8x256xf32>
    %40 = arith.mulf %37, %39 : vector<8x256xf32>
    %c1_24 = arith.constant 1 : index
    %c0_25 = arith.constant 0 : index
    %c0_26 = arith.constant 0 : index
    %41 = vector.load %arg4[%c1_24, %c0_25, %c0_26] : memref<9x128x8xf32, #tpu.memory_space<vmem>>, vector<1x128x8xf32>
    %42 = vector.shape_cast %41 : vector<1x128x8xf32> to vector<128x8xf32>
    %cst_27 = arith.constant dense<0.000000e+00> : vector<128x256xf32>
    %43 = tpu.matmul %42, %40, %cst_27 {dimension_numbers = #tpu.dot_dimension_numbers<[1], [0], [0], [1], [0, 0, 1, 1], [], []>} : vector<128x8xf32>, vector<8x256xf32>, vector<128x256xf32> -> vector<128x256xf32>
    %44 = arith.addf %36, %43 : vector<128x256xf32>
    %c0_28 = arith.constant 0 : index
    %c2 = arith.constant 2 : index
    %45 = vector.load %arg9[%c0_28, %c2] : memref<8x290xf32, #tpu.memory_space<vmem>>, vector<8x256xf32>
    %46 = vector.extract_strided_slice %20 {offsets = [2, 0], sizes = [1, 256], strides = [1, 1]} : vector<9x256xf32> to vector<1x256xf32>
    %47 = vector.broadcast %46 : vector<1x256xf32> to vector<8x256xf32>
    %48 = arith.mulf %45, %47 : vector<8x256xf32>
    %c2_29 = arith.constant 2 : index
    %c0_30 = arith.constant 0 : index
    %c0_31 = arith.constant 0 : index
    %49 = vector.load %arg4[%c2_29, %c0_30, %c0_31] : memref<9x128x8xf32, #tpu.memory_space<vmem>>, vector<1x128x8xf32>
    %50 = vector.shape_cast %49 : vector<1x128x8xf32> to vector<128x8xf32>
    %cst_32 = arith.constant dense<0.000000e+00> : vector<128x256xf32>
    %51 = tpu.matmul %50, %48, %cst_32 {dimension_numbers = #tpu.dot_dimension_numbers<[1], [0], [0], [1], [0, 0, 1, 1], [], []>} : vector<128x8xf32>, vector<8x256xf32>, vector<128x256xf32> -> vector<128x256xf32>
    %52 = arith.addf %44, %51 : vector<128x256xf32>
    %c0_33 = arith.constant 0 : index
    %c16 = arith.constant 16 : index
    %53 = vector.load %arg9[%c0_33, %c16] : memref<8x290xf32, #tpu.memory_space<vmem>>, vector<8x256xf32>
    %54 = vector.extract_strided_slice %20 {offsets = [3, 0], sizes = [1, 256], strides = [1, 1]} : vector<9x256xf32> to vector<1x256xf32>
    %55 = vector.broadcast %54 : vector<1x256xf32> to vector<8x256xf32>
    %56 = arith.mulf %53, %55 : vector<8x256xf32>
    %c3 = arith.constant 3 : index
    %c0_34 = arith.constant 0 : index
    %c0_35 = arith.constant 0 : index
    %57 = vector.load %arg4[%c3, %c0_34, %c0_35] : memref<9x128x8xf32, #tpu.memory_space<vmem>>, vector<1x128x8xf32>
    %58 = vector.shape_cast %57 : vector<1x128x8xf32> to vector<128x8xf32>
    %cst_36 = arith.constant dense<0.000000e+00> : vector<128x256xf32>
    %59 = tpu.matmul %58, %56, %cst_36 {dimension_numbers = #tpu.dot_dimension_numbers<[1], [0], [0], [1], [0, 0, 1, 1], [], []>} : vector<128x8xf32>, vector<8x256xf32>, vector<128x256xf32> -> vector<128x256xf32>
    %60 = arith.addf %52, %59 : vector<128x256xf32>
    %c0_37 = arith.constant 0 : index
    %c17_38 = arith.constant 17 : index
    %61 = vector.load %arg9[%c0_37, %c17_38] : memref<8x290xf32, #tpu.memory_space<vmem>>, vector<8x256xf32>
    %62 = vector.extract_strided_slice %20 {offsets = [4, 0], sizes = [1, 256], strides = [1, 1]} : vector<9x256xf32> to vector<1x256xf32>
    %63 = vector.broadcast %62 : vector<1x256xf32> to vector<8x256xf32>
    %64 = arith.mulf %61, %63 : vector<8x256xf32>
    %c4 = arith.constant 4 : index
    %c0_39 = arith.constant 0 : index
    %c0_40 = arith.constant 0 : index
    %65 = vector.load %arg4[%c4, %c0_39, %c0_40] : memref<9x128x8xf32, #tpu.memory_space<vmem>>, vector<1x128x8xf32>
    %66 = vector.shape_cast %65 : vector<1x128x8xf32> to vector<128x8xf32>
    %cst_41 = arith.constant dense<0.000000e+00> : vector<128x256xf32>
    %67 = tpu.matmul %66, %64, %cst_41 {dimension_numbers = #tpu.dot_dimension_numbers<[1], [0], [0], [1], [0, 0, 1, 1], [], []>} : vector<128x8xf32>, vector<8x256xf32>, vector<128x256xf32> -> vector<128x256xf32>
    %68 = arith.addf %60, %67 : vector<128x256xf32>
    %c0_42 = arith.constant 0 : index
    %c18 = arith.constant 18 : index
    %69 = vector.load %arg9[%c0_42, %c18] : memref<8x290xf32, #tpu.memory_space<vmem>>, vector<8x256xf32>
    %70 = vector.extract_strided_slice %20 {offsets = [5, 0], sizes = [1, 256], strides = [1, 1]} : vector<9x256xf32> to vector<1x256xf32>
    %71 = vector.broadcast %70 : vector<1x256xf32> to vector<8x256xf32>
    %72 = arith.mulf %69, %71 : vector<8x256xf32>
    %c5 = arith.constant 5 : index
    %c0_43 = arith.constant 0 : index
    %c0_44 = arith.constant 0 : index
    %73 = vector.load %arg4[%c5, %c0_43, %c0_44] : memref<9x128x8xf32, #tpu.memory_space<vmem>>, vector<1x128x8xf32>
    %74 = vector.shape_cast %73 : vector<1x128x8xf32> to vector<128x8xf32>
    %cst_45 = arith.constant dense<0.000000e+00> : vector<128x256xf32>
    %75 = tpu.matmul %74, %72, %cst_45 {dimension_numbers = #tpu.dot_dimension_numbers<[1], [0], [0], [1], [0, 0, 1, 1], [], []>} : vector<128x8xf32>, vector<8x256xf32>, vector<128x256xf32> -> vector<128x256xf32>
    %76 = arith.addf %68, %75 : vector<128x256xf32>
    %c0_46 = arith.constant 0 : index
    %c32 = arith.constant 32 : index
    %77 = vector.load %arg9[%c0_46, %c32] : memref<8x290xf32, #tpu.memory_space<vmem>>, vector<8x256xf32>
    %78 = vector.extract_strided_slice %20 {offsets = [6, 0], sizes = [1, 256], strides = [1, 1]} : vector<9x256xf32> to vector<1x256xf32>
    %79 = vector.broadcast %78 : vector<1x256xf32> to vector<8x256xf32>
    %80 = arith.mulf %77, %79 : vector<8x256xf32>
    %c6 = arith.constant 6 : index
    %c0_47 = arith.constant 0 : index
    %c0_48 = arith.constant 0 : index
    %81 = vector.load %arg4[%c6, %c0_47, %c0_48] : memref<9x128x8xf32, #tpu.memory_space<vmem>>, vector<1x128x8xf32>
    %82 = vector.shape_cast %81 : vector<1x128x8xf32> to vector<128x8xf32>
    %cst_49 = arith.constant dense<0.000000e+00> : vector<128x256xf32>
    %83 = tpu.matmul %82, %80, %cst_49 {dimension_numbers = #tpu.dot_dimension_numbers<[1], [0], [0], [1], [0, 0, 1, 1], [], []>} : vector<128x8xf32>, vector<8x256xf32>, vector<128x256xf32> -> vector<128x256xf32>
    %84 = arith.addf %76, %83 : vector<128x256xf32>
    %c0_50 = arith.constant 0 : index
    %c33 = arith.constant 33 : index
    %85 = vector.load %arg9[%c0_50, %c33] : memref<8x290xf32, #tpu.memory_space<vmem>>, vector<8x256xf32>
    %86 = vector.extract_strided_slice %20 {offsets = [7, 0], sizes = [1, 256], strides = [1, 1]} : vector<9x256xf32> to vector<1x256xf32>
    %87 = vector.broadcast %86 : vector<1x256xf32> to vector<8x256xf32>
    %88 = arith.mulf %85, %87 : vector<8x256xf32>
    %c7 = arith.constant 7 : index
    %c0_51 = arith.constant 0 : index
    %c0_52 = arith.constant 0 : index
    %89 = vector.load %arg4[%c7, %c0_51, %c0_52] : memref<9x128x8xf32, #tpu.memory_space<vmem>>, vector<1x128x8xf32>
    %90 = vector.shape_cast %89 : vector<1x128x8xf32> to vector<128x8xf32>
    %cst_53 = arith.constant dense<0.000000e+00> : vector<128x256xf32>
    %91 = tpu.matmul %90, %88, %cst_53 {dimension_numbers = #tpu.dot_dimension_numbers<[1], [0], [0], [1], [0, 0, 1, 1], [], []>} : vector<128x8xf32>, vector<8x256xf32>, vector<128x256xf32> -> vector<128x256xf32>
    %92 = arith.addf %84, %91 : vector<128x256xf32>
    %c0_54 = arith.constant 0 : index
    %c34 = arith.constant 34 : index
    %93 = vector.load %arg9[%c0_54, %c34] : memref<8x290xf32, #tpu.memory_space<vmem>>, vector<8x256xf32>
    %94 = vector.extract_strided_slice %20 {offsets = [8, 0], sizes = [1, 256], strides = [1, 1]} : vector<9x256xf32> to vector<1x256xf32>
    %95 = vector.broadcast %94 : vector<1x256xf32> to vector<8x256xf32>
    %96 = arith.mulf %93, %95 : vector<8x256xf32>
    %c8 = arith.constant 8 : index
    %c0_55 = arith.constant 0 : index
    %c0_56 = arith.constant 0 : index
    %97 = vector.load %arg4[%c8, %c0_55, %c0_56] : memref<9x128x8xf32, #tpu.memory_space<vmem>>, vector<1x128x8xf32>
    %98 = vector.shape_cast %97 : vector<1x128x8xf32> to vector<128x8xf32>
    %cst_57 = arith.constant dense<0.000000e+00> : vector<128x256xf32>
    %99 = tpu.matmul %98, %96, %cst_57 {dimension_numbers = #tpu.dot_dimension_numbers<[1], [0], [0], [1], [0, 0, 1, 1], [], []>} : vector<128x8xf32>, vector<8x256xf32>, vector<128x256xf32> -> vector<128x256xf32>
    %100 = arith.addf %92, %99 : vector<128x256xf32>
    %cst_58 = arith.constant 0.000000e+00 : f32
    %101 = vector.broadcast %cst_58 : f32 to vector<128x256xf32>
    %102 = arith.maximumf %100, %101 : vector<128x256xf32>
    %cst_59 = arith.constant 0.000000e+00 : f32
    %103 = vector.broadcast %cst_59 : f32 to vector<128x290xf32>
    %c0_60 = arith.constant 0 : index
    %c0_61 = arith.constant 0 : index
    %104 = vector.load %arg10[%c0_60, %c0_61] : memref<128x290xf32, #tpu.memory_space<vmem>>, vector<128x290xf32>
    tpu.vector_store %arg10[%c0_60, %c0_61], %103 {strides = array<i32>} : memref<128x290xf32, #tpu.memory_space<vmem>>, vector<128x290xf32>,
    %c0_62 = arith.constant 0 : index
    %c17_63 = arith.constant 17 : index
    %105 = vector.load %arg10[%c0_62, %c17_63] : memref<128x290xf32, #tpu.memory_space<vmem>>, vector<128x256xf32>
    tpu.vector_store %arg10[%c0_62, %c17_63], %102 {strides = array<i32>} : memref<128x290xf32, #tpu.memory_space<vmem>>, vector<128x256xf32>,
    %c0_64 = arith.constant 0 : index
    %c0_65 = arith.constant 0 : index
    %106 = vector.load %arg7[%c0_64, %c0_65] : memref<8x1xf32, #tpu.memory_space<vmem>>, vector<8x1xf32>
    %107 = vector.shape_cast %106 : vector<8x1xf32> to vector<8x1xf32>
    %108 = vector.broadcast %107 : vector<8x1xf32> to vector<8x256xf32>
    %c0_66 = arith.constant 0 : index
    %c0_67 = arith.constant 0 : index
    %109 = vector.load %arg10[%c0_66, %c0_67] : memref<128x290xf32, #tpu.memory_space<vmem>>, vector<128x256xf32>
    %c0_68 = arith.constant 0 : index
    %c0_69 = arith.constant 0 : index
    %c0_70 = arith.constant 0 : index
    %110 = vector.load %arg6[%c0_68, %c0_69, %c0_70] : memref<9x8x128xf32, #tpu.memory_space<vmem>>, vector<1x8x128xf32>
    %111 = vector.shape_cast %110 : vector<1x8x128xf32> to vector<8x128xf32>
    %cst_71 = arith.constant dense<0.000000e+00> : vector<8x256xf32>
    %112 = tpu.matmul %111, %109, %cst_71 {dimension_numbers = #tpu.dot_dimension_numbers<[1], [0], [0], [1], [0, 0, 1, 1], [], []>} : vector<8x128xf32>, vector<128x256xf32>, vector<8x256xf32> -> vector<8x256xf32>
    %113 = vector.extract_strided_slice %20 {offsets = [0, 0], sizes = [1, 256], strides = [1, 1]} : vector<9x256xf32> to vector<1x256xf32>
    %114 = vector.broadcast %113 : vector<1x256xf32> to vector<8x256xf32>
    %115 = arith.mulf %112, %114 : vector<8x256xf32>
    %116 = arith.addf %108, %115 : vector<8x256xf32>
    %c0_72 = arith.constant 0 : index
    %c1_73 = arith.constant 1 : index
    %117 = vector.load %arg10[%c0_72, %c1_73] : memref<128x290xf32, #tpu.memory_space<vmem>>, vector<128x256xf32>
    %c1_74 = arith.constant 1 : index
    %c0_75 = arith.constant 0 : index
    %c0_76 = arith.constant 0 : index
    %118 = vector.load %arg6[%c1_74, %c0_75, %c0_76] : memref<9x8x128xf32, #tpu.memory_space<vmem>>, vector<1x8x128xf32>
    %119 = vector.shape_cast %118 : vector<1x8x128xf32> to vector<8x128xf32>
    %cst_77 = arith.constant dense<0.000000e+00> : vector<8x256xf32>
    %120 = tpu.matmul %119, %117, %cst_77 {dimension_numbers = #tpu.dot_dimension_numbers<[1], [0], [0], [1], [0, 0, 1, 1], [], []>} : vector<8x128xf32>, vector<128x256xf32>, vector<8x256xf32> -> vector<8x256xf32>
    %121 = vector.extract_strided_slice %20 {offsets = [1, 0], sizes = [1, 256], strides = [1, 1]} : vector<9x256xf32> to vector<1x256xf32>
    %122 = vector.broadcast %121 : vector<1x256xf32> to vector<8x256xf32>
    %123 = arith.mulf %120, %122 : vector<8x256xf32>
    %124 = arith.addf %116, %123 : vector<8x256xf32>
    %c0_78 = arith.constant 0 : index
    %c2_79 = arith.constant 2 : index
    %125 = vector.load %arg10[%c0_78, %c2_79] : memref<128x290xf32, #tpu.memory_space<vmem>>, vector<128x256xf32>
    %c2_80 = arith.constant 2 : index
    %c0_81 = arith.constant 0 : index
    %c0_82 = arith.constant 0 : index
    %126 = vector.load %arg6[%c2_80, %c0_81, %c0_82] : memref<9x8x128xf32, #tpu.memory_space<vmem>>, vector<1x8x128xf32>
    %127 = vector.shape_cast %126 : vector<1x8x128xf32> to vector<8x128xf32>
    %cst_83 = arith.constant dense<0.000000e+00> : vector<8x256xf32>
    %128 = tpu.matmul %127, %125, %cst_83 {dimension_numbers = #tpu.dot_dimension_numbers<[1], [0], [0], [1], [0, 0, 1, 1], [], []>} : vector<8x128xf32>, vector<128x256xf32>, vector<8x256xf32> -> vector<8x256xf32>
    %129 = vector.extract_strided_slice %20 {offsets = [2, 0], sizes = [1, 256], strides = [1, 1]} : vector<9x256xf32> to vector<1x256xf32>
    %130 = vector.broadcast %129 : vector<1x256xf32> to vector<8x256xf32>
    %131 = arith.mulf %128, %130 : vector<8x256xf32>
    %132 = arith.addf %124, %131 : vector<8x256xf32>
    %c0_84 = arith.constant 0 : index
    %c16_85 = arith.constant 16 : index
    %133 = vector.load %arg10[%c0_84, %c16_85] : memref<128x290xf32, #tpu.memory_space<vmem>>, vector<128x256xf32>
    %c3_86 = arith.constant 3 : index
    %c0_87 = arith.constant 0 : index
    %c0_88 = arith.constant 0 : index
    %134 = vector.load %arg6[%c3_86, %c0_87, %c0_88] : memref<9x8x128xf32, #tpu.memory_space<vmem>>, vector<1x8x128xf32>
    %135 = vector.shape_cast %134 : vector<1x8x128xf32> to vector<8x128xf32>
    %cst_89 = arith.constant dense<0.000000e+00> : vector<8x256xf32>
    %136 = tpu.matmul %135, %133, %cst_89 {dimension_numbers = #tpu.dot_dimension_numbers<[1], [0], [0], [1], [0, 0, 1, 1], [], []>} : vector<8x128xf32>, vector<128x256xf32>, vector<8x256xf32> -> vector<8x256xf32>
    %137 = vector.extract_strided_slice %20 {offsets = [3, 0], sizes = [1, 256], strides = [1, 1]} : vector<9x256xf32> to vector<1x256xf32>
    %138 = vector.broadcast %137 : vector<1x256xf32> to vector<8x256xf32>
    %139 = arith.mulf %136, %138 : vector<8x256xf32>
    %140 = arith.addf %132, %139 : vector<8x256xf32>
    %c0_90 = arith.constant 0 : index
    %c17_91 = arith.constant 17 : index
    %141 = vector.load %arg10[%c0_90, %c17_91] : memref<128x290xf32, #tpu.memory_space<vmem>>, vector<128x256xf32>
    %c4_92 = arith.constant 4 : index
    %c0_93 = arith.constant 0 : index
    %c0_94 = arith.constant 0 : index
    %142 = vector.load %arg6[%c4_92, %c0_93, %c0_94] : memref<9x8x128xf32, #tpu.memory_space<vmem>>, vector<1x8x128xf32>
    %143 = vector.shape_cast %142 : vector<1x8x128xf32> to vector<8x128xf32>
    %cst_95 = arith.constant dense<0.000000e+00> : vector<8x256xf32>
    %144 = tpu.matmul %143, %141, %cst_95 {dimension_numbers = #tpu.dot_dimension_numbers<[1], [0], [0], [1], [0, 0, 1, 1], [], []>} : vector<8x128xf32>, vector<128x256xf32>, vector<8x256xf32> -> vector<8x256xf32>
    %145 = vector.extract_strided_slice %20 {offsets = [4, 0], sizes = [1, 256], strides = [1, 1]} : vector<9x256xf32> to vector<1x256xf32>
    %146 = vector.broadcast %145 : vector<1x256xf32> to vector<8x256xf32>
    %147 = arith.mulf %144, %146 : vector<8x256xf32>
    %148 = arith.addf %140, %147 : vector<8x256xf32>
    %c0_96 = arith.constant 0 : index
    %c18_97 = arith.constant 18 : index
    %149 = vector.load %arg10[%c0_96, %c18_97] : memref<128x290xf32, #tpu.memory_space<vmem>>, vector<128x256xf32>
    %c5_98 = arith.constant 5 : index
    %c0_99 = arith.constant 0 : index
    %c0_100 = arith.constant 0 : index
    %150 = vector.load %arg6[%c5_98, %c0_99, %c0_100] : memref<9x8x128xf32, #tpu.memory_space<vmem>>, vector<1x8x128xf32>
    %151 = vector.shape_cast %150 : vector<1x8x128xf32> to vector<8x128xf32>
    %cst_101 = arith.constant dense<0.000000e+00> : vector<8x256xf32>
    %152 = tpu.matmul %151, %149, %cst_101 {dimension_numbers = #tpu.dot_dimension_numbers<[1], [0], [0], [1], [0, 0, 1, 1], [], []>} : vector<8x128xf32>, vector<128x256xf32>, vector<8x256xf32> -> vector<8x256xf32>
    %153 = vector.extract_strided_slice %20 {offsets = [5, 0], sizes = [1, 256], strides = [1, 1]} : vector<9x256xf32> to vector<1x256xf32>
    %154 = vector.broadcast %153 : vector<1x256xf32> to vector<8x256xf32>
    %155 = arith.mulf %152, %154 : vector<8x256xf32>
    %156 = arith.addf %148, %155 : vector<8x256xf32>
    %c0_102 = arith.constant 0 : index
    %c32_103 = arith.constant 32 : index
    %157 = vector.load %arg10[%c0_102, %c32_103] : memref<128x290xf32, #tpu.memory_space<vmem>>, vector<128x256xf32>
    %c6_104 = arith.constant 6 : index
    %c0_105 = arith.constant 0 : index
    %c0_106 = arith.constant 0 : index
    %158 = vector.load %arg6[%c6_104, %c0_105, %c0_106] : memref<9x8x128xf32, #tpu.memory_space<vmem>>, vector<1x8x128xf32>
    %159 = vector.shape_cast %158 : vector<1x8x128xf32> to vector<8x128xf32>
    %cst_107 = arith.constant dense<0.000000e+00> : vector<8x256xf32>
    %160 = tpu.matmul %159, %157, %cst_107 {dimension_numbers = #tpu.dot_dimension_numbers<[1], [0], [0], [1], [0, 0, 1, 1], [], []>} : vector<8x128xf32>, vector<128x256xf32>, vector<8x256xf32> -> vector<8x256xf32>
    %161 = vector.extract_strided_slice %20 {offsets = [6, 0], sizes = [1, 256], strides = [1, 1]} : vector<9x256xf32> to vector<1x256xf32>
    %162 = vector.broadcast %161 : vector<1x256xf32> to vector<8x256xf32>
    %163 = arith.mulf %160, %162 : vector<8x256xf32>
    %164 = arith.addf %156, %163 : vector<8x256xf32>
    %c0_108 = arith.constant 0 : index
    %c33_109 = arith.constant 33 : index
    %165 = vector.load %arg10[%c0_108, %c33_109] : memref<128x290xf32, #tpu.memory_space<vmem>>, vector<128x256xf32>
    %c7_110 = arith.constant 7 : index
    %c0_111 = arith.constant 0 : index
    %c0_112 = arith.constant 0 : index
    %166 = vector.load %arg6[%c7_110, %c0_111, %c0_112] : memref<9x8x128xf32, #tpu.memory_space<vmem>>, vector<1x8x128xf32>
    %167 = vector.shape_cast %166 : vector<1x8x128xf32> to vector<8x128xf32>
    %cst_113 = arith.constant dense<0.000000e+00> : vector<8x256xf32>
    %168 = tpu.matmul %167, %165, %cst_113 {dimension_numbers = #tpu.dot_dimension_numbers<[1], [0], [0], [1], [0, 0, 1, 1], [], []>} : vector<8x128xf32>, vector<128x256xf32>, vector<8x256xf32> -> vector<8x256xf32>
    %169 = vector.extract_strided_slice %20 {offsets = [7, 0], sizes = [1, 256], strides = [1, 1]} : vector<9x256xf32> to vector<1x256xf32>
    %170 = vector.broadcast %169 : vector<1x256xf32> to vector<8x256xf32>
    %171 = arith.mulf %168, %170 : vector<8x256xf32>
    %172 = arith.addf %164, %171 : vector<8x256xf32>
    %c0_114 = arith.constant 0 : index
    %c34_115 = arith.constant 34 : index
    %173 = vector.load %arg10[%c0_114, %c34_115] : memref<128x290xf32, #tpu.memory_space<vmem>>, vector<128x256xf32>
    %c8_116 = arith.constant 8 : index
    %c0_117 = arith.constant 0 : index
    %c0_118 = arith.constant 0 : index
    %174 = vector.load %arg6[%c8_116, %c0_117, %c0_118] : memref<9x8x128xf32, #tpu.memory_space<vmem>>, vector<1x8x128xf32>
    %175 = vector.shape_cast %174 : vector<1x8x128xf32> to vector<8x128xf32>
    %cst_119 = arith.constant dense<0.000000e+00> : vector<8x256xf32>
    %176 = tpu.matmul %175, %173, %cst_119 {dimension_numbers = #tpu.dot_dimension_numbers<[1], [0], [0], [1], [0, 0, 1, 1], [], []>} : vector<8x128xf32>, vector<128x256xf32>, vector<8x256xf32> -> vector<8x256xf32>
    %177 = vector.extract_strided_slice %20 {offsets = [8, 0], sizes = [1, 256], strides = [1, 1]} : vector<9x256xf32> to vector<1x256xf32>
    %178 = vector.broadcast %177 : vector<1x256xf32> to vector<8x256xf32>
    %179 = arith.mulf %176, %178 : vector<8x256xf32>
    %180 = arith.addf %172, %179 : vector<8x256xf32>
    %181 = vector.extract_strided_slice %180 {offsets = [0, 0], sizes = [4, 256], strides = [1, 1]} : vector<8x256xf32> to vector<4x256xf32>
    %182 = vector.extract_strided_slice %180 {offsets = [4, 0], sizes = [4, 256], strides = [1, 1]} : vector<8x256xf32> to vector<4x256xf32>
    %cst_120 = arith.constant 1.000000e+00 : f32
    %183 = vector.broadcast %cst_120 : f32 to vector<4x256xf32>
    %184 = arith.addf %183, %181 : vector<4x256xf32>
    %185 = arith.mulf %19, %184 : vector<4x256xf32>
    %186 = arith.addf %185, %182 : vector<4x256xf32>
    %187 = vector.shape_cast %186 : vector<4x256xf32> to vector<1x4x256xf32>
    %c0_121 = arith.constant 0 : index
    %c0_122 = arith.constant 0 : index
    %c0_123 = arith.constant 0 : index
    %188 = vector.load %arg8[%c0_121, %c0_122, %c0_123] : memref<1x4x256xf32, #tpu.memory_space<vmem>>, vector<1x4x256xf32>
    tpu.vector_store %arg8[%c0_121, %c0_122, %c0_123], %187 {strides = array<i32>} : memref<1x4x256xf32, #tpu.memory_space<vmem>>, vector<1x4x256xf32>,
    return
  }
  func.func @transform_0(%arg0: i32) -> (i32, i32, i32) {
    %c0_i32 = arith.constant 0 : i32
    %c0_i32_0 = arith.constant 0 : i32
    %c0_i32_1 = arith.constant 0 : i32
    return %arg0, %c0_i32, %c0_i32_0 : i32, i32, i32
  }
  func.func @transform_1(%arg0: i32) -> (i32, i32, i32) {
    %c0_i32 = arith.constant 0 : i32
    %c0_i32_0 = arith.constant 0 : i32
    %c0_i32_1 = arith.constant 0 : i32
    return %arg0, %c0_i32, %c0_i32_0 : i32, i32, i32
  }
  func.func @transform_2(%arg0: i32) -> (i32, i32) {
    %c0_i32 = arith.constant 0 : i32
    %c0_i32_0 = arith.constant 0 : i32
    %c0_i32_1 = arith.constant 0 : i32
    return %c0_i32, %c0_i32_0 : i32, i32
  }
  func.func @transform_3(%arg0: i32) -> (i32, i32, i32) {
    %c0_i32 = arith.constant 0 : i32
    %c0_i32_0 = arith.constant 0 : i32
    %c0_i32_1 = arith.constant 0 : i32
    %c0_i32_2 = arith.constant 0 : i32
    return %c0_i32, %c0_i32_0, %c0_i32_1 : i32, i32, i32
  }
  func.func @transform_4(%arg0: i32) -> (i32, i32) {
    %c0_i32 = arith.constant 0 : i32
    %c0_i32_0 = arith.constant 0 : i32
    %c0_i32_1 = arith.constant 0 : i32
    return %c0_i32, %c0_i32_0 : i32, i32
  }
  func.func @transform_5(%arg0: i32) -> (i32, i32, i32) {
    %c0_i32 = arith.constant 0 : i32
    %c0_i32_0 = arith.constant 0 : i32
    %c0_i32_1 = arith.constant 0 : i32
    %c0_i32_2 = arith.constant 0 : i32
    return %c0_i32, %c0_i32_0, %c0_i32_1 : i32, i32, i32
  }
  func.func @transform_6(%arg0: i32) -> (i32, i32) {
    %c0_i32 = arith.constant 0 : i32
    %c0_i32_0 = arith.constant 0 : i32
    %c0_i32_1 = arith.constant 0 : i32
    return %c0_i32, %c0_i32_0 : i32, i32
  }
  func.func @transform_7(%arg0: i32) -> (i32, i32, i32) {
    %c0_i32 = arith.constant 0 : i32
    %c0_i32_0 = arith.constant 0 : i32
    %c0_i32_1 = arith.constant 0 : i32
    return %arg0, %c0_i32, %c0_i32_0 : i32, i32, i32
  }
}

</mosaic_0001>

<llo_original>
// kernel: spade_forward.1
$region0: #{spade_forward.1}
  #allocation0 [shape = 'u32[]', space=smem, size = 0x4, offset = 0x4, fixed_abs, tag = 'smem constant byte address 0x4 - core index']
  #allocation1 [shape = 'u32[144,128]{1,0:T(1,128)}', space=vmem, size = 0x12000, scoped, tag = 'internal scratch']
  #allocation2 [shape = 'f32[8,290]{1,0:T(8,128)}', space=vmem, size = 0x3000, scoped, tag = 'scratch operand']
  #allocation3 [shape = 'f32[128,290]{1,0:T(8,128)}', space=vmem, size = 0x30000, scoped, tag = 'scratch operand']
  %s0 = inlined_call_operand.vmem [shape: f32[2,4,256], index: 0, kind: input, shape index: {}]
  %s1 = inlined_call_operand.vmem [shape: f32[2,8,256], index: 1, kind: input, shape index: {}]
  %s2 = inlined_call_operand.vmem [shape: f32[9,256], index: 2, kind: input, shape index: {}]
  %s3 = inlined_call_operand.vmem [shape: f32[9,128,8], index: 3, kind: input, shape index: {}]
  %s4 = inlined_call_operand.vmem [shape: f32[128,1], index: 4, kind: input, shape index: {}]
  %s5 = inlined_call_operand.vmem [shape: f32[9,8,128], index: 5, kind: input, shape index: {}]
  %s6 = inlined_call_operand.vmem [shape: f32[8,1], index: 6, kind: input, shape index: {}]
  %s7 = inlined_call_operand.vmem [shape: f32[2,4,256], index: 7, kind: output, shape index: {}]
  %s8 = sld [smem:[#allocation0]]
  $region61: #{spade_forward.1} parent=0
    _
  %s10 = ssub.s32 1, %s8
  %s11 = scalar_select 0, %s10, %s8
  loop: start=0, step=1, limit=4
  $region2: #{spade_forward.1} parent=0 // loop_pre_header
    _
  $region3: #{spade_forward.1} parent=0 // loop_header
    %s13 = sphi 0, %s17
    %p14 = scmp.ge.s32.totalorder %s13, 4
    %s23 = sphi 0, %s25
    %s26 = sphi 0, %s23
    %s27 = sphi 0, %s26
    %s43 = sphi 0, %s27
    %s49 = sphi 0, %s51
    %s52 = sphi 0, %s49
    %s53 = sphi 0, %s52
    %s69 = sphi 0, %s53
    %s73 = sphi 0, %s73
    %s75 = sphi 0, %s73
    %s76 = sphi 0, %s75
    %s90 = sphi 0, %s76
    %s94 = sphi 0, %s94
    %s96 = sphi 0, %s94
    %s97 = sphi 0, %s96
    %s111 = sphi 0, %s97
    %s115 = sphi 0, %s115
    %s117 = sphi 0, %s115
    %s118 = sphi 0, %s117
    %s132 = sphi 0, %s118
    %s136 = sphi 0, %s136
    %s138 = sphi 0, %s136
    %s139 = sphi 0, %s138
    %s153 = sphi 0, %s139
    %s157 = sphi 0, %s157
    %s159 = sphi 0, %s157
    %s160 = sphi 0, %s159
    %s174 = sphi 0, %s160
    %s180 = sphi 0, %s182
    %s183 = sphi 0, %s180
    %s184 = sphi 0, %s183
    %s200 = sphi 0, %s184
  $region4: #{spade_forward.1} parent=0 // loop_header_branch
    %16 = sbr.rel (%p14) target = $region8
  $region5: #{spade_forward.1} parent=0 // loop_body
    %s18 = ssub.s32 %s13, 1
    %s19 = ssub.s32 %s13, 2
    %s20 = sadd.s32 %s13, 1
    %s21 = ssub.s32 %s13, %s20
    %p22 = scmp.eq.s32.totalorder %s21, 0
    %s24 = sadd.s32 %s23, 1
    %s25 = scalar_select %p22, %s23, %s24
    %p28 = pneg %p22
    %p29 = scmp.eq.s32.totalorder %s13, 1
    %p30 = por %p28, %p29
    %p31 = scmp.ne.s32.totalorder %s23, %s26
    %p32 = scmp.eq.s32.totalorder %s13, 0
    %p33 = por %p31, %p32
    %p34 = scmp.ne.s32.totalorder %s23, %s26
    %p35 = scmp.eq.s32.totalorder %s18, 1
    %p36 = por %p34, %p35
    %p37 = scmp.ne.s32.totalorder %s26, %s27
    %p38 = scmp.eq.s32.totalorder %s18, 0
    %p39 = por %p37, %p38
    %p40 = scmp.ne.s32.totalorder %s26, %s27
    %p41 = scmp.eq.s32.totalorder %s19, 1
    %p42 = por %p40, %p41
    %p44 = scmp.ne.s32.totalorder %s27, %s43
    %p45 = scmp.eq.s32.totalorder %s19, 0
    %p46 = por %p44, %p45
    %s47 = ssub.s32 %s13, %s20
    %p48 = scmp.eq.s32.totalorder %s47, 0
    %s50 = sadd.s32 %s49, 1
    %s51 = scalar_select %p48, %s49, %s50
    %p54 = pneg %p48
    %p55 = scmp.eq.s32.totalorder %s13, 1
    %p56 = por %p54, %p55
    %p57 = scmp.ne.s32.totalorder %s49, %s52
    %p58 = scmp.eq.s32.totalorder %s13, 0
    %p59 = por %p57, %p58
    %p60 = scmp.ne.s32.totalorder %s49, %s52
    %p61 = scmp.eq.s32.totalorder %s18, 1
    %p62 = por %p60, %p61
    %p63 = scmp.ne.s32.totalorder %s52, %s53
    %p64 = scmp.eq.s32.totalorder %s18, 0
    %p65 = por %p63, %p64
    %p66 = scmp.ne.s32.totalorder %s52, %s53
    %p67 = scmp.eq.s32.totalorder %s19, 1
    %p68 = por %p66, %p67
    %p70 = scmp.ne.s32.totalorder %s53, %s69
    %p71 = scmp.eq.s32.totalorder %s19, 0
    %p72 = por %p70, %p71
    %s74 = sadd.s32 %s73, 1
    %p77 = scmp.eq.s32.totalorder %s13, 1
    %p78 = scmp.ne.s32.totalorder %s73, %s75
    %p79 = scmp.eq.s32.totalorder %s13, 0
    %p80 = por %p78, %p79
    %p81 = scmp.ne.s32.totalorder %s73, %s75
    %p82 = scmp.eq.s32.totalorder %s18, 1
    %p83 = por %p81, %p82
    %p84 = scmp.ne.s32.totalorder %s75, %s76
    %p85 = scmp.eq.s32.totalorder %s18, 0
    %p86 = por %p84, %p85
    %p87 = scmp.ne.s32.totalorder %s75, %s76
    %p88 = scmp.eq.s32.totalorder %s19, 1
    %p89 = por %p87, %p88
    %p91 = scmp.ne.s32.totalorder %s76, %s90
    %p92 = scmp.eq.s32.totalorder %s19, 0
    %p93 = por %p91, %p92
    %s95 = sadd.s32 %s94, 1
    %p98 = scmp.eq.s32.totalorder %s13, 1
    %p99 = scmp.ne.s32.totalorder %s94, %s96
    %p100 = scmp.eq.s32.totalorder %s13, 0
    %p101 = por %p99, %p100
    %p102 = scmp.ne.s32.totalorder %s94, %s96
    %p103 = scmp.eq.s32.totalorder %s18, 1
    %p104 = por %p102, %p103
    %p105 = scmp.ne.s32.totalorder %s96, %s97
    %p106 = scmp.eq.s32.totalorder %s18, 0
    %p107 = por %p105, %p106
    %p108 = scmp.ne.s32.totalorder %s96, %s97
    %p109 = scmp.eq.s32.totalorder %s19, 1
    %p110 = por %p108, %p109
    %p112 = scmp.ne.s32.totalorder %s97, %s111
    %p113 = scmp.eq.s32.totalorder %s19, 0
    %p114 = por %p112, %p113
    %s116 = sadd.s32 %s115, 1
    %p119 = scmp.eq.s32.totalorder %s13, 1
    %p120 = scmp.ne.s32.totalorder %s115, %s117
    %p121 = scmp.eq.s32.totalorder %s13, 0
    %p122 = por %p120, %p121
    %p123 = scmp.ne.s32.totalorder %s115, %s117
    %p124 = scmp.eq.s32.totalorder %s18, 1
    %p125 = por %p123, %p124
    %p126 = scmp.ne.s32.totalorder %s117, %s118
    %p127 = scmp.eq.s32.totalorder %s18, 0
    %p128 = por %p126, %p127
    %p129 = scmp.ne.s32.totalorder %s117, %s118
    %p130 = scmp.eq.s32.totalorder %s19, 1
    %p131 = por %p129, %p130
    %p133 = scmp.ne.s32.totalorder %s118, %s132
    %p134 = scmp.eq.s32.totalorder %s19, 0
    %p135 = por %p133, %p134
    %s137 = sadd.s32 %s136, 1
    %p140 = scmp.eq.s32.totalorder %s13, 1
    %p141 = scmp.ne.s32.totalorder %s136, %s138
    %p142 = scmp.eq.s32.totalorder %s13, 0
    %p143 = por %p141, %p142
    %p144 = scmp.ne.s32.totalorder %s136, %s138
    %p145 = scmp.eq.s32.totalorder %s18, 1
    %p146 = por %p144, %p145
    %p147 = scmp.ne.s32.totalorder %s138, %s139
    %p148 = scmp.eq.s32.totalorder %s18, 0
    %p149 = por %p147, %p148
    %p150 = scmp.ne.s32.totalorder %s138, %s139
    %p151 = scmp.eq.s32.totalorder %s19, 1
    %p152 = por %p150, %p151
    %p154 = scmp.ne.s32.totalorder %s139, %s153
    %p155 = scmp.eq.s32.totalorder %s19, 0
    %p156 = por %p154, %p155
    %s158 = sadd.s32 %s157, 1
    %p161 = scmp.eq.s32.totalorder %s13, 1
    %p162 = scmp.ne.s32.totalorder %s157, %s159
    %p163 = scmp.eq.s32.totalorder %s13, 0
    %p164 = por %p162, %p163
    %p165 = scmp.ne.s32.totalorder %s157, %s159
    %p166 = scmp.eq.s32.totalorder %s18, 1
    %p167 = por %p165, %p166
    %p168 = scmp.ne.s32.totalorder %s159, %s160
    %p169 = scmp.eq.s32.totalorder %s18, 0
    %p170 = por %p168, %p169
    %p171 = scmp.ne.s32.totalorder %s159, %s160
    %p172 = scmp.eq.s32.totalorder %s19, 1
    %p173 = por %p171, %p172
    %p175 = scmp.ne.s32.totalorder %s160, %s174
    %p176 = scmp.eq.s32.totalorder %s19, 0
    %p177 = por %p175, %p176
    %s178 = ssub.s32 %s13, %s20
    %p179 = scmp.eq.s32.totalorder %s178, 0
    %s181 = sadd.s32 %s180, 1
    %s182 = scalar_select %p179, %s180, %s181
    %p185 = pneg %p179
    %p186 = scmp.eq.s32.totalorder %s13, 1
    %p187 = por %p185, %p186
    %p188 = scmp.ne.s32.totalorder %s180, %s183
    %p189 = scmp.eq.s32.totalorder %s13, 0
    %p190 = por %p188, %p189
    %p191 = scmp.ne.s32.totalorder %s180, %s183
    %p192 = scmp.eq.s32.totalorder %s18, 1
    %p193 = por %p191, %p192
    %p194 = scmp.ne.s32.totalorder %s183, %s184
    %p195 = scmp.eq.s32.totalorder %s18, 0
    %p196 = por %p194, %p195
    %p197 = scmp.ne.s32.totalorder %s183, %s184
    %p198 = scmp.eq.s32.totalorder %s19, 1
    %p199 = por %p197, %p198
    %p201 = scmp.ne.s32.totalorder %s184, %s200
    %p202 = scmp.eq.s32.totalorder %s19, 0
    %p203 = por %p201, %p202
    %p204 = scmp.le.s32.totalorder 1, %s13
    %p205 = scmp.lt.s32.totalorder %s13, 3
    %p206 = pnand %p204, %p205
    %p207 = pneg %p206
    // Predicated region
    $region9: #{spade_forward.1} parent=5 // pred_check
      _
    $region10: #{spade_forward.1} parent=5 // pred_check_branch
      %209 = sbr.rel (%p206) target = $region12
    $region11: #{spade_forward.1} parent=5 // pred_region
      %s210 = ssub.s32 %s13, 1
      // Predicated region
      $region13: #{spade_forward.1} parent=11 // pred_check
        %p211 = pneg %p86
      $region14: #{spade_forward.1} parent=11 // pred_check_branch
        %213 = sbr.rel (%p211) target = $region16
      $region15: #{spade_forward.1} parent=11 // pred_region
        _
      $region16: #{spade_forward.1} parent=11 // pred_fallthru
        _
      // Predicated region
      $region17: #{spade_forward.1} parent=11 // pred_check
        %p214 = pneg %p107
      $region18: #{spade_forward.1} parent=11 // pred_check_branch
        %216 = sbr.rel (%p214) target = $region20
      $region19: #{spade_forward.1} parent=11 // pred_region
        _
      $region20: #{spade_forward.1} parent=11 // pred_fallthru
        _
      // Predicated region
      $region21: #{spade_forward.1} parent=11 // pred_check
        %p217 = pneg %p128
      $region22: #{spade_forward.1} parent=11 // pred_check_branch
        %219 = sbr.rel (%p217) target = $region24
      $region23: #{spade_forward.1} parent=11 // pred_region
        _
      $region24: #{spade_forward.1} parent=11 // pred_fallthru
        _
      // Predicated region
      $region25: #{spade_forward.1} parent=11 // pred_check
        %p220 = pneg %p149
      $region26: #{spade_forward.1} parent=11 // pred_check_branch
        %222 = sbr.rel (%p220) target = $region28
      $region27: #{spade_forward.1} parent=11 // pred_region
        _
      $region28: #{spade_forward.1} parent=11 // pred_fallthru
        _
      // Predicated region
      $region29: #{spade_forward.1} parent=11 // pred_check
        %p223 = pneg %p170
      $region30: #{spade_forward.1} parent=11 // pred_check_branch
        %225 = sbr.rel (%p223) target = $region32
      $region31: #{spade_forward.1} parent=11 // pred_region
        _
      $region32: #{spade_forward.1} parent=11 // pred_fallthru
        _
    $region12: #{spade_forward.1} parent=5 // pred_fallthru
      _
    %p226 = scmp.lt.s32.totalorder %s13, 2
    // Predicated region
    $region33: #{spade_forward.1} parent=5 // pred_check
      %p227 = pneg %p226
    $region34: #{spade_forward.1} parent=5 // pred_check_branch
      %229 = sbr.rel (%p227) target = $region36
    $region35: #{spade_forward.1} parent=5 // pred_region
      // Predicated region
      $region37: #{spade_forward.1} parent=35 // pred_check
        %p230 = pneg %p33
      $region38: #{spade_forward.1} parent=35 // pred_check_branch
        %232 = sbr.rel (%p230) target = $region40
      $region39: #{spade_forward.1} parent=35 // pred_region
        %p233 = scmp.lt.s32.totalorder %s13, 1
        %s234 = scalar_select %p233, %s13, 1
        %s235 = smul.addr %s234, 2
        %s236 = smul.addr %s235, 4
        %s237 = scalar_lea.vmem %s0, %s236
      $region40: #{spade_forward.1} parent=35 // pred_fallthru
        _
      // Predicated region
      $region41: #{spade_forward.1} parent=35 // pred_check
        %p238 = pneg %p59
      $region42: #{spade_forward.1} parent=35 // pred_check_branch
        %240 = sbr.rel (%p238) target = $region44
      $region43: #{spade_forward.1} parent=35 // pred_region
        %p241 = scmp.lt.s32.totalorder %s13, 1
        %s242 = scalar_select %p241, %s13, 1
        %s243 = smul.addr %s242, 2
        %s244 = smul.addr %s243, 8
        %s245 = scalar_lea.vmem %s1, %s244
      $region44: #{spade_forward.1} parent=35 // pred_fallthru
        _
    $region36: #{spade_forward.1} parent=5 // pred_fallthru
      _
    %p246 = scmp.le.s32.totalorder 1, %s13
    %p247 = scmp.lt.s32.totalorder %s13, 3
    %p248 = pnand %p246, %p247
    %p249 = pneg %p248
    // Predicated region
    $region45: #{spade_forward.1} parent=5 // pred_check
      _
    $region46: #{spade_forward.1} parent=5 // pred_check_branch
      %251 = sbr.rel (%p248) target = $region48
    $region47: #{spade_forward.1} parent=5 // pred_region
      %s252 = ssub.s32 %s13, 1
      %p253 = scmp.lt.s32.totalorder %s18, 1
      %s254 = scalar_select %p253, %s18, 1
      %s255 = smul.addr %s254, 2
      %s256 = smul.addr %s255, 4
      %s257 = scalar_lea.vmem %s0, %s256
      %p258 = pneg %p39
      %p259 = pneg %p36
      %p260 = scmp.lt.s32.totalorder %s18, 1
      %s261 = scalar_select %p260, %s18, 1
      %s262 = smul.addr %s261, 2
      %s263 = smul.addr %s262, 8
      %s264 = scalar_lea.vmem %s1, %s263
      %p265 = pneg %p65
      %p266 = pneg %p62
      %p267 = pneg %p86
      %p268 = pneg %p83
      %p269 = pneg %p107
      %p270 = pneg %p104
      %p271 = pneg %p128
      %p272 = pneg %p125
      %p273 = pneg %p149
      %p274 = pneg %p146
      %p275 = pneg %p170
      %p276 = pneg %p167
      %p277 = pneg %p196
      %p278 = pneg %p193
      %p279 = scmp.lt.s32.totalorder %s18, 1
      %s280 = scalar_select %p279, %s18, 1
      %s281 = smul.addr %s280, 2
      %s282 = smul.addr %s281, 4
      %s283 = scalar_lea.vmem %s7, %s282
      %p284 = scmp.lt.s32.totalorder %s18, 1
      %s285 = scalar_select %p284, %s18, 1
      %s286 = smul.addr %s285, 2
      %s287 = smul.addr %s286, 4
      %s288 = scalar_lea.vmem %s0, %s287
      %p289 = scmp.lt.s32.totalorder %s18, 1
      %s290 = scalar_select %p289, %s18, 1
      %s291 = smul.addr %s290, 2
      %s292 = smul.addr %s291, 8
      %s293 = scalar_lea.vmem %s1, %s292
      %p294 = scmp.lt.s32.totalorder %s18, 1
      %s295 = scalar_select %p294, %s18, 1
      %s296 = smul.addr %s295, 2
      %s297 = smul.addr %s296, 4
      %s298 = scalar_lea.vmem %s7, %s297
      %v299 = vld [vmem:[%s288] sm:$0xff]
      %v301 = vcombine.high %v299, %v299
      %vm303 = vcmask 1043456
      %v304 = vsel %vm303, %v299, 0.0
      %v305 = vsel %vm303, %v301, 0.0
      %v306 = vadd.f32 %v304, %v305
      %307 = vadd.xlane.f32.xlu0 %v306
      %v308 = vpop.xlane.xlu0 %307
      %v309 = vrcp.pop 256.0
      %v310 = vmul.f32 %v308, %v309
      %v311 = vmul.f32 %v299, %v299
      %v313 = vcombine.high %v311, %v311
      %v315 = vsel %vm303, %v311, 0.0
      %v316 = vsel %vm303, %v313, 0.0
      %v317 = vadd.f32 %v315, %v316
      %318 = vadd.xlane.f32.xlu0 %v317
      %v319 = vpop.xlane.xlu0 %318
      %v320 = vmul.f32 %v319, %v309
      %v321 = vmul.f32 %v310, %v310
      %v322 = vsub.f32 %v320, %v321
      %v325 = vunpack.c.l.s4 839922192
      %v326 = vunpack.c.0.s8 %v325
      %v327 = vlaneseq
      %v328 = vshrl.u32 %v327, 7
      %v329 = vsub.s32 %v326, %v328
      %v330 = vrot.slane %v310, %v329
      %v332 = vsub.f32 %v299, %v330
      %v333 = vadd.f32 %v322, 1e-05
      %v334 = vrsqrt.pop %v333
      %v337 = vunpack.c.l.s4 839922192
      %v338 = vunpack.c.0.s8 %v337
      %v339 = vlaneseq
      %v340 = vshrl.u32 %v339, 7
      %v341 = vsub.s32 %v338, %v340
      %v342 = vrot.slane %v334, %v341
      %v344 = vmul.f32 %v332, %v342
      %v345 = vld [vmem:[%s2] sm:$0xff]
      %v346 = vld [vmem:[%s2 + $0x8] sm:$0xff]
      %v347 = vld [vmem:[%s2 + $0x10] sm:$0x1]
      %v348 = vld [vmem:[%s2 + $0x18] sm:$0x1]
      %349 = vst [vmem:[#allocation2] sm:$0xff] 0.0
      %350 = vst [vmem:[#allocation2 + $0x8] sm:$0xff] 0.0
      %vm351 = vcmask 277504
      %352 = vst.msk [vmem:[#allocation2 + $0x10] sm:$0xff] %vm351, 0.0
      %v353 = vld [vmem:[%s293] sm:$0xff]
      %v354 = vld [vmem:[%s293 + $0x8] sm:$0xff]
      %357 = vrot.lane.b32.xlu0 %v353, 17
      %v358 = vpop.permute.xlu0 %357
      %359 = vrot.lane.b32.xlu0 %v354, 17
      %v360 = vpop.permute.xlu0 %359
      %vm361 = vcmask 138240
      %v362 = vsel %vm361, %v358, %v360
      %vm366 = vcmask 1047688
      %367 = vst.msk [vmem:[#allocation2] sm:$0xff] %vm366, %v358
      %368 = vst [vmem:[#allocation2 + $0x8] sm:$0xff] %v362
      %369 = vst.msk [vmem:[#allocation2 + $0x10] sm:$0xff] %vm361, %v360
      %v370 = vld [vmem:[%s4] sm:$0xff]
      %v371 = vld [vmem:[%s4 + $0x8] sm:$0xff]
      %v372 = vld [vmem:[%s4 + $0x10] sm:$0xff]
      %v373 = vld [vmem:[%s4 + $0x18] sm:$0xff]
      %v374 = vld [vmem:[%s4 + $0x20] sm:$0xff]
      %v375 = vld [vmem:[%s4 + $0x28] sm:$0xff]
      %v376 = vld [vmem:[%s4 + $0x30] sm:$0xff]
      %v377 = vld [vmem:[%s4 + $0x38] sm:$0xff]
      %v378 = vld [vmem:[%s4 + $0x40] sm:$0xff]
      %v379 = vld [vmem:[%s4 + $0x48] sm:$0xff]
      %v380 = vld [vmem:[%s4 + $0x50] sm:$0xff]
      %v381 = vld [vmem:[%s4 + $0x58] sm:$0xff]
      %v382 = vld [vmem:[%s4 + $0x60] sm:$0xff]
      %v383 = vld [vmem:[%s4 + $0x68] sm:$0xff]
      %v384 = vld [vmem:[%s4 + $0x70] sm:$0xff]
      %v385 = vld [vmem:[%s4 + $0x78] sm:$0xff]
      %387 = vset.pattern.permute.xlu0 0
      %388 = vperm.xlu0 %387, %v370
      %v389 = vpop.permute.xlu0 %388
      %392 = vset.pattern.permute.xlu0 0
      %393 = vperm.xlu0 %392, %v371
      %v394 = vpop.permute.xlu0 %393
      %397 = vset.pattern.permute.xlu0 0
      %398 = vperm.xlu0 %397, %v372
      %v399 = vpop.permute.xlu0 %398
      %402 = vset.pattern.permute.xlu0 0
      %403 = vperm.xlu0 %402, %v373
      %v404 = vpop.permute.xlu0 %403
      %407 = vset.pattern.permute.xlu0 0
      %408 = vperm.xlu0 %407, %v374
      %v409 = vpop.permute.xlu0 %408
      %412 = vset.pattern.permute.xlu0 0
      %413 = vperm.xlu0 %412, %v375
      %v414 = vpop.permute.xlu0 %413
      %417 = vset.pattern.permute.xlu0 0
      %418 = vperm.xlu0 %417, %v376
      %v419 = vpop.permute.xlu0 %418
      %422 = vset.pattern.permute.xlu0 0
      %423 = vperm.xlu0 %422, %v377
      %v424 = vpop.permute.xlu0 %423
      %427 = vset.pattern.permute.xlu0 0
      %428 = vperm.xlu0 %427, %v378
      %v429 = vpop.permute.xlu0 %428
      %432 = vset.pattern.permute.xlu0 0
      %433 = vperm.xlu0 %432, %v379
      %v434 = vpop.permute.xlu0 %433
      %437 = vset.pattern.permute.xlu0 0
      %438 = vperm.xlu0 %437, %v380
      %v439 = vpop.permute.xlu0 %438
      %442 = vset.pattern.permute.xlu0 0
      %443 = vperm.xlu0 %442, %v381
      %v444 = vpop.permute.xlu0 %443
      %447 = vset.pattern.permute.xlu0 0
      %448 = vperm.xlu0 %447, %v382
      %v449 = vpop.permute.xlu0 %448
      %452 = vset.pattern.permute.xlu0 0
      %453 = vperm.xlu0 %452, %v383
      %v454 = vpop.permute.xlu0 %453
      %457 = vset.pattern.permute.xlu0 0
      %458 = vperm.xlu0 %457, %v384
      %v459 = vpop.permute.xlu0 %458
      %462 = vset.pattern.permute.xlu0 0
      %463 = vperm.xlu0 %462, %v385
      %v464 = vpop.permute.xlu0 %463
      %v466 = vld [vmem:[#allocation2] sm:$0xff]
      %v467 = vld [vmem:[#allocation2 + $0x8] sm:$0xff]
      %v468 = vlaneseq
      %v469 = vshrl.u32 %v468, 7
      %v470 = vsub.s32 0, %v469
      %v471 = vrot.slane %v345, %v470
      %v472 = vlaneseq
      %v473 = vshrl.u32 %v472, 7
      %v474 = vsub.s32 0, %v473
      %v475 = vrot.slane %v346, %v474
      %v476 = vmul.f32 %v466, %v471
      %v477 = vmul.f32 %v467, %v475
      %v478 = vld [vmem:[%s3] sm:$0xff]
      %v479 = vld [vmem:[%s3 + $0x8] sm:$0xff]
      %v480 = vld [vmem:[%s3 + $0x10] sm:$0xff]
      %v481 = vld [vmem:[%s3 + $0x18] sm:$0xff]
      %v482 = vld [vmem:[%s3 + $0x20] sm:$0xff]
      %v483 = vld [vmem:[%s3 + $0x28] sm:$0xff]
      %v484 = vld [vmem:[%s3 + $0x30] sm:$0xff]
      %v485 = vld [vmem:[%s3 + $0x38] sm:$0xff]
      %v486 = vld [vmem:[%s3 + $0x40] sm:$0xff]
      %v487 = vld [vmem:[%s3 + $0x48] sm:$0xff]
      %v488 = vld [vmem:[%s3 + $0x50] sm:$0xff]
      %v489 = vld [vmem:[%s3 + $0x58] sm:$0xff]
      %v490 = vld [vmem:[%s3 + $0x60] sm:$0xff]
      %v491 = vld [vmem:[%s3 + $0x68] sm:$0xff]
      %v492 = vld [vmem:[%s3 + $0x70] sm:$0xff]
      %v493 = vld [vmem:[%s3 + $0x78] sm:$0xff]
      %vm494 = vcmask 64512
      %v496 = vsel %vm494, %v478, 0
      %v499 = vsel %vm494, %v479, 0
      %v502 = vsel %vm494, %v480, 0
      %v505 = vsel %vm494, %v481, 0
      %v508 = vsel %vm494, %v482, 0
      %v511 = vsel %vm494, %v483, 0
      %v514 = vsel %vm494, %v484, 0
      %v517 = vsel %vm494, %v485, 0
      %v520 = vsel %vm494, %v486, 0
      %v523 = vsel %vm494, %v487, 0
      %v526 = vsel %vm494, %v488, 0
      %v529 = vsel %vm494, %v489, 0
      %v532 = vsel %vm494, %v490, 0
      %v535 = vsel %vm494, %v491, 0
      %v538 = vsel %vm494, %v492, 0
      %v541 = vsel %vm494, %v493, 0
      %543 = vmatprep.subr.mxu0 0.0
      %544 = vmatpush1.msra.mxu0 0.0
      %545 = vmatprep.subr.mxu0 0.0
      %546 = vmatpush1.msra.mxu0 0.0
      %547 = vmatprep.subr.mxu0 0.0
      %548 = vmatpush1.msra.mxu0 0.0
      %549 = vmatprep.subr.mxu0 0.0
      %550 = vmatpush1.msra.mxu0 0.0
      %551 = vmatprep.subr.mxu0 0.0
      %552 = vmatpush1.msra.mxu0 0.0
      %553 = vmatprep.subr.mxu0 0.0
      %554 = vmatpush1.msra.mxu0 0.0
      %555 = vmatprep.subr.mxu0 0.0
      %556 = vmatpush1.msra.mxu0 0.0
      %557 = vmatprep.subr.mxu0 0.0
      %558 = vmatpush1.msra.mxu0 0.0
      %559 = vmatprep.subr.mxu0 0.0
      %560 = vmatpush1.msra.mxu0 0.0
      %561 = vmatprep.subr.mxu0 0.0
      %562 = vmatpush1.msra.mxu0 0.0
      %563 = vmatprep.subr.mxu0 0.0
      %564 = vmatpush1.msra.mxu0 0.0
      %565 = vmatprep.subr.mxu0 0.0
      %566 = vmatpush1.msra.mxu0 0.0
      %567 = vmatprep.subr.mxu0 0.0
      %568 = vmatpush1.msra.mxu0 0.0
      %569 = vmatprep.subr.mxu0 0.0
      %570 = vmatpush1.msra.mxu0 0.0
      %571 = vmatprep.subr.mxu0 0.0
      %572 = vmatpush1.msra.mxu0 0.0
      %573 = vmatprep.subr.mxu0 %v477
      %574 = vmatpush1.msra.mxu0 %v476
      %575 = vmatprep.subr.mxu0 0.0
      %576 = vmatpush2.msra.mxu0 0.0
      %577 = vmatprep.subr.mxu0 0.0
      %578 = vmatpush2.msra.mxu0 0.0
      %579 = vmatprep.subr.mxu0 0.0
      %580 = vmatpush2.msra.mxu0 0.0
      %581 = vmatprep.subr.mxu0 0.0
      %582 = vmatpush2.msra.mxu0 0.0
      %583 = vmatprep.subr.mxu0 0.0
      %584 = vmatpush2.msra.mxu0 0.0
      %585 = vmatprep.subr.mxu0 0.0
      %586 = vmatpush2.msra.mxu0 0.0
      %587 = vmatprep.subr.mxu0 0.0
      %588 = vmatpush2.msra.mxu0 0.0
      %589 = vmatprep.subr.mxu0 0.0
      %590 = vmatpush2.msra.mxu0 0.0
      %591 = vmatprep.subr.mxu0 0.0
      %592 = vmatpush2.msra.mxu0 0.0
      %593 = vmatprep.subr.mxu0 0.0
      %594 = vmatpush2.msra.mxu0 0.0
      %595 = vmatprep.subr.mxu0 0.0
      %596 = vmatpush2.msra.mxu0 0.0
      %597 = vmatprep.subr.mxu0 0.0
      %598 = vmatpush2.msra.mxu0 0.0
      %599 = vmatprep.subr.mxu0 0.0
      %600 = vmatpush2.msra.mxu0 0.0
      %601 = vmatprep.subr.mxu0 0.0
      %602 = vmatpush2.msra.mxu0 0.0
      %603 = vmatprep.subr.mxu0 0.0
      %604 = vmatpush2.msra.mxu0 0.0
      %605 = vmatprep.subr.mxu0 0.0
      %606 = vmatpush2.msra.mxu0 0.0
      %607 = vmatprep.mubr.f32.mxu0 0.0
      %608 = vmatmul.mubr.f32.gmra.mxu0 %v496
      %v609 = vpop.f32.mrf.mxu0
      %v610 = vadd.f32 0.0, %v609
      %v611 = vpop.f32.mrf.mxu0
      %v612 = vadd.f32 0.0, %v611
      %613 = vmatprep.mubr.f32.mxu0 0.0
      %614 = vmatmul.mubr.f32.gmra.mxu0 %v499
      %v615 = vpop.f32.mrf.mxu0
      %v616 = vadd.f32 0.0, %v615
      %v617 = vpop.f32.mrf.mxu0
      %v618 = vadd.f32 0.0, %v617
      %619 = vmatprep.mubr.f32.mxu0 0.0
      %620 = vmatmul.mubr.f32.gmra.mxu0 %v502
      %v621 = vpop.f32.mrf.mxu0
      %v622 = vadd.f32 0.0, %v621
      %v623 = vpop.f32.mrf.mxu0
      %v624 = vadd.f32 0.0, %v623
      %625 = vmatprep.mubr.f32.mxu0 0.0
      %626 = vmatmul.mubr.f32.gmra.mxu0 %v505
      %v627 = vpop.f32.mrf.mxu0
      %v628 = vadd.f32 0.0, %v627
      %v629 = vpop.f32.mrf.mxu0
      %v630 = vadd.f32 0.0, %v629
      %631 = vmatprep.mubr.f32.mxu0 0.0
      %632 = vmatmul.mubr.f32.gmra.mxu0 %v508
      %v633 = vpop.f32.mrf.mxu0
      %v634 = vadd.f32 0.0, %v633
      %v635 = vpop.f32.mrf.mxu0
      %v636 = vadd.f32 0.0, %v635
      %637 = vmatprep.mubr.f32.mxu0 0.0
      %638 = vmatmul.mubr.f32.gmra.mxu0 %v511
      %v639 = vpop.f32.mrf.mxu0
      %v640 = vadd.f32 0.0, %v639
      %v641 = vpop.f32.mrf.mxu0
      %v642 = vadd.f32 0.0, %v641
      %643 = vmatprep.mubr.f32.mxu0 0.0
      %644 = vmatmul.mubr.f32.gmra.mxu0 %v514
      %v645 = vpop.f32.mrf.mxu0
      %v646 = vadd.f32 0.0, %v645
      %v647 = vpop.f32.mrf.mxu0
      %v648 = vadd.f32 0.0, %v647
      %649 = vmatprep.mubr.f32.mxu0 0.0
      %650 = vmatmul.mubr.f32.gmra.mxu0 %v517
      %v651 = vpop.f32.mrf.mxu0
      %v652 = vadd.f32 0.0, %v651
      %v653 = vpop.f32.mrf.mxu0
      %v654 = vadd.f32 0.0, %v653
      %655 = vmatprep.mubr.f32.mxu0 0.0
      %656 = vmatmul.mubr.f32.gmra.mxu0 %v520
      %v657 = vpop.f32.mrf.mxu0
      %v658 = vadd.f32 0.0, %v657
      %v659 = vpop.f32.mrf.mxu0
      %v660 = vadd.f32 0.0, %v659
      %661 = vmatprep.mubr.f32.mxu0 0.0
      %662 = vmatmul.mubr.f32.gmra.mxu0 %v523
      %v663 = vpop.f32.mrf.mxu0
      %v664 = vadd.f32 0.0, %v663
      %v665 = vpop.f32.mrf.mxu0
      %v666 = vadd.f32 0.0, %v665
      %667 = vmatprep.mubr.f32.mxu0 0.0
      %668 = vmatmul.mubr.f32.gmra.mxu0 %v526
      %v669 = vpop.f32.mrf.mxu0
      %v670 = vadd.f32 0.0, %v669
      %v671 = vpop.f32.mrf.mxu0
      %v672 = vadd.f32 0.0, %v671
      %673 = vmatprep.mubr.f32.mxu0 0.0
      %674 = vmatmul.mubr.f32.gmra.mxu0 %v529
      %v675 = vpop.f32.mrf.mxu0
      %v676 = vadd.f32 0.0, %v675
      %v677 = vpop.f32.mrf.mxu0
      %v678 = vadd.f32 0.0, %v677
      %679 = vmatprep.mubr.f32.mxu0 0.0
      %680 = vmatmul.mubr.f32.gmra.mxu0 %v532
      %v681 = vpop.f32.mrf.mxu0
      %v682 = vadd.f32 0.0, %v681
      %v683 = vpop.f32.mrf.mxu0
      %v684 = vadd.f32 0.0, %v683
      %685 = vmatprep.mubr.f32.mxu0 0.0
      %686 = vmatmul.mubr.f32.gmra.mxu0 %v535
      %v687 = vpop.f32.mrf.mxu0
      %v688 = vadd.f32 0.0, %v687
      %v689 = vpop.f32.mrf.mxu0
      %v690 = vadd.f32 0.0, %v689
      %691 = vmatprep.mubr.f32.mxu0 0.0
      %692 = vmatmul.mubr.f32.gmra.mxu0 %v538
      %v693 = vpop.f32.mrf.mxu0
      %v694 = vadd.f32 0.0, %v693
      %v695 = vpop.f32.mrf.mxu0
      %v696 = vadd.f32 0.0, %v695
      %697 = vmatprep.mubr.f32.mxu0 0.0
      %698 = vmatmul.mubr.f32.gmra.mxu0 %v541
      %v699 = vpop.f32.mrf.mxu0
      %v700 = vadd.f32 0.0, %v699
      %v701 = vpop.f32.mrf.mxu0
      %v702 = vadd.f32 0.0, %v701
      %703 = vdwg.mxu0
      %v704 = vadd.f32 %v389, %v610
      %v705 = vadd.f32 %v389, %v612
      %v706 = vadd.f32 %v394, %v616
      %v707 = vadd.f32 %v394, %v618
      %v708 = vadd.f32 %v399, %v622
      %v709 = vadd.f32 %v399, %v624
      %v710 = vadd.f32 %v404, %v628
      %v711 = vadd.f32 %v404, %v630
      %v712 = vadd.f32 %v409, %v634
      %v713 = vadd.f32 %v409, %v636
      %v714 = vadd.f32 %v414, %v640
      %v715 = vadd.f32 %v414, %v642
      %v716 = vadd.f32 %v419, %v646
      %v717 = vadd.f32 %v419, %v648
      %v718 = vadd.f32 %v424, %v652
      %v719 = vadd.f32 %v424, %v654
      %v720 = vadd.f32 %v429, %v658
      %v721 = vadd.f32 %v429, %v660
      %v722 = vadd.f32 %v434, %v664
      %v723 = vadd.f32 %v434, %v666
      %v724 = vadd.f32 %v439, %v670
      %v725 = vadd.f32 %v439, %v672
      %v726 = vadd.f32 %v444, %v676
      %v727 = vadd.f32 %v444, %v678
      %v728 = vadd.f32 %v449, %v682
      %v729 = vadd.f32 %v449, %v684
      %v730 = vadd.f32 %v454, %v688
      %v731 = vadd.f32 %v454, %v690
      %v732 = vadd.f32 %v459, %v694
      %v733 = vadd.f32 %v459, %v696
      %v734 = vadd.f32 %v464, %v700
      %v735 = vadd.f32 %v464, %v702
      %v736 = vld [vmem:[#allocation2] sm:$0xff]
      %v737 = vld [vmem:[#allocation2 + $0x8] sm:$0xff]
      %v738 = vld [vmem:[#allocation2 + $0x10] sm:$0xff]
      %v739 = vlaneseq
      %v740 = vshrl.u32 %v739, 7
      %v741 = vsub.s32 1, %v740
      %v742 = vrot.slane %v345, %v741
      %v743 = vlaneseq
      %v744 = vshrl.u32 %v743, 7
      %v745 = vsub.s32 1, %v744
      %v746 = vrot.slane %v346, %v745
      %749 = vrot.lane.b32.xlu0 %v742, 1
      %v750 = vpop.permute.xlu0 %749
      %751 = vrot.lane.b32.xlu0 %v746, 1
      %v752 = vpop.permute.xlu0 %751
      %vm753 = vcmask 7168
      %v754 = vsel %vm753, %v750, %v752
      %v758 = vmul.f32 %v736, %v750
      %v759 = vmul.f32 %v737, %v754
      %v760 = vmul.f32 %v738, %v752
      %s761 = scalar_lea.vmem %s3, 128
      %v762 = vld [vmem:[%s761] sm:$0xff]
      %v763 = vld [vmem:[%s761 + $0x8] sm:$0xff]
      %v764 = vld [vmem:[%s761 + $0x10] sm:$0xff]
      %v765 = vld [vmem:[%s761 + $0x18] sm:$0xff]
      %v766 = vld [vmem:[%s761 + $0x20] sm:$0xff]
      %v767 = vld [vmem:[%s761 + $0x28] sm:$0xff]
      %v768 = vld [vmem:[%s761 + $0x30] sm:$0xff]
      %v769 = vld [vmem:[%s761 + $0x38] sm:$0xff]
      %v770 = vld [vmem:[%s761 + $0x40] sm:$0xff]
      %v771 = vld [vmem:[%s761 + $0x48] sm:$0xff]
      %v772 = vld [vmem:[%s761 + $0x50] sm:$0xff]
      %v773 = vld [vmem:[%s761 + $0x58] sm:$0xff]
      %v774 = vld [vmem:[%s761 + $0x60] sm:$0xff]
      %v775 = vld [vmem:[%s761 + $0x68] sm:$0xff]
      %v776 = vld [vmem:[%s761 + $0x70] sm:$0xff]
      %v777 = vld [vmem:[%s761 + $0x78] sm:$0xff]
      %781 = vrot.lane.b32.xlu0 %v758, 127
      %v782 = vpop.permute.xlu0 %781
      %783 = vrot.lane.b32.xlu0 %v759, 127
      %v784 = vpop.permute.xlu0 %783
      %785 = vrot.lane.b32.xlu0 %v760, 127
      %v786 = vpop.permute.xlu0 %785
      %vm787 = vcmask 1039360
      %v788 = vsel %vm787, %v782, %v784
      %v789 = vsel %vm787, %v784, %v786
      %v793 = vsel %vm494, %v762, 0
      %v796 = vsel %vm494, %v763, 0
      %v799 = vsel %vm494, %v764, 0
      %v802 = vsel %vm494, %v765, 0
      %v805 = vsel %vm494, %v766, 0
      %v808 = vsel %vm494, %v767, 0
      %v811 = vsel %vm494, %v768, 0
      %v814 = vsel %vm494, %v769, 0
      %v817 = vsel %vm494, %v770, 0
      %v820 = vsel %vm494, %v771, 0
      %v823 = vsel %vm494, %v772, 0
      %v826 = vsel %vm494, %v773, 0
      %v829 = vsel %vm494, %v774, 0
      %v832 = vsel %vm494, %v775, 0
      %v835 = vsel %vm494, %v776, 0
      %v838 = vsel %vm494, %v777, 0
      %840 = vmatprep.subr.mxu0 0.0
      %841 = vmatpush1.msra.mxu0 0.0
      %842 = vmatprep.subr.mxu0 0.0
      %843 = vmatpush1.msra.mxu0 0.0
      %844 = vmatprep.subr.mxu0 0.0
      %845 = vmatpush1.msra.mxu0 0.0
      %846 = vmatprep.subr.mxu0 0.0
      %847 = vmatpush1.msra.mxu0 0.0
      %848 = vmatprep.subr.mxu0 0.0
      %849 = vmatpush1.msra.mxu0 0.0
      %850 = vmatprep.subr.mxu0 0.0
      %851 = vmatpush1.msra.mxu0 0.0
      %852 = vmatprep.subr.mxu0 0.0
      %853 = vmatpush1.msra.mxu0 0.0
      %854 = vmatprep.subr.mxu0 0.0
      %855 = vmatpush1.msra.mxu0 0.0
      %856 = vmatprep.subr.mxu0 0.0
      %857 = vmatpush1.msra.mxu0 0.0
      %858 = vmatprep.subr.mxu0 0.0
      %859 = vmatpush1.msra.mxu0 0.0
      %860 = vmatprep.subr.mxu0 0.0
      %861 = vmatpush1.msra.mxu0 0.0
      %862 = vmatprep.subr.mxu0 0.0
      %863 = vmatpush1.msra.mxu0 0.0
      %864 = vmatprep.subr.mxu0 0.0
      %865 = vmatpush1.msra.mxu0 0.0
      %866 = vmatprep.subr.mxu0 0.0
      %867 = vmatpush1.msra.mxu0 0.0
      %868 = vmatprep.subr.mxu0 0.0
      %869 = vmatpush1.msra.mxu0 0.0
      %870 = vmatprep.subr.mxu0 %v789
      %871 = vmatpush1.msra.mxu0 %v788
      %872 = vmatprep.subr.mxu0 0.0
      %873 = vmatpush2.msra.mxu0 0.0
      %874 = vmatprep.subr.mxu0 0.0
      %875 = vmatpush2.msra.mxu0 0.0
      %876 = vmatprep.subr.mxu0 0.0
      %877 = vmatpush2.msra.mxu0 0.0
      %878 = vmatprep.subr.mxu0 0.0
      %879 = vmatpush2.msra.mxu0 0.0
      %880 = vmatprep.subr.mxu0 0.0
      %881 = vmatpush2.msra.mxu0 0.0
      %882 = vmatprep.subr.mxu0 0.0
      %883 = vmatpush2.msra.mxu0 0.0
      %884 = vmatprep.subr.mxu0 0.0
      %885 = vmatpush2.msra.mxu0 0.0
      %886 = vmatprep.subr.mxu0 0.0
      %887 = vmatpush2.msra.mxu0 0.0
      %888 = vmatprep.subr.mxu0 0.0
      %889 = vmatpush2.msra.mxu0 0.0
      %890 = vmatprep.subr.mxu0 0.0
      %891 = vmatpush2.msra.mxu0 0.0
      %892 = vmatprep.subr.mxu0 0.0
      %893 = vmatpush2.msra.mxu0 0.0
      %894 = vmatprep.subr.mxu0 0.0
      %895 = vmatpush2.msra.mxu0 0.0
      %896 = vmatprep.subr.mxu0 0.0
      %897 = vmatpush2.msra.mxu0 0.0
      %898 = vmatprep.subr.mxu0 0.0
      %899 = vmatpush2.msra.mxu0 0.0
      %900 = vmatprep.subr.mxu0 0.0
      %901 = vmatpush2.msra.mxu0 0.0
      %902 = vmatprep.subr.mxu0 0.0
      %903 = vmatpush2.msra.mxu0 0.0
      %904 = vmatprep.mubr.f32.mxu0 0.0
      %905 = vmatmul.mubr.f32.gmra.mxu0 %v793
      %v906 = vpop.f32.mrf.mxu0
      %v907 = vadd.f32 0.0, %v906
      %v908 = vpop.f32.mrf.mxu0
      %v909 = vadd.f32 0.0, %v908
      %910 = vmatprep.mubr.f32.mxu0 0.0
      %911 = vmatmul.mubr.f32.gmra.mxu0 %v796
      %v912 = vpop.f32.mrf.mxu0
      %v913 = vadd.f32 0.0, %v912
      %v914 = vpop.f32.mrf.mxu0
      %v915 = vadd.f32 0.0, %v914
      %916 = vmatprep.mubr.f32.mxu0 0.0
      %917 = vmatmul.mubr.f32.gmra.mxu0 %v799
      %v918 = vpop.f32.mrf.mxu0
      %v919 = vadd.f32 0.0, %v918
      %v920 = vpop.f32.mrf.mxu0
      %v921 = vadd.f32 0.0, %v920
      %922 = vmatprep.mubr.f32.mxu0 0.0
      %923 = vmatmul.mubr.f32.gmra.mxu0 %v802
      %v924 = vpop.f32.mrf.mxu0
      %v925 = vadd.f32 0.0, %v924
      %v926 = vpop.f32.mrf.mxu0
      %v927 = vadd.f32 0.0, %v926
      %928 = vmatprep.mubr.f32.mxu0 0.0
      %929 = vmatmul.mubr.f32.gmra.mxu0 %v805
      %v930 = vpop.f32.mrf.mxu0
      %v931 = vadd.f32 0.0, %v930
      %v932 = vpop.f32.mrf.mxu0
      %v933 = vadd.f32 0.0, %v932
      %934 = vmatprep.mubr.f32.mxu0 0.0
      %935 = vmatmul.mubr.f32.gmra.mxu0 %v808
      %v936 = vpop.f32.mrf.mxu0
      %v937 = vadd.f32 0.0, %v936
      %v938 = vpop.f32.mrf.mxu0
      %v939 = vadd.f32 0.0, %v938
      %940 = vmatprep.mubr.f32.mxu0 0.0
      %941 = vmatmul.mubr.f32.gmra.mxu0 %v811
      %v942 = vpop.f32.mrf.mxu0
      %v943 = vadd.f32 0.0, %v942
      %v944 = vpop.f32.mrf.mxu0
      %v945 = vadd.f32 0.0, %v944
      %946 = vmatprep.mubr.f32.mxu0 0.0
      %947 = vmatmul.mubr.f32.gmra.mxu0 %v814
      %v948 = vpop.f32.mrf.mxu0
      %v949 = vadd.f32 0.0, %v948
      %v950 = vpop.f32.mrf.mxu0
      %v951 = vadd.f32 0.0, %v950
      %952 = vmatprep.mubr.f32.mxu0 0.0
      %953 = vmatmul.mubr.f32.gmra.mxu0 %v817
      %v954 = vpop.f32.mrf.mxu0
      %v955 = vadd.f32 0.0, %v954
      %v956 = vpop.f32.mrf.mxu0
      %v957 = vadd.f32 0.0, %v956
      %958 = vmatprep.mubr.f32.mxu0 0.0
      %959 = vmatmul.mubr.f32.gmra.mxu0 %v820
      %v960 = vpop.f32.mrf.mxu0
      %v961 = vadd.f32 0.0, %v960
      %v962 = vpop.f32.mrf.mxu0
      %v963 = vadd.f32 0.0, %v962
      %964 = vmatprep.mubr.f32.mxu0 0.0
      %965 = vmatmul.mubr.f32.gmra.mxu0 %v823
      %v966 = vpop.f32.mrf.mxu0
      %v967 = vadd.f32 0.0, %v966
      %v968 = vpop.f32.mrf.mxu0
      %v969 = vadd.f32 0.0, %v968
      %970 = vmatprep.mubr.f32.mxu0 0.0
      %971 = vmatmul.mubr.f32.gmra.mxu0 %v826
      %v972 = vpop.f32.mrf.mxu0
      %v973 = vadd.f32 0.0, %v972
      %v974 = vpop.f32.mrf.mxu0
      %v975 = vadd.f32 0.0, %v974
      %976 = vmatprep.mubr.f32.mxu0 0.0
      %977 = vmatmul.mubr.f32.gmra.mxu0 %v829
      %v978 = vpop.f32.mrf.mxu0
      %v979 = vadd.f32 0.0, %v978
      %v980 = vpop.f32.mrf.mxu0
      %v981 = vadd.f32 0.0, %v980
      %982 = vmatprep.mubr.f32.mxu0 0.0
      %983 = vmatmul.mubr.f32.gmra.mxu0 %v832
      %v984 = vpop.f32.mrf.mxu0
      %v985 = vadd.f32 0.0, %v984
      %v986 = vpop.f32.mrf.mxu0
      %v987 = vadd.f32 0.0, %v986
      %988 = vmatprep.mubr.f32.mxu0 0.0
      %989 = vmatmul.mubr.f32.gmra.mxu0 %v835
      %v990 = vpop.f32.mrf.mxu0
      %v991 = vadd.f32 0.0, %v990
      %v992 = vpop.f32.mrf.mxu0
      %v993 = vadd.f32 0.0, %v992
      %994 = vmatprep.mubr.f32.mxu0 0.0
      %995 = vmatmul.mubr.f32.gmra.mxu0 %v838
      %v996 = vpop.f32.mrf.mxu0
      %v997 = vadd.f32 0.0, %v996
      %v998 = vpop.f32.mrf.mxu0
      %v999 = vadd.f32 0.0, %v998
      %1000 = vdwg.mxu0
      %v1001 = vadd.f32 %v704, %v907
      %v1002 = vadd.f32 %v705, %v909
      %v1003 = vadd.f32 %v706, %v913
      %v1004 = vadd.f32 %v707, %v915
      %v1005 = vadd.f32 %v708, %v919
      %v1006 = vadd.f32 %v709, %v921
      %v1007 = vadd.f32 %v710, %v925
      %v1008 = vadd.f32 %v711, %v927
      %v1009 = vadd.f32 %v712, %v931
      %v1010 = vadd.f32 %v713, %v933
      %v1011 = vadd.f32 %v714, %v937
      %v1012 = vadd.f32 %v715, %v939
      %v1013 = vadd.f32 %v716, %v943
      %v1014 = vadd.f32 %v717, %v945
      %v1015 = vadd.f32 %v718, %v949
      %v1016 = vadd.f32 %v719, %v951
      %v1017 = vadd.f32 %v720, %v955
      %v1018 = vadd.f32 %v721, %v957
      %v1019 = vadd.f32 %v722, %v961
      %v1020 = vadd.f32 %v723, %v963
      %v1021 = vadd.f32 %v724, %v967
      %v1022 = vadd.f32 %v725, %v969
      %v1023 = vadd.f32 %v726, %v973
      %v1024 = vadd.f32 %v727, %v975
      %v1025 = vadd.f32 %v728, %v979
      %v1026 = vadd.f32 %v729, %v981
      %v1027 = vadd.f32 %v730, %v985
      %v1028 = vadd.f32 %v731, %v987
      %v1029 = vadd.f32 %v732, %v991
      %v1030 = vadd.f32 %v733, %v993
      %v1031 = vadd.f32 %v734, %v997
      %v1032 = vadd.f32 %v735, %v999
      %v1033 = vlaneseq
      %v1034 = vshrl.u32 %v1033, 7
      %v1035 = vsub.s32 2, %v1034
      %v1036 = vrot.slane %v345, %v1035
      %v1037 = vlaneseq
      %v1038 = vshrl.u32 %v1037, 7
      %v1039 = vsub.s32 2, %v1038
      %v1040 = vrot.slane %v346, %v1039
      %1043 = vrot.lane.b32.xlu0 %v1036, 2
      %v1044 = vpop.permute.xlu0 %1043
      %1045 = vrot.lane.b32.xlu0 %v1040, 2
      %v1046 = vpop.permute.xlu0 %1045
      %vm1047 = vcmask 15360
      %v1048 = vsel %vm1047, %v1044, %v1046
      %v1052 = vmul.f32 %v736, %v1044
      %v1053 = vmul.f32 %v737, %v1048
      %v1054 = vmul.f32 %v738, %v1046
      %s1055 = scalar_lea.vmem %s3, 256
      %v1056 = vld [vmem:[%s1055] sm:$0xff]
      %v1057 = vld [vmem:[%s1055 + $0x8] sm:$0xff]
      %v1058 = vld [vmem:[%s1055 + $0x10] sm:$0xff]
      %v1059 = vld [vmem:[%s1055 + $0x18] sm:$0xff]
      %v1060 = vld [vmem:[%s1055 + $0x20] sm:$0xff]
      %v1061 = vld [vmem:[%s1055 + $0x28] sm:$0xff]
      %v1062 = vld [vmem:[%s1055 + $0x30] sm:$0xff]
      %v1063 = vld [vmem:[%s1055 + $0x38] sm:$0xff]
      %v1064 = vld [vmem:[%s1055 + $0x40] sm:$0xff]
      %v1065 = vld [vmem:[%s1055 + $0x48] sm:$0xff]
      %v1066 = vld [vmem:[%s1055 + $0x50] sm:$0xff]
      %v1067 = vld [vmem:[%s1055 + $0x58] sm:$0xff]
      %v1068 = vld [vmem:[%s1055 + $0x60] sm:$0xff]
      %v1069 = vld [vmem:[%s1055 + $0x68] sm:$0xff]
      %v1070 = vld [vmem:[%s1055 + $0x70] sm:$0xff]
      %v1071 = vld [vmem:[%s1055 + $0x78] sm:$0xff]
      %1075 = vrot.lane.b32.xlu0 %v1052, 126
      %v1076 = vpop.permute.xlu0 %1075
      %1077 = vrot.lane.b32.xlu0 %v1053, 126
      %v1078 = vpop.permute.xlu0 %1077
      %1079 = vrot.lane.b32.xlu0 %v1054, 126
      %v1080 = vpop.permute.xlu0 %1079
      %vm1081 = vcmask 1031168
      %v1082 = vsel %vm1081, %v1076, %v1078
      %v1083 = vsel %vm1081, %v1078, %v1080
      %v1087 = vsel %vm494, %v1056, 0
      %v1090 = vsel %vm494, %v1057, 0
      %v1093 = vsel %vm494, %v1058, 0
      %v1096 = vsel %vm494, %v1059, 0
      %v1099 = vsel %vm494, %v1060, 0
      %v1102 = vsel %vm494, %v1061, 0
      %v1105 = vsel %vm494, %v1062, 0
      %v1108 = vsel %vm494, %v1063, 0
      %v1111 = vsel %vm494, %v1064, 0
      %v1114 = vsel %vm494, %v1065, 0
      %v1117 = vsel %vm494, %v1066, 0
      %v1120 = vsel %vm494, %v1067, 0
      %v1123 = vsel %vm494, %v1068, 0
      %v1126 = vsel %vm494, %v1069, 0
      %v1129 = vsel %vm494, %v1070, 0
      %v1132 = vsel %vm494, %v1071, 0
      %1134 = vmatprep.subr.mxu0 0.0
      %1135 = vmatpush1.msra.mxu0 0.0
      %1136 = vmatprep.subr.mxu0 0.0
      %1137 = vmatpush1.msra.mxu0 0.0
      %1138 = vmatprep.subr.mxu0 0.0
      %1139 = vmatpush1.msra.mxu0 0.0
      %1140 = vmatprep.subr.mxu0 0.0
      %1141 = vmatpush1.msra.mxu0 0.0
      %1142 = vmatprep.subr.mxu0 0.0
      %1143 = vmatpush1.msra.mxu0 0.0
      %1144 = vmatprep.subr.mxu0 0.0
      %1145 = vmatpush1.msra.mxu0 0.0
      %1146 = vmatprep.subr.mxu0 0.0
      %1147 = vmatpush1.msra.mxu0 0.0
      %1148 = vmatprep.subr.mxu0 0.0
      %1149 = vmatpush1.msra.mxu0 0.0
      %1150 = vmatprep.subr.mxu0 0.0
      %1151 = vmatpush1.msra.mxu0 0.0
      %1152 = vmatprep.subr.mxu0 0.0
      %1153 = vmatpush1.msra.mxu0 0.0
      %1154 = vmatprep.subr.mxu0 0.0
      %1155 = vmatpush1.msra.mxu0 0.0
      %1156 = vmatprep.subr.mxu0 0.0
      %1157 = vmatpush1.msra.mxu0 0.0
      %1158 = vmatprep.subr.mxu0 0.0
      %1159 = vmatpush1.msra.mxu0 0.0
      %1160 = vmatprep.subr.mxu0 0.0
      %1161 = vmatpush1.msra.mxu0 0.0
      %1162 = vmatprep.subr.mxu0 0.0
      %1163 = vmatpush1.msra.mxu0 0.0
      %1164 = vmatprep.subr.mxu0 %v1083
      %1165 = vmatpush1.msra.mxu0 %v1082
      %1166 = vmatprep.subr.mxu0 0.0
      %1167 = vmatpush2.msra.mxu0 0.0
      %1168 = vmatprep.subr.mxu0 0.0
      %1169 = vmatpush2.msra.mxu0 0.0
      %1170 = vmatprep.subr.mxu0 0.0
      %1171 = vmatpush2.msra.mxu0 0.0
      %1172 = vmatprep.subr.mxu0 0.0
      %1173 = vmatpush2.msra.mxu0 0.0
      %1174 = vmatprep.subr.mxu0 0.0
      %1175 = vmatpush2.msra.mxu0 0.0
      %1176 = vmatprep.subr.mxu0 0.0
      %1177 = vmatpush2.msra.mxu0 0.0
      %1178 = vmatprep.subr.mxu0 0.0
      %1179 = vmatpush2.msra.mxu0 0.0
      %1180 = vmatprep.subr.mxu0 0.0
      %1181 = vmatpush2.msra.mxu0 0.0
      %1182 = vmatprep.subr.mxu0 0.0
      %1183 = vmatpush2.msra.mxu0 0.0
      %1184 = vmatprep.subr.mxu0 0.0
      %1185 = vmatpush2.msra.mxu0 0.0
      %1186 = vmatprep.subr.mxu0 0.0
      %1187 = vmatpush2.msra.mxu0 0.0
      %1188 = vmatprep.subr.mxu0 0.0
      %1189 = vmatpush2.msra.mxu0 0.0
      %1190 = vmatprep.subr.mxu0 0.0
      %1191 = vmatpush2.msra.mxu0 0.0
      %1192 = vmatprep.subr.mxu0 0.0
      %1193 = vmatpush2.msra.mxu0 0.0
      %1194 = vmatprep.subr.mxu0 0.0
      %1195 = vmatpush2.msra.mxu0 0.0
      %1196 = vmatprep.subr.mxu0 0.0
      %1197 = vmatpush2.msra.mxu0 0.0
      %1198 = vmatprep.mubr.f32.mxu0 0.0
      %1199 = vmatmul.mubr.f32.gmra.mxu0 %v1087
      %v1200 = vpop.f32.mrf.mxu0
      %v1201 = vadd.f32 0.0, %v1200
      %v1202 = vpop.f32.mrf.mxu0
      %v1203 = vadd.f32 0.0, %v1202
      %1204 = vmatprep.mubr.f32.mxu0 0.0
      %1205 = vmatmul.mubr.f32.gmra.mxu0 %v1090
      %v1206 = vpop.f32.mrf.mxu0
      %v1207 = vadd.f32 0.0, %v1206
      %v1208 = vpop.f32.mrf.mxu0
      %v1209 = vadd.f32 0.0, %v1208
      %1210 = vmatprep.mubr.f32.mxu0 0.0
      %1211 = vmatmul.mubr.f32.gmra.mxu0 %v1093
      %v1212 = vpop.f32.mrf.mxu0
      %v1213 = vadd.f32 0.0, %v1212
      %v1214 = vpop.f32.mrf.mxu0
      %v1215 = vadd.f32 0.0, %v1214
      %1216 = vmatprep.mubr.f32.mxu0 0.0
      %1217 = vmatmul.mubr.f32.gmra.mxu0 %v1096
      %v1218 = vpop.f32.mrf.mxu0
      %v1219 = vadd.f32 0.0, %v1218
      %v1220 = vpop.f32.mrf.mxu0
      %v1221 = vadd.f32 0.0, %v1220
      %1222 = vmatprep.mubr.f32.mxu0 0.0
      %1223 = vmatmul.mubr.f32.gmra.mxu0 %v1099
      %v1224 = vpop.f32.mrf.mxu0
      %v1225 = vadd.f32 0.0, %v1224
      %v1226 = vpop.f32.mrf.mxu0
      %v1227 = vadd.f32 0.0, %v1226
      %1228 = vmatprep.mubr.f32.mxu0 0.0
      %1229 = vmatmul.mubr.f32.gmra.mxu0 %v1102
      %v1230 = vpop.f32.mrf.mxu0
      %v1231 = vadd.f32 0.0, %v1230
      %v1232 = vpop.f32.mrf.mxu0
      %v1233 = vadd.f32 0.0, %v1232
      %1234 = vmatprep.mubr.f32.mxu0 0.0
      %1235 = vmatmul.mubr.f32.gmra.mxu0 %v1105
      %v1236 = vpop.f32.mrf.mxu0
      %v1237 = vadd.f32 0.0, %v1236
      %v1238 = vpop.f32.mrf.mxu0
      %v1239 = vadd.f32 0.0, %v1238
      %1240 = vmatprep.mubr.f32.mxu0 0.0
      %1241 = vmatmul.mubr.f32.gmra.mxu0 %v1108
      %v1242 = vpop.f32.mrf.mxu0
      %v1243 = vadd.f32 0.0, %v1242
      %v1244 = vpop.f32.mrf.mxu0
      %v1245 = vadd.f32 0.0, %v1244
      %1246 = vmatprep.mubr.f32.mxu0 0.0
      %1247 = vmatmul.mubr.f32.gmra.mxu0 %v1111
      %v1248 = vpop.f32.mrf.mxu0
      %v1249 = vadd.f32 0.0, %v1248
      %v1250 = vpop.f32.mrf.mxu0
      %v1251 = vadd.f32 0.0, %v1250
      %1252 = vmatprep.mubr.f32.mxu0 0.0
      %1253 = vmatmul.mubr.f32.gmra.mxu0 %v1114
      %v1254 = vpop.f32.mrf.mxu0
      %v1255 = vadd.f32 0.0, %v1254
      %v1256 = vpop.f32.mrf.mxu0
      %v1257 = vadd.f32 0.0, %v1256
      %1258 = vmatprep.mubr.f32.mxu0 0.0
      %1259 = vmatmul.mubr.f32.gmra.mxu0 %v1117
      %v1260 = vpop.f32.mrf.mxu0
      %v1261 = vadd.f32 0.0, %v1260
      %v1262 = vpop.f32.mrf.mxu0
      %v1263 = vadd.f32 0.0, %v1262
      %1264 = vmatprep.mubr.f32.mxu0 0.0
      %1265 = vmatmul.mubr.f32.gmra.mxu0 %v1120
      %v1266 = vpop.f32.mrf.mxu0
      %v1267 = vadd.f32 0.0, %v1266
      %v1268 = vpop.f32.mrf.mxu0
      %v1269 = vadd.f32 0.0, %v1268
      %1270 = vmatprep.mubr.f32.mxu0 0.0
      %1271 = vmatmul.mubr.f32.gmra.mxu0 %v1123
      %v1272 = vpop.f32.mrf.mxu0
      %v1273 = vadd.f32 0.0, %v1272
      %v1274 = vpop.f32.mrf.mxu0
      %v1275 = vadd.f32 0.0, %v1274
      %1276 = vmatprep.mubr.f32.mxu0 0.0
      %1277 = vmatmul.mubr.f32.gmra.mxu0 %v1126
      %v1278 = vpop.f32.mrf.mxu0
      %v1279 = vadd.f32 0.0, %v1278
      %v1280 = vpop.f32.mrf.mxu0
      %v1281 = vadd.f32 0.0, %v1280
      %1282 = vmatprep.mubr.f32.mxu0 0.0
      %1283 = vmatmul.mubr.f32.gmra.mxu0 %v1129
      %v1284 = vpop.f32.mrf.mxu0
      %v1285 = vadd.f32 0.0, %v1284
      %v1286 = vpop.f32.mrf.mxu0
      %v1287 = vadd.f32 0.0, %v1286
      %1288 = vmatprep.mubr.f32.mxu0 0.0
      %1289 = vmatmul.mubr.f32.gmra.mxu0 %v1132
      %v1290 = vpop.f32.mrf.mxu0
      %v1291 = vadd.f32 0.0, %v1290
      %v1292 = vpop.f32.mrf.mxu0
      %v1293 = vadd.f32 0.0, %v1292
      %1294 = vdwg.mxu0
      %v1295 = vadd.f32 %v1001, %v1201
      %v1296 = vadd.f32 %v1002, %v1203
      %v1297 = vadd.f32 %v1003, %v1207
      %v1298 = vadd.f32 %v1004, %v1209
      %v1299 = vadd.f32 %v1005, %v1213
      %v1300 = vadd.f32 %v1006, %v1215
      %v1301 = vadd.f32 %v1007, %v1219
      %v1302 = vadd.f32 %v1008, %v1221
      %v1303 = vadd.f32 %v1009, %v1225
      %v1304 = vadd.f32 %v1010, %v1227
      %v1305 = vadd.f32 %v1011, %v1231
      %v1306 = vadd.f32 %v1012, %v1233
      %v1307 = vadd.f32 %v1013, %v1237
      %v1308 = vadd.f32 %v1014, %v1239
      %v1309 = vadd.f32 %v1015, %v1243
      %v1310 = vadd.f32 %v1016, %v1245
      %v1311 = vadd.f32 %v1017, %v1249
      %v1312 = vadd.f32 %v1018, %v1251
      %v1313 = vadd.f32 %v1019, %v1255
      %v1314 = vadd.f32 %v1020, %v1257
      %v1315 = vadd.f32 %v1021, %v1261
      %v1316 = vadd.f32 %v1022, %v1263
      %v1317 = vadd.f32 %v1023, %v1267
      %v1318 = vadd.f32 %v1024, %v1269
      %v1319 = vadd.f32 %v1025, %v1273
      %v1320 = vadd.f32 %v1026, %v1275
      %v1321 = vadd.f32 %v1027, %v1279
      %v1322 = vadd.f32 %v1028, %v1281
      %v1323 = vadd.f32 %v1029, %v1285
      %v1324 = vadd.f32 %v1030, %v1287
      %v1325 = vadd.f32 %v1031, %v1291
      %v1326 = vadd.f32 %v1032, %v1293
      %v1327 = vlaneseq
      %v1328 = vshrl.u32 %v1327, 7
      %v1329 = vsub.s32 3, %v1328
      %v1330 = vrot.slane %v345, %v1329
      %v1331 = vlaneseq
      %v1332 = vshrl.u32 %v1331, 7
      %v1333 = vsub.s32 3, %v1332
      %v1334 = vrot.slane %v346, %v1333
      %1337 = vrot.lane.b32.xlu0 %v1330, 16
      %v1338 = vpop.permute.xlu0 %1337
      %1339 = vrot.lane.b32.xlu0 %v1334, 16
      %v1340 = vpop.permute.xlu0 %1339
      %vm1341 = vcmask 130048
      %v1342 = vsel %vm1341, %v1338, %v1340
      %v1346 = vmul.f32 %v736, %v1338
      %v1347 = vmul.f32 %v737, %v1342
      %v1348 = vmul.f32 %v738, %v1340
      %s1349 = scalar_lea.vmem %s3, 384
      %v1350 = vld [vmem:[%s1349] sm:$0xff]
      %v1351 = vld [vmem:[%s1349 + $0x8] sm:$0xff]
      %v1352 = vld [vmem:[%s1349 + $0x10] sm:$0xff]
      %v1353 = vld [vmem:[%s1349 + $0x18] sm:$0xff]
      %v1354 = vld [vmem:[%s1349 + $0x20] sm:$0xff]
      %v1355 = vld [vmem:[%s1349 + $0x28] sm:$0xff]
      %v1356 = vld [vmem:[%s1349 + $0x30] sm:$0xff]
      %v1357 = vld [vmem:[%s1349 + $0x38] sm:$0xff]
      %v1358 = vld [vmem:[%s1349 + $0x40] sm:$0xff]
      %v1359 = vld [vmem:[%s1349 + $0x48] sm:$0xff]
      %v1360 = vld [vmem:[%s1349 + $0x50] sm:$0xff]
      %v1361 = vld [vmem:[%s1349 + $0x58] sm:$0xff]
      %v1362 = vld [vmem:[%s1349 + $0x60] sm:$0xff]
      %v1363 = vld [vmem:[%s1349 + $0x68] sm:$0xff]
      %v1364 = vld [vmem:[%s1349 + $0x70] sm:$0xff]
      %v1365 = vld [vmem:[%s1349 + $0x78] sm:$0xff]
      %1369 = vrot.lane.b32.xlu0 %v1346, 112
      %v1370 = vpop.permute.xlu0 %1369
      %1371 = vrot.lane.b32.xlu0 %v1347, 112
      %v1372 = vpop.permute.xlu0 %1371
      %1373 = vrot.lane.b32.xlu0 %v1348, 112
      %v1374 = vpop.permute.xlu0 %1373
      %vm1375 = vcmask 916480
      %v1376 = vsel %vm1375, %v1370, %v1372
      %v1377 = vsel %vm1375, %v1372, %v1374
      %v1381 = vsel %vm494, %v1350, 0
      %v1384 = vsel %vm494, %v1351, 0
      %v1387 = vsel %vm494, %v1352, 0
      %v1390 = vsel %vm494, %v1353, 0
      %v1393 = vsel %vm494, %v1354, 0
      %v1396 = vsel %vm494, %v1355, 0
      %v1399 = vsel %vm494, %v1356, 0
      %v1402 = vsel %vm494, %v1357, 0
      %v1405 = vsel %vm494, %v1358, 0
      %v1408 = vsel %vm494, %v1359, 0
      %v1411 = vsel %vm494, %v1360, 0
      %v1414 = vsel %vm494, %v1361, 0
      %v1417 = vsel %vm494, %v1362, 0
      %v1420 = vsel %vm494, %v1363, 0
      %v1423 = vsel %vm494, %v1364, 0
      %v1426 = vsel %vm494, %v1365, 0
      %1428 = vmatprep.subr.mxu0 0.0
      %1429 = vmatpush1.msra.mxu0 0.0
      %1430 = vmatprep.subr.mxu0 0.0
      %1431 = vmatpush1.msra.mxu0 0.0
      %1432 = vmatprep.subr.mxu0 0.0
      %1433 = vmatpush1.msra.mxu0 0.0
      %1434 = vmatprep.subr.mxu0 0.0
      %1435 = vmatpush1.msra.mxu0 0.0
      %1436 = vmatprep.subr.mxu0 0.0
      %1437 = vmatpush1.msra.mxu0 0.0
      %1438 = vmatprep.subr.mxu0 0.0
      %1439 = vmatpush1.msra.mxu0 0.0
      %1440 = vmatprep.subr.mxu0 0.0
      %1441 = vmatpush1.msra.mxu0 0.0
      %1442 = vmatprep.subr.mxu0 0.0
      %1443 = vmatpush1.msra.mxu0 0.0
      %1444 = vmatprep.subr.mxu0 0.0
      %1445 = vmatpush1.msra.mxu0 0.0
      %1446 = vmatprep.subr.mxu0 0.0
      %1447 = vmatpush1.msra.mxu0 0.0
      %1448 = vmatprep.subr.mxu0 0.0
      %1449 = vmatpush1.msra.mxu0 0.0
      %1450 = vmatprep.subr.mxu0 0.0
      %1451 = vmatpush1.msra.mxu0 0.0
      %1452 = vmatprep.subr.mxu0 0.0
      %1453 = vmatpush1.msra.mxu0 0.0
      %1454 = vmatprep.subr.mxu0 0.0
      %1455 = vmatpush1.msra.mxu0 0.0
      %1456 = vmatprep.subr.mxu0 0.0
      %1457 = vmatpush1.msra.mxu0 0.0
      %1458 = vmatprep.subr.mxu0 %v1377
      %1459 = vmatpush1.msra.mxu0 %v1376
      %1460 = vmatprep.subr.mxu0 0.0
      %1461 = vmatpush2.msra.mxu0 0.0
      %1462 = vmatprep.subr.mxu0 0.0
      %1463 = vmatpush2.msra.mxu0 0.0
      %1464 = vmatprep.subr.mxu0 0.0
      %1465 = vmatpush2.msra.mxu0 0.0
      %1466 = vmatprep.subr.mxu0 0.0
      %1467 = vmatpush2.msra.mxu0 0.0
      %1468 = vmatprep.subr.mxu0 0.0
      %1469 = vmatpush2.msra.mxu0 0.0
      %1470 = vmatprep.subr.mxu0 0.0
      %1471 = vmatpush2.msra.mxu0 0.0
      %1472 = vmatprep.subr.mxu0 0.0
      %1473 = vmatpush2.msra.mxu0 0.0
      %1474 = vmatprep.subr.mxu0 0.0
      %1475 = vmatpush2.msra.mxu0 0.0
      %1476 = vmatprep.subr.mxu0 0.0
      %1477 = vmatpush2.msra.mxu0 0.0
      %1478 = vmatprep.subr.mxu0 0.0
      %1479 = vmatpush2.msra.mxu0 0.0
      %1480 = vmatprep.subr.mxu0 0.0
      %1481 = vmatpush2.msra.mxu0 0.0
      %1482 = vmatprep.subr.mxu0 0.0
      %1483 = vmatpush2.msra.mxu0 0.0
      %1484 = vmatprep.subr.mxu0 0.0
      %1485 = vmatpush2.msra.mxu0 0.0
      %1486 = vmatprep.subr.mxu0 0.0
      %1487 = vmatpush2.msra.mxu0 0.0
      %1488 = vmatprep.subr.mxu0 0.0
      %1489 = vmatpush2.msra.mxu0 0.0
      %1490 = vmatprep.subr.mxu0 0.0
      %1491 = vmatpush2.msra.mxu0 0.0
      %1492 = vmatprep.mubr.f32.mxu0 0.0
      %1493 = vmatmul.mubr.f32.gmra.mxu0 %v1381
      %v1494 = vpop.f32.mrf.mxu0
      %v1495 = vadd.f32 0.0, %v1494
      %v1496 = vpop.f32.mrf.mxu0
      %v1497 = vadd.f32 0.0, %v1496
      %1498 = vmatprep.mubr.f32.mxu0 0.0
      %1499 = vmatmul.mubr.f32.gmra.mxu0 %v1384
      %v1500 = vpop.f32.mrf.mxu0
      %v1501 = vadd.f32 0.0, %v1500
      %v1502 = vpop.f32.mrf.mxu0
      %v1503 = vadd.f32 0.0, %v1502
      %1504 = vmatprep.mubr.f32.mxu0 0.0
      %1505 = vmatmul.mubr.f32.gmra.mxu0 %v1387
      %v1506 = vpop.f32.mrf.mxu0
      %v1507 = vadd.f32 0.0, %v1506
      %v1508 = vpop.f32.mrf.mxu0
      %v1509 = vadd.f32 0.0, %v1508
      %1510 = vmatprep.mubr.f32.mxu0 0.0
      %1511 = vmatmul.mubr.f32.gmra.mxu0 %v1390
      %v1512 = vpop.f32.mrf.mxu0
      %v1513 = vadd.f32 0.0, %v1512
      %v1514 = vpop.f32.mrf.mxu0
      %v1515 = vadd.f32 0.0, %v1514
      %1516 = vmatprep.mubr.f32.mxu0 0.0
      %1517 = vmatmul.mubr.f32.gmra.mxu0 %v1393
      %v1518 = vpop.f32.mrf.mxu0
      %v1519 = vadd.f32 0.0, %v1518
      %v1520 = vpop.f32.mrf.mxu0
      %v1521 = vadd.f32 0.0, %v1520
      %1522 = vmatprep.mubr.f32.mxu0 0.0
      %1523 = vmatmul.mubr.f32.gmra.mxu0 %v1396
      %v1524 = vpop.f32.mrf.mxu0
      %v1525 = vadd.f32 0.0, %v1524
      %v1526 = vpop.f32.mrf.mxu0
      %v1527 = vadd.f32 0.0, %v1526
      %1528 = vmatprep.mubr.f32.mxu0 0.0
      %1529 = vmatmul.mubr.f32.gmra.mxu0 %v1399
      %v1530 = vpop.f32.mrf.mxu0
      %v1531 = vadd.f32 0.0, %v1530
      %v1532 = vpop.f32.mrf.mxu0
      %v1533 = vadd.f32 0.0, %v1532
      %1534 = vmatprep.mubr.f32.mxu0 0.0
      %1535 = vmatmul.mubr.f32.gmra.mxu0 %v1402
      %v1536 = vpop.f32.mrf.mxu0
      %v1537 = vadd.f32 0.0, %v1536
      %v1538 = vpop.f32.mrf.mxu0
      %v1539 = vadd.f32 0.0, %v1538
      %1540 = vmatprep.mubr.f32.mxu0 0.0
      %1541 = vmatmul.mubr.f32.gmra.mxu0 %v1405
      %v1542 = vpop.f32.mrf.mxu0
      %v1543 = vadd.f32 0.0, %v1542
      %v1544 = vpop.f32.mrf.mxu0
      %v1545 = vadd.f32 0.0, %v1544
      %1546 = vmatprep.mubr.f32.mxu0 0.0
      %1547 = vmatmul.mubr.f32.gmra.mxu0 %v1408
      %v1548 = vpop.f32.mrf.mxu0
      %v1549 = vadd.f32 0.0, %v1548
      %v1550 = vpop.f32.mrf.mxu0
      %v1551 = vadd.f32 0.0, %v1550
      %1552 = vmatprep.mubr.f32.mxu0 0.0
      %1553 = vmatmul.mubr.f32.gmra.mxu0 %v1411
      %v1554 = vpop.f32.mrf.mxu0
      %v1555 = vadd.f32 0.0, %v1554
      %v1556 = vpop.f32.mrf.mxu0
      %v1557 = vadd.f32 0.0, %v1556
      %1558 = vmatprep.mubr.f32.mxu0 0.0
      %1559 = vmatmul.mubr.f32.gmra.mxu0 %v1414
      %v1560 = vpop.f32.mrf.mxu0
      %v1561 = vadd.f32 0.0, %v1560
      %v1562 = vpop.f32.mrf.mxu0
      %v1563 = vadd.f32 0.0, %v1562
      %1564 = vmatprep.mubr.f32.mxu0 0.0
      %1565 = vmatmul.mubr.f32.gmra.mxu0 %v1417
      %v1566 = vpop.f32.mrf.mxu0
      %v1567 = vadd.f32 0.0, %v1566
      %v1568 = vpop.f32.mrf.mxu0
      %v1569 = vadd.f32 0.0, %v1568
      %1570 = vmatprep.mubr.f32.mxu0 0.0
      %1571 = vmatmul.mubr.f32.gmra.mxu0 %v1420
      %v1572 = vpop.f32.mrf.mxu0
      %v1573 = vadd.f32 0.0, %v1572
      %v1574 = vpop.f32.mrf.mxu0
      %v1575 = vadd.f32 0.0, %v1574
      %1576 = vmatprep.mubr.f32.mxu0 0.0
      %1577 = vmatmul.mubr.f32.gmra.mxu0 %v1423
      %v1578 = vpop.f32.mrf.mxu0
      %v1579 = vadd.f32 0.0, %v1578
      %v1580 = vpop.f32.mrf.mxu0
      %v1581 = vadd.f32 0.0, %v1580
      %1582 = vmatprep.mubr.f32.mxu0 0.0
      %1583 = vmatmul.mubr.f32.gmra.mxu0 %v1426
      %v1584 = vpop.f32.mrf.mxu0
      %v1585 = vadd.f32 0.0, %v1584
      %v1586 = vpop.f32.mrf.mxu0
      %v1587 = vadd.f32 0.0, %v1586
      %1588 = vdwg.mxu0
      %v1589 = vadd.f32 %v1295, %v1495
      %v1590 = vadd.f32 %v1296, %v1497
      %v1591 = vadd.f32 %v1297, %v1501
      %v1592 = vadd.f32 %v1298, %v1503
      %v1593 = vadd.f32 %v1299, %v1507
      %v1594 = vadd.f32 %v1300, %v1509
      %v1595 = vadd.f32 %v1301, %v1513
      %v1596 = vadd.f32 %v1302, %v1515
      %v1597 = vadd.f32 %v1303, %v1519
      %v1598 = vadd.f32 %v1304, %v1521
      %v1599 = vadd.f32 %v1305, %v1525
      %v1600 = vadd.f32 %v1306, %v1527
      %v1601 = vadd.f32 %v1307, %v1531
      %v1602 = vadd.f32 %v1308, %v1533
      %v1603 = vadd.f32 %v1309, %v1537
      %v1604 = vadd.f32 %v1310, %v1539
      %v1605 = vadd.f32 %v1311, %v1543
      %v1606 = vadd.f32 %v1312, %v1545
      %v1607 = vadd.f32 %v1313, %v1549
      %v1608 = vadd.f32 %v1314, %v1551
      %v1609 = vadd.f32 %v1315, %v1555
      %v1610 = vadd.f32 %v1316, %v1557
      %v1611 = vadd.f32 %v1317, %v1561
      %v1612 = vadd.f32 %v1318, %v1563
      %v1613 = vadd.f32 %v1319, %v1567
      %v1614 = vadd.f32 %v1320, %v1569
      %v1615 = vadd.f32 %v1321, %v1573
      %v1616 = vadd.f32 %v1322, %v1575
      %v1617 = vadd.f32 %v1323, %v1579
      %v1618 = vadd.f32 %v1324, %v1581
      %v1619 = vadd.f32 %v1325, %v1585
      %v1620 = vadd.f32 %v1326, %v1587
      %v1621 = vlaneseq
      %v1622 = vshrl.u32 %v1621, 7
      %v1623 = vsub.s32 4, %v1622
      %v1624 = vrot.slane %v345, %v1623
      %v1625 = vlaneseq
      %v1626 = vshrl.u32 %v1625, 7
      %v1627 = vsub.s32 4, %v1626
      %v1628 = vrot.slane %v346, %v1627
      %1631 = vrot.lane.b32.xlu0 %v1624, 17
      %v1632 = vpop.permute.xlu0 %1631
      %1633 = vrot.lane.b32.xlu0 %v1628, 17
      %v1634 = vpop.permute.xlu0 %1633
      %v1635 = vsel %vm361, %v1632, %v1634
      %v1639 = vmul.f32 %v736, %v1632
      %v1640 = vmul.f32 %v737, %v1635
      %v1641 = vmul.f32 %v738, %v1634
      %s1642 = scalar_lea.vmem %s3, 512
      %v1643 = vld [vmem:[%s1642] sm:$0xff]
      %v1644 = vld [vmem:[%s1642 + $0x8] sm:$0xff]
      %v1645 = vld [vmem:[%s1642 + $0x10] sm:$0xff]
      %v1646 = vld [vmem:[%s1642 + $0x18] sm:$0xff]
      %v1647 = vld [vmem:[%s1642 + $0x20] sm:$0xff]
      %v1648 = vld [vmem:[%s1642 + $0x28] sm:$0xff]
      %v1649 = vld [vmem:[%s1642 + $0x30] sm:$0xff]
      %v1650 = vld [vmem:[%s1642 + $0x38] sm:$0xff]
      %v1651 = vld [vmem:[%s1642 + $0x40] sm:$0xff]
      %v1652 = vld [vmem:[%s1642 + $0x48] sm:$0xff]
      %v1653 = vld [vmem:[%s1642 + $0x50] sm:$0xff]
      %v1654 = vld [vmem:[%s1642 + $0x58] sm:$0xff]
      %v1655 = vld [vmem:[%s1642 + $0x60] sm:$0xff]
      %v1656 = vld [vmem:[%s1642 + $0x68] sm:$0xff]
      %v1657 = vld [vmem:[%s1642 + $0x70] sm:$0xff]
      %v1658 = vld [vmem:[%s1642 + $0x78] sm:$0xff]
      %1662 = vrot.lane.b32.xlu0 %v1639, 111
      %v1663 = vpop.permute.xlu0 %1662
      %1664 = vrot.lane.b32.xlu0 %v1640, 111
      %v1665 = vpop.permute.xlu0 %1664
      %1666 = vrot.lane.b32.xlu0 %v1641, 111
      %v1667 = vpop.permute.xlu0 %1666
      %vm1668 = vcmask 908288
      %v1669 = vsel %vm1668, %v1663, %v1665
      %v1670 = vsel %vm1668, %v1665, %v1667
      %v1674 = vsel %vm494, %v1643, 0
      %v1677 = vsel %vm494, %v1644, 0
      %v1680 = vsel %vm494, %v1645, 0
      %v1683 = vsel %vm494, %v1646, 0
      %v1686 = vsel %vm494, %v1647, 0
      %v1689 = vsel %vm494, %v1648, 0
      %v1692 = vsel %vm494, %v1649, 0
      %v1695 = vsel %vm494, %v1650, 0
      %v1698 = vsel %vm494, %v1651, 0
      %v1701 = vsel %vm494, %v1652, 0
      %v1704 = vsel %vm494, %v1653, 0
      %v1707 = vsel %vm494, %v1654, 0
      %v1710 = vsel %vm494, %v1655, 0
      %v1713 = vsel %vm494, %v1656, 0
      %v1716 = vsel %vm494, %v1657, 0
      %v1719 = vsel %vm494, %v1658, 0
      %1721 = vmatprep.subr.mxu0 0.0
      %1722 = vmatpush1.msra.mxu0 0.0
      %1723 = vmatprep.subr.mxu0 0.0
      %1724 = vmatpush1.msra.mxu0 0.0
      %1725 = vmatprep.subr.mxu0 0.0
      %1726 = vmatpush1.msra.mxu0 0.0
      %1727 = vmatprep.subr.mxu0 0.0
      %1728 = vmatpush1.msra.mxu0 0.0
      %1729 = vmatprep.subr.mxu0 0.0
      %1730 = vmatpush1.msra.mxu0 0.0
      %1731 = vmatprep.subr.mxu0 0.0
      %1732 = vmatpush1.msra.mxu0 0.0
      %1733 = vmatprep.subr.mxu0 0.0
      %1734 = vmatpush1.msra.mxu0 0.0
      %1735 = vmatprep.subr.mxu0 0.0
      %1736 = vmatpush1.msra.mxu0 0.0
      %1737 = vmatprep.subr.mxu0 0.0
      %1738 = vmatpush1.msra.mxu0 0.0
      %1739 = vmatprep.subr.mxu0 0.0
      %1740 = vmatpush1.msra.mxu0 0.0
      %1741 = vmatprep.subr.mxu0 0.0
      %1742 = vmatpush1.msra.mxu0 0.0
      %1743 = vmatprep.subr.mxu0 0.0
      %1744 = vmatpush1.msra.mxu0 0.0
      %1745 = vmatprep.subr.mxu0 0.0
      %1746 = vmatpush1.msra.mxu0 0.0
      %1747 = vmatprep.subr.mxu0 0.0
      %1748 = vmatpush1.msra.mxu0 0.0
      %1749 = vmatprep.subr.mxu0 0.0
      %1750 = vmatpush1.msra.mxu0 0.0
      %1751 = vmatprep.subr.mxu0 %v1670
      %1752 = vmatpush1.msra.mxu0 %v1669
      %1753 = vmatprep.subr.mxu0 0.0
      %1754 = vmatpush2.msra.mxu0 0.0
      %1755 = vmatprep.subr.mxu0 0.0
      %1756 = vmatpush2.msra.mxu0 0.0
      %1757 = vmatprep.subr.mxu0 0.0
      %1758 = vmatpush2.msra.mxu0 0.0
      %1759 = vmatprep.subr.mxu0 0.0
      %1760 = vmatpush2.msra.mxu0 0.0
      %1761 = vmatprep.subr.mxu0 0.0
      %1762 = vmatpush2.msra.mxu0 0.0
      %1763 = vmatprep.subr.mxu0 0.0
      %1764 = vmatpush2.msra.mxu0 0.0
      %1765 = vmatprep.subr.mxu0 0.0
      %1766 = vmatpush2.msra.mxu0 0.0
      %1767 = vmatprep.subr.mxu0 0.0
      %1768 = vmatpush2.msra.mxu0 0.0
      %1769 = vmatprep.subr.mxu0 0.0
      %1770 = vmatpush2.msra.mxu0 0.0
      %1771 = vmatprep.subr.mxu0 0.0
      %1772 = vmatpush2.msra.mxu0 0.0
      %1773 = vmatprep.subr.mxu0 0.0
      %1774 = vmatpush2.msra.mxu0 0.0
      %1775 = vmatprep.subr.mxu0 0.0
      %1776 = vmatpush2.msra.mxu0 0.0
      %1777 = vmatprep.subr.mxu0 0.0
      %1778 = vmatpush2.msra.mxu0 0.0
      %1779 = vmatprep.subr.mxu0 0.0
      %1780 = vmatpush2.msra.mxu0 0.0
      %1781 = vmatprep.subr.mxu0 0.0
      %1782 = vmatpush2.msra.mxu0 0.0
      %1783 = vmatprep.subr.mxu0 0.0
      %1784 = vmatpush2.msra.mxu0 0.0
      %1785 = vmatprep.mubr.f32.mxu0 0.0
      %1786 = vmatmul.mubr.f32.gmra.mxu0 %v1674
      %v1787 = vpop.f32.mrf.mxu0
      %v1788 = vadd.f32 0.0, %v1787
      %v1789 = vpop.f32.mrf.mxu0
      %v1790 = vadd.f32 0.0, %v1789
      %1791 = vmatprep.mubr.f32.mxu0 0.0
      %1792 = vmatmul.mubr.f32.gmra.mxu0 %v1677
      %v1793 = vpop.f32.mrf.mxu0
      %v1794 = vadd.f32 0.0, %v1793
      %v1795 = vpop.f32.mrf.mxu0
      %v1796 = vadd.f32 0.0, %v1795
      %1797 = vmatprep.mubr.f32.mxu0 0.0
      %1798 = vmatmul.mubr.f32.gmra.mxu0 %v1680
      %v1799 = vpop.f32.mrf.mxu0
      %v1800 = vadd.f32 0.0, %v1799
      %v1801 = vpop.f32.mrf.mxu0
      %v1802 = vadd.f32 0.0, %v1801
      %1803 = vmatprep.mubr.f32.mxu0 0.0
      %1804 = vmatmul.mubr.f32.gmra.mxu0 %v1683
      %v1805 = vpop.f32.mrf.mxu0
      %v1806 = vadd.f32 0.0, %v1805
      %v1807 = vpop.f32.mrf.mxu0
      %v1808 = vadd.f32 0.0, %v1807
      %1809 = vmatprep.mubr.f32.mxu0 0.0
      %1810 = vmatmul.mubr.f32.gmra.mxu0 %v1686
      %v1811 = vpop.f32.mrf.mxu0
      %v1812 = vadd.f32 0.0, %v1811
      %v1813 = vpop.f32.mrf.mxu0
      %v1814 = vadd.f32 0.0, %v1813
      %1815 = vmatprep.mubr.f32.mxu0 0.0
      %1816 = vmatmul.mubr.f32.gmra.mxu0 %v1689
      %v1817 = vpop.f32.mrf.mxu0
      %v1818 = vadd.f32 0.0, %v1817
      %v1819 = vpop.f32.mrf.mxu0
      %v1820 = vadd.f32 0.0, %v1819
      %1821 = vmatprep.mubr.f32.mxu0 0.0
      %1822 = vmatmul.mubr.f32.gmra.mxu0 %v1692
      %v1823 = vpop.f32.mrf.mxu0
      %v1824 = vadd.f32 0.0, %v1823
      %v1825 = vpop.f32.mrf.mxu0
      %v1826 = vadd.f32 0.0, %v1825
      %1827 = vmatprep.mubr.f32.mxu0 0.0
      %1828 = vmatmul.mubr.f32.gmra.mxu0 %v1695
      %v1829 = vpop.f32.mrf.mxu0
      %v1830 = vadd.f32 0.0, %v1829
      %v1831 = vpop.f32.mrf.mxu0
      %v1832 = vadd.f32 0.0, %v1831
      %1833 = vmatprep.mubr.f32.mxu0 0.0
      %1834 = vmatmul.mubr.f32.gmra.mxu0 %v1698
      %v1835 = vpop.f32.mrf.mxu0
      %v1836 = vadd.f32 0.0, %v1835
      %v1837 = vpop.f32.mrf.mxu0
      %v1838 = vadd.f32 0.0, %v1837
      %1839 = vmatprep.mubr.f32.mxu0 0.0
      %1840 = vmatmul.mubr.f32.gmra.mxu0 %v1701
      %v1841 = vpop.f32.mrf.mxu0
      %v1842 = vadd.f32 0.0, %v1841
      %v1843 = vpop.f32.mrf.mxu0
      %v1844 = vadd.f32 0.0, %v1843
      %1845 = vmatprep.mubr.f32.mxu0 0.0
      %1846 = vmatmul.mubr.f32.gmra.mxu0 %v1704
      %v1847 = vpop.f32.mrf.mxu0
      %v1848 = vadd.f32 0.0, %v1847
      %v1849 = vpop.f32.mrf.mxu0
      %v1850 = vadd.f32 0.0, %v1849
      %1851 = vmatprep.mubr.f32.mxu0 0.0
      %1852 = vmatmul.mubr.f32.gmra.mxu0 %v1707
      %v1853 = vpop.f32.mrf.mxu0
      %v1854 = vadd.f32 0.0, %v1853
      %v1855 = vpop.f32.mrf.mxu0
      %v1856 = vadd.f32 0.0, %v1855
      %1857 = vmatprep.mubr.f32.mxu0 0.0
      %1858 = vmatmul.mubr.f32.gmra.mxu0 %v1710
      %v1859 = vpop.f32.mrf.mxu0
      %v1860 = vadd.f32 0.0, %v1859
      %v1861 = vpop.f32.mrf.mxu0
      %v1862 = vadd.f32 0.0, %v1861
      %1863 = vmatprep.mubr.f32.mxu0 0.0
      %1864 = vmatmul.mubr.f32.gmra.mxu0 %v1713
      %v1865 = vpop.f32.mrf.mxu0
      %v1866 = vadd.f32 0.0, %v1865
      %v1867 = vpop.f32.mrf.mxu0
      %v1868 = vadd.f32 0.0, %v1867
      %1869 = vmatprep.mubr.f32.mxu0 0.0
      %1870 = vmatmul.mubr.f32.gmra.mxu0 %v1716
      %v1871 = vpop.f32.mrf.mxu0
      %v1872 = vadd.f32 0.0, %v1871
      %v1873 = vpop.f32.mrf.mxu0
      %v1874 = vadd.f32 0.0, %v1873
      %1875 = vmatprep.mubr.f32.mxu0 0.0
      %1876 = vmatmul.mubr.f32.gmra.mxu0 %v1719
      %v1877 = vpop.f32.mrf.mxu0
      %v1878 = vadd.f32 0.0, %v1877
      %v1879 = vpop.f32.mrf.mxu0
      %v1880 = vadd.f32 0.0, %v1879
      %1881 = vdwg.mxu0
      %v1882 = vadd.f32 %v1589, %v1788
      %v1883 = vadd.f32 %v1590, %v1790
      %v1884 = vadd.f32 %v1591, %v1794
      %v1885 = vadd.f32 %v1592, %v1796
      %v1886 = vadd.f32 %v1593, %v1800
      %v1887 = vadd.f32 %v1594, %v1802
      %v1888 = vadd.f32 %v1595, %v1806
      %v1889 = vadd.f32 %v1596, %v1808
      %v1890 = vadd.f32 %v1597, %v1812
      %v1891 = vadd.f32 %v1598, %v1814
      %v1892 = vadd.f32 %v1599, %v1818
      %v1893 = vadd.f32 %v1600, %v1820
      %v1894 = vadd.f32 %v1601, %v1824
      %v1895 = vadd.f32 %v1602, %v1826
      %v1896 = vadd.f32 %v1603, %v1830
      %v1897 = vadd.f32 %v1604, %v1832
      %v1898 = vadd.f32 %v1605, %v1836
      %v1899 = vadd.f32 %v1606, %v1838
      %v1900 = vadd.f32 %v1607, %v1842
      %v1901 = vadd.f32 %v1608, %v1844
      %v1902 = vadd.f32 %v1609, %v1848
      %v1903 = vadd.f32 %v1610, %v1850
      %v1904 = vadd.f32 %v1611, %v1854
      %v1905 = vadd.f32 %v1612, %v1856
      %v1906 = vadd.f32 %v1613, %v1860
      %v1907 = vadd.f32 %v1614, %v1862
      %v1908 = vadd.f32 %v1615, %v1866
      %v1909 = vadd.f32 %v1616, %v1868
      %v1910 = vadd.f32 %v1617, %v1872
      %v1911 = vadd.f32 %v1618, %v1874
      %v1912 = vadd.f32 %v1619, %v1878
      %v1913 = vadd.f32 %v1620, %v1880
      %v1914 = vlaneseq
      %v1915 = vshrl.u32 %v1914, 7
      %v1916 = vsub.s32 5, %v1915
      %v1917 = vrot.slane %v345, %v1916
      %v1918 = vlaneseq
      %v1919 = vshrl.u32 %v1918, 7
      %v1920 = vsub.s32 5, %v1919
      %v1921 = vrot.slane %v346, %v1920
      %1924 = vrot.lane.b32.xlu0 %v1917, 18
      %v1925 = vpop.permute.xlu0 %1924
      %1926 = vrot.lane.b32.xlu0 %v1921, 18
      %v1927 = vpop.permute.xlu0 %1926
      %vm1928 = vcmask 146432
      %v1929 = vsel %vm1928, %v1925, %v1927
      %v1933 = vmul.f32 %v736, %v1925
      %v1934 = vmul.f32 %v737, %v1929
      %v1935 = vmul.f32 %v738, %v1927
      %s1936 = scalar_lea.vmem %s3, 640
      %v1937 = vld [vmem:[%s1936] sm:$0xff]
      %v1938 = vld [vmem:[%s1936 + $0x8] sm:$0xff]
      %v1939 = vld [vmem:[%s1936 + $0x10] sm:$0xff]
      %v1940 = vld [vmem:[%s1936 + $0x18] sm:$0xff]
      %v1941 = vld [vmem:[%s1936 + $0x20] sm:$0xff]
      %v1942 = vld [vmem:[%s1936 + $0x28] sm:$0xff]
      %v1943 = vld [vmem:[%s1936 + $0x30] sm:$0xff]
      %v1944 = vld [vmem:[%s1936 + $0x38] sm:$0xff]
      %v1945 = vld [vmem:[%s1936 + $0x40] sm:$0xff]
      %v1946 = vld [vmem:[%s1936 + $0x48] sm:$0xff]
      %v1947 = vld [vmem:[%s1936 + $0x50] sm:$0xff]
      %v1948 = vld [vmem:[%s1936 + $0x58] sm:$0xff]
      %v1949 = vld [vmem:[%s1936 + $0x60] sm:$0xff]
      %v1950 = vld [vmem:[%s1936 + $0x68] sm:$0xff]
      %v1951 = vld [vmem:[%s1936 + $0x70] sm:$0xff]
      %v1952 = vld [vmem:[%s1936 + $0x78] sm:$0xff]
      %1956 = vrot.lane.b32.xlu0 %v1933, 110
      %v1957 = vpop.permute.xlu0 %1956
      %1958 = vrot.lane.b32.xlu0 %v1934, 110
      %v1959 = vpop.permute.xlu0 %1958
      %1960 = vrot.lane.b32.xlu0 %v1935, 110
      %v1961 = vpop.permute.xlu0 %1960
      %vm1962 = vcmask 900096
      %v1963 = vsel %vm1962, %v1957, %v1959
      %v1964 = vsel %vm1962, %v1959, %v1961
      %v1968 = vsel %vm494, %v1937, 0
      %v1971 = vsel %vm494, %v1938, 0
      %v1974 = vsel %vm494, %v1939, 0
      %v1977 = vsel %vm494, %v1940, 0
      %v1980 = vsel %vm494, %v1941, 0
      %v1983 = vsel %vm494, %v1942, 0
      %v1986 = vsel %vm494, %v1943, 0
      %v1989 = vsel %vm494, %v1944, 0
      %v1992 = vsel %vm494, %v1945, 0
      %v1995 = vsel %vm494, %v1946, 0
      %v1998 = vsel %vm494, %v1947, 0
      %v2001 = vsel %vm494, %v1948, 0
      %v2004 = vsel %vm494, %v1949, 0
      %v2007 = vsel %vm494, %v1950, 0
      %v2010 = vsel %vm494, %v1951, 0
      %v2013 = vsel %vm494, %v1952, 0
      %2015 = vmatprep.subr.mxu0 0.0
      %2016 = vmatpush1.msra.mxu0 0.0
      %2017 = vmatprep.subr.mxu0 0.0
      %2018 = vmatpush1.msra.mxu0 0.0
      %2019 = vmatprep.subr.mxu0 0.0
      %2020 = vmatpush1.msra.mxu0 0.0
      %2021 = vmatprep.subr.mxu0 0.0
      %2022 = vmatpush1.msra.mxu0 0.0
      %2023 = vmatprep.subr.mxu0 0.0
      %2024 = vmatpush1.msra.mxu0 0.0
      %2025 = vmatprep.subr.mxu0 0.0
      %2026 = vmatpush1.msra.mxu0 0.0
      %2027 = vmatprep.subr.mxu0 0.0
      %2028 = vmatpush1.msra.mxu0 0.0
      %2029 = vmatprep.subr.mxu0 0.0
      %2030 = vmatpush1.msra.mxu0 0.0
      %2031 = vmatprep.subr.mxu0 0.0
      %2032 = vmatpush1.msra.mxu0 0.0
      %2033 = vmatprep.subr.mxu0 0.0
      %2034 = vmatpush1.msra.mxu0 0.0
      %2035 = vmatprep.subr.mxu0 0.0
      %2036 = vmatpush1.msra.mxu0 0.0
      %2037 = vmatprep.subr.mxu0 0.0
      %2038 = vmatpush1.msra.mxu0 0.0
      %2039 = vmatprep.subr.mxu0 0.0
      %2040 = vmatpush1.msra.mxu0 0.0
      %2041 = vmatprep.subr.mxu0 0.0
      %2042 = vmatpush1.msra.mxu0 0.0
      %2043 = vmatprep.subr.mxu0 0.0
      %2044 = vmatpush1.msra.mxu0 0.0
      %2045 = vmatprep.subr.mxu0 %v1964
      %2046 = vmatpush1.msra.mxu0 %v1963
      %2047 = vmatprep.subr.mxu0 0.0
      %2048 = vmatpush2.msra.mxu0 0.0
      %2049 = vmatprep.subr.mxu0 0.0
      %2050 = vmatpush2.msra.mxu0 0.0
      %2051 = vmatprep.subr.mxu0 0.0
      %2052 = vmatpush2.msra.mxu0 0.0
      %2053 = vmatprep.subr.mxu0 0.0
      %2054 = vmatpush2.msra.mxu0 0.0
      %2055 = vmatprep.subr.mxu0 0.0
      %2056 = vmatpush2.msra.mxu0 0.0
      %2057 = vmatprep.subr.mxu0 0.0
      %2058 = vmatpush2.msra.mxu0 0.0
      %2059 = vmatprep.subr.mxu0 0.0
      %2060 = vmatpush2.msra.mxu0 0.0
      %2061 = vmatprep.subr.mxu0 0.0
      %2062 = vmatpush2.msra.mxu0 0.0
      %2063 = vmatprep.subr.mxu0 0.0
      %2064 = vmatpush2.msra.mxu0 0.0
      %2065 = vmatprep.subr.mxu0 0.0
      %2066 = vmatpush2.msra.mxu0 0.0
      %2067 = vmatprep.subr.mxu0 0.0
      %2068 = vmatpush2.msra.mxu0 0.0
      %2069 = vmatprep.subr.mxu0 0.0
      %2070 = vmatpush2.msra.mxu0 0.0
      %2071 = vmatprep.subr.mxu0 0.0
      %2072 = vmatpush2.msra.mxu0 0.0
      %2073 = vmatprep.subr.mxu0 0.0
      %2074 = vmatpush2.msra.mxu0 0.0
      %2075 = vmatprep.subr.mxu0 0.0
      %2076 = vmatpush2.msra.mxu0 0.0
      %2077 = vmatprep.subr.mxu0 0.0
      %2078 = vmatpush2.msra.mxu0 0.0
      %2079 = vmatprep.mubr.f32.mxu0 0.0
      %2080 = vmatmul.mubr.f32.gmra.mxu0 %v1968
      %v2081 = vpop.f32.mrf.mxu0
      %v2082 = vadd.f32 0.0, %v2081
      %v2083 = vpop.f32.mrf.mxu0
      %v2084 = vadd.f32 0.0, %v2083
      %2085 = vmatprep.mubr.f32.mxu0 0.0
      %2086 = vmatmul.mubr.f32.gmra.mxu0 %v1971
      %v2087 = vpop.f32.mrf.mxu0
      %v2088 = vadd.f32 0.0, %v2087
      %v2089 = vpop.f32.mrf.mxu0
      %v2090 = vadd.f32 0.0, %v2089
      %2091 = vmatprep.mubr.f32.mxu0 0.0
      %2092 = vmatmul.mubr.f32.gmra.mxu0 %v1974
      %v2093 = vpop.f32.mrf.mxu0
      %v2094 = vadd.f32 0.0, %v2093
      %v2095 = vpop.f32.mrf.mxu0
      %v2096 = vadd.f32 0.0, %v2095
      %2097 = vmatprep.mubr.f32.mxu0 0.0
      %2098 = vmatmul.mubr.f32.gmra.mxu0 %v1977
      %v2099 = vpop.f32.mrf.mxu0
      %v2100 = vadd.f32 0.0, %v2099
      %v2101 = vpop.f32.mrf.mxu0
      %v2102 = vadd.f32 0.0, %v2101
      %2103 = vmatprep.mubr.f32.mxu0 0.0
      %2104 = vmatmul.mubr.f32.gmra.mxu0 %v1980
      %v2105 = vpop.f32.mrf.mxu0
      %v2106 = vadd.f32 0.0, %v2105
      %v2107 = vpop.f32.mrf.mxu0
      %v2108 = vadd.f32 0.0, %v2107
      %2109 = vmatprep.mubr.f32.mxu0 0.0
      %2110 = vmatmul.mubr.f32.gmra.mxu0 %v1983
      %v2111 = vpop.f32.mrf.mxu0
      %v2112 = vadd.f32 0.0, %v2111
      %v2113 = vpop.f32.mrf.mxu0
      %v2114 = vadd.f32 0.0, %v2113
      %2115 = vmatprep.mubr.f32.mxu0 0.0
      %2116 = vmatmul.mubr.f32.gmra.mxu0 %v1986
      %v2117 = vpop.f32.mrf.mxu0
      %v2118 = vadd.f32 0.0, %v2117
      %v2119 = vpop.f32.mrf.mxu0
      %v2120 = vadd.f32 0.0, %v2119
      %2121 = vmatprep.mubr.f32.mxu0 0.0
      %2122 = vmatmul.mubr.f32.gmra.mxu0 %v1989
      %v2123 = vpop.f32.mrf.mxu0
      %v2124 = vadd.f32 0.0, %v2123
      %v2125 = vpop.f32.mrf.mxu0
      %v2126 = vadd.f32 0.0, %v2125
      %2127 = vmatprep.mubr.f32.mxu0 0.0
      %2128 = vmatmul.mubr.f32.gmra.mxu0 %v1992
      %v2129 = vpop.f32.mrf.mxu0
      %v2130 = vadd.f32 0.0, %v2129
      %v2131 = vpop.f32.mrf.mxu0
      %v2132 = vadd.f32 0.0, %v2131
      %2133 = vmatprep.mubr.f32.mxu0 0.0
      %2134 = vmatmul.mubr.f32.gmra.mxu0 %v1995
      %v2135 = vpop.f32.mrf.mxu0
      %v2136 = vadd.f32 0.0, %v2135
      %v2137 = vpop.f32.mrf.mxu0
      %v2138 = vadd.f32 0.0, %v2137
      %2139 = vmatprep.mubr.f32.mxu0 0.0
      %2140 = vmatmul.mubr.f32.gmra.mxu0 %v1998
      %v2141 = vpop.f32.mrf.mxu0
      %v2142 = vadd.f32 0.0, %v2141
      %v2143 = vpop.f32.mrf.mxu0
      %v2144 = vadd.f32 0.0, %v2143
      %2145 = vmatprep.mubr.f32.mxu0 0.0
      %2146 = vmatmul.mubr.f32.gmra.mxu0 %v2001
      %v2147 = vpop.f32.mrf.mxu0
      %v2148 = vadd.f32 0.0, %v2147
      %v2149 = vpop.f32.mrf.mxu0
      %v2150 = vadd.f32 0.0, %v2149
      %2151 = vmatprep.mubr.f32.mxu0 0.0
      %2152 = vmatmul.mubr.f32.gmra.mxu0 %v2004
      %v2153 = vpop.f32.mrf.mxu0
      %v2154 = vadd.f32 0.0, %v2153
      %v2155 = vpop.f32.mrf.mxu0
      %v2156 = vadd.f32 0.0, %v2155
      %2157 = vmatprep.mubr.f32.mxu0 0.0
      %2158 = vmatmul.mubr.f32.gmra.mxu0 %v2007
      %v2159 = vpop.f32.mrf.mxu0
      %v2160 = vadd.f32 0.0, %v2159
      %v2161 = vpop.f32.mrf.mxu0
      %v2162 = vadd.f32 0.0, %v2161
      %2163 = vmatprep.mubr.f32.mxu0 0.0
      %2164 = vmatmul.mubr.f32.gmra.mxu0 %v2010
      %v2165 = vpop.f32.mrf.mxu0
      %v2166 = vadd.f32 0.0, %v2165
      %v2167 = vpop.f32.mrf.mxu0
      %v2168 = vadd.f32 0.0, %v2167
      %2169 = vmatprep.mubr.f32.mxu0 0.0
      %2170 = vmatmul.mubr.f32.gmra.mxu0 %v2013
      %v2171 = vpop.f32.mrf.mxu0
      %v2172 = vadd.f32 0.0, %v2171
      %v2173 = vpop.f32.mrf.mxu0
      %v2174 = vadd.f32 0.0, %v2173
      %2175 = vdwg.mxu0
      %v2176 = vadd.f32 %v1882, %v2082
      %v2177 = vadd.f32 %v1883, %v2084
      %v2178 = vadd.f32 %v1884, %v2088
      %v2179 = vadd.f32 %v1885, %v2090
      %v2180 = vadd.f32 %v1886, %v2094
      %v2181 = vadd.f32 %v1887, %v2096
      %v2182 = vadd.f32 %v1888, %v2100
      %v2183 = vadd.f32 %v1889, %v2102
      %v2184 = vadd.f32 %v1890, %v2106
      %v2185 = vadd.f32 %v1891, %v2108
      %v2186 = vadd.f32 %v1892, %v2112
      %v2187 = vadd.f32 %v1893, %v2114
      %v2188 = vadd.f32 %v1894, %v2118
      %v2189 = vadd.f32 %v1895, %v2120
      %v2190 = vadd.f32 %v1896, %v2124
      %v2191 = vadd.f32 %v1897, %v2126
      %v2192 = vadd.f32 %v1898, %v2130
      %v2193 = vadd.f32 %v1899, %v2132
      %v2194 = vadd.f32 %v1900, %v2136
      %v2195 = vadd.f32 %v1901, %v2138
      %v2196 = vadd.f32 %v1902, %v2142
      %v2197 = vadd.f32 %v1903, %v2144
      %v2198 = vadd.f32 %v1904, %v2148
      %v2199 = vadd.f32 %v1905, %v2150
      %v2200 = vadd.f32 %v1906, %v2154
      %v2201 = vadd.f32 %v1907, %v2156
      %v2202 = vadd.f32 %v1908, %v2160
      %v2203 = vadd.f32 %v1909, %v2162
      %v2204 = vadd.f32 %v1910, %v2166
      %v2205 = vadd.f32 %v1911, %v2168
      %v2206 = vadd.f32 %v1912, %v2172
      %v2207 = vadd.f32 %v1913, %v2174
      %v2208 = vlaneseq
      %v2209 = vshrl.u32 %v2208, 7
      %v2210 = vsub.s32 6, %v2209
      %v2211 = vrot.slane %v345, %v2210
      %v2212 = vlaneseq
      %v2213 = vshrl.u32 %v2212, 7
      %v2214 = vsub.s32 6, %v2213
      %v2215 = vrot.slane %v346, %v2214
      %2218 = vrot.lane.b32.xlu0 %v2211, 32
      %v2219 = vpop.permute.xlu0 %2218
      %2220 = vrot.lane.b32.xlu0 %v2215, 32
      %v2221 = vpop.permute.xlu0 %2220
      %vm2222 = vcmask 261120
      %v2223 = vsel %vm2222, %v2219, %v2221
      %v2227 = vmul.f32 %v736, %v2219
      %v2228 = vmul.f32 %v737, %v2223
      %v2229 = vmul.f32 %v738, %v2221
      %s2230 = scalar_lea.vmem %s3, 768
      %v2231 = vld [vmem:[%s2230] sm:$0xff]
      %v2232 = vld [vmem:[%s2230 + $0x8] sm:$0xff]
      %v2233 = vld [vmem:[%s2230 + $0x10] sm:$0xff]
      %v2234 = vld [vmem:[%s2230 + $0x18] sm:$0xff]
      %v2235 = vld [vmem:[%s2230 + $0x20] sm:$0xff]
      %v2236 = vld [vmem:[%s2230 + $0x28] sm:$0xff]
      %v2237 = vld [vmem:[%s2230 + $0x30] sm:$0xff]
      %v2238 = vld [vmem:[%s2230 + $0x38] sm:$0xff]
      %v2239 = vld [vmem:[%s2230 + $0x40] sm:$0xff]
      %v2240 = vld [vmem:[%s2230 + $0x48] sm:$0xff]
      %v2241 = vld [vmem:[%s2230 + $0x50] sm:$0xff]
      %v2242 = vld [vmem:[%s2230 + $0x58] sm:$0xff]
      %v2243 = vld [vmem:[%s2230 + $0x60] sm:$0xff]
      %v2244 = vld [vmem:[%s2230 + $0x68] sm:$0xff]
      %v2245 = vld [vmem:[%s2230 + $0x70] sm:$0xff]
      %v2246 = vld [vmem:[%s2230 + $0x78] sm:$0xff]
      %2250 = vrot.lane.b32.xlu0 %v2227, 96
      %v2251 = vpop.permute.xlu0 %2250
      %2252 = vrot.lane.b32.xlu0 %v2228, 96
      %v2253 = vpop.permute.xlu0 %2252
      %2254 = vrot.lane.b32.xlu0 %v2229, 96
      %v2255 = vpop.permute.xlu0 %2254
      %vm2256 = vcmask 785408
      %v2257 = vsel %vm2256, %v2251, %v2253
      %v2258 = vsel %vm2256, %v2253, %v2255
      %v2262 = vsel %vm494, %v2231, 0
      %v2265 = vsel %vm494, %v2232, 0
      %v2268 = vsel %vm494, %v2233, 0
      %v2271 = vsel %vm494, %v2234, 0
      %v2274 = vsel %vm494, %v2235, 0
      %v2277 = vsel %vm494, %v2236, 0
      %v2280 = vsel %vm494, %v2237, 0
      %v2283 = vsel %vm494, %v2238, 0
      %v2286 = vsel %vm494, %v2239, 0
      %v2289 = vsel %vm494, %v2240, 0
      %v2292 = vsel %vm494, %v2241, 0
      %v2295 = vsel %vm494, %v2242, 0
      %v2298 = vsel %vm494, %v2243, 0
      %v2301 = vsel %vm494, %v2244, 0
      %v2304 = vsel %vm494, %v2245, 0
      %v2307 = vsel %vm494, %v2246, 0
      %2309 = vmatprep.subr.mxu0 0.0
      %2310 = vmatpush1.msra.mxu0 0.0
      %2311 = vmatprep.subr.mxu0 0.0
      %2312 = vmatpush1.msra.mxu0 0.0
      %2313 = vmatprep.subr.mxu0 0.0
      %2314 = vmatpush1.msra.mxu0 0.0
      %2315 = vmatprep.subr.mxu0 0.0
      %2316 = vmatpush1.msra.mxu0 0.0
      %2317 = vmatprep.subr.mxu0 0.0
      %2318 = vmatpush1.msra.mxu0 0.0
      %2319 = vmatprep.subr.mxu0 0.0
      %2320 = vmatpush1.msra.mxu0 0.0
      %2321 = vmatprep.subr.mxu0 0.0
      %2322 = vmatpush1.msra.mxu0 0.0
      %2323 = vmatprep.subr.mxu0 0.0
      %2324 = vmatpush1.msra.mxu0 0.0
      %2325 = vmatprep.subr.mxu0 0.0
      %2326 = vmatpush1.msra.mxu0 0.0
      %2327 = vmatprep.subr.mxu0 0.0
      %2328 = vmatpush1.msra.mxu0 0.0
      %2329 = vmatprep.subr.mxu0 0.0
      %2330 = vmatpush1.msra.mxu0 0.0
      %2331 = vmatprep.subr.mxu0 0.0
      %2332 = vmatpush1.msra.mxu0 0.0
      %2333 = vmatprep.subr.mxu0 0.0
      %2334 = vmatpush1.msra.mxu0 0.0
      %2335 = vmatprep.subr.mxu0 0.0
      %2336 = vmatpush1.msra.mxu0 0.0
      %2337 = vmatprep.subr.mxu0 0.0
      %2338 = vmatpush1.msra.mxu0 0.0
      %2339 = vmatprep.subr.mxu0 %v2258
      %2340 = vmatpush1.msra.mxu0 %v2257
      %2341 = vmatprep.subr.mxu0 0.0
      %2342 = vmatpush2.msra.mxu0 0.0
      %2343 = vmatprep.subr.mxu0 0.0
      %2344 = vmatpush2.msra.mxu0 0.0
      %2345 = vmatprep.subr.mxu0 0.0
      %2346 = vmatpush2.msra.mxu0 0.0
      %2347 = vmatprep.subr.mxu0 0.0
      %2348 = vmatpush2.msra.mxu0 0.0
      %2349 = vmatprep.subr.mxu0 0.0
      %2350 = vmatpush2.msra.mxu0 0.0
      %2351 = vmatprep.subr.mxu0 0.0
      %2352 = vmatpush2.msra.mxu0 0.0
      %2353 = vmatprep.subr.mxu0 0.0
      %2354 = vmatpush2.msra.mxu0 0.0
      %2355 = vmatprep.subr.mxu0 0.0
      %2356 = vmatpush2.msra.mxu0 0.0
      %2357 = vmatprep.subr.mxu0 0.0
      %2358 = vmatpush2.msra.mxu0 0.0
      %2359 = vmatprep.subr.mxu0 0.0
      %2360 = vmatpush2.msra.mxu0 0.0
      %2361 = vmatprep.subr.mxu0 0.0
      %2362 = vmatpush2.msra.mxu0 0.0
      %2363 = vmatprep.subr.mxu0 0.0
      %2364 = vmatpush2.msra.mxu0 0.0
      %2365 = vmatprep.subr.mxu0 0.0
      %2366 = vmatpush2.msra.mxu0 0.0
      %2367 = vmatprep.subr.mxu0 0.0
      %2368 = vmatpush2.msra.mxu0 0.0
      %2369 = vmatprep.subr.mxu0 0.0
      %2370 = vmatpush2.msra.mxu0 0.0
      %2371 = vmatprep.subr.mxu0 0.0
      %2372 = vmatpush2.msra.mxu0 0.0
      %2373 = vmatprep.mubr.f32.mxu0 0.0
      %2374 = vmatmul.mubr.f32.gmra.mxu0 %v2262
      %v2375 = vpop.f32.mrf.mxu0
      %v2376 = vadd.f32 0.0, %v2375
      %v2377 = vpop.f32.mrf.mxu0
      %v2378 = vadd.f32 0.0, %v2377
      %2379 = vmatprep.mubr.f32.mxu0 0.0
      %2380 = vmatmul.mubr.f32.gmra.mxu0 %v2265
      %v2381 = vpop.f32.mrf.mxu0
      %v2382 = vadd.f32 0.0, %v2381
      %v2383 = vpop.f32.mrf.mxu0
      %v2384 = vadd.f32 0.0, %v2383
      %2385 = vmatprep.mubr.f32.mxu0 0.0
      %2386 = vmatmul.mubr.f32.gmra.mxu0 %v2268
      %v2387 = vpop.f32.mrf.mxu0
      %v2388 = vadd.f32 0.0, %v2387
      %v2389 = vpop.f32.mrf.mxu0
      %v2390 = vadd.f32 0.0, %v2389
      %2391 = vmatprep.mubr.f32.mxu0 0.0
      %2392 = vmatmul.mubr.f32.gmra.mxu0 %v2271
      %v2393 = vpop.f32.mrf.mxu0
      %v2394 = vadd.f32 0.0, %v2393
      %v2395 = vpop.f32.mrf.mxu0
      %v2396 = vadd.f32 0.0, %v2395
      %2397 = vmatprep.mubr.f32.mxu0 0.0
      %2398 = vmatmul.mubr.f32.gmra.mxu0 %v2274
      %v2399 = vpop.f32.mrf.mxu0
      %v2400 = vadd.f32 0.0, %v2399
      %v2401 = vpop.f32.mrf.mxu0
      %v2402 = vadd.f32 0.0, %v2401
      %2403 = vmatprep.mubr.f32.mxu0 0.0
      %2404 = vmatmul.mubr.f32.gmra.mxu0 %v2277
      %v2405 = vpop.f32.mrf.mxu0
      %v2406 = vadd.f32 0.0, %v2405
      %v2407 = vpop.f32.mrf.mxu0
      %v2408 = vadd.f32 0.0, %v2407
      %2409 = vmatprep.mubr.f32.mxu0 0.0
      %2410 = vmatmul.mubr.f32.gmra.mxu0 %v2280
      %v2411 = vpop.f32.mrf.mxu0
      %v2412 = vadd.f32 0.0, %v2411
      %v2413 = vpop.f32.mrf.mxu0
      %v2414 = vadd.f32 0.0, %v2413
      %2415 = vmatprep.mubr.f32.mxu0 0.0
      %2416 = vmatmul.mubr.f32.gmra.mxu0 %v2283
      %v2417 = vpop.f32.mrf.mxu0
      %v2418 = vadd.f32 0.0, %v2417
      %v2419 = vpop.f32.mrf.mxu0
      %v2420 = vadd.f32 0.0, %v2419
      %2421 = vmatprep.mubr.f32.mxu0 0.0
      %2422 = vmatmul.mubr.f32.gmra.mxu0 %v2286
      %v2423 = vpop.f32.mrf.mxu0
      %v2424 = vadd.f32 0.0, %v2423
      %v2425 = vpop.f32.mrf.mxu0
      %v2426 = vadd.f32 0.0, %v2425
      %2427 = vmatprep.mubr.f32.mxu0 0.0
      %2428 = vmatmul.mubr.f32.gmra.mxu0 %v2289
      %v2429 = vpop.f32.mrf.mxu0
      %v2430 = vadd.f32 0.0, %v2429
      %v2431 = vpop.f32.mrf.mxu0
      %v2432 = vadd.f32 0.0, %v2431
      %2433 = vmatprep.mubr.f32.mxu0 0.0
      %2434 = vmatmul.mubr.f32.gmra.mxu0 %v2292
      %v2435 = vpop.f32.mrf.mxu0
      %v2436 = vadd.f32 0.0, %v2435
      %v2437 = vpop.f32.mrf.mxu0
      %v2438 = vadd.f32 0.0, %v2437
      %2439 = vmatprep.mubr.f32.mxu0 0.0
      %2440 = vmatmul.mubr.f32.gmra.mxu0 %v2295
      %v2441 = vpop.f32.mrf.mxu0
      %v2442 = vadd.f32 0.0, %v2441
      %v2443 = vpop.f32.mrf.mxu0
      %v2444 = vadd.f32 0.0, %v2443
      %2445 = vmatprep.mubr.f32.mxu0 0.0
      %2446 = vmatmul.mubr.f32.gmra.mxu0 %v2298
      %v2447 = vpop.f32.mrf.mxu0
      %v2448 = vadd.f32 0.0, %v2447
      %v2449 = vpop.f32.mrf.mxu0
      %v2450 = vadd.f32 0.0, %v2449
      %2451 = vmatprep.mubr.f32.mxu0 0.0
      %2452 = vmatmul.mubr.f32.gmra.mxu0 %v2301
      %v2453 = vpop.f32.mrf.mxu0
      %v2454 = vadd.f32 0.0, %v2453
      %v2455 = vpop.f32.mrf.mxu0
      %v2456 = vadd.f32 0.0, %v2455
      %2457 = vmatprep.mubr.f32.mxu0 0.0
      %2458 = vmatmul.mubr.f32.gmra.mxu0 %v2304
      %v2459 = vpop.f32.mrf.mxu0
      %v2460 = vadd.f32 0.0, %v2459
      %v2461 = vpop.f32.mrf.mxu0
      %v2462 = vadd.f32 0.0, %v2461
      %2463 = vmatprep.mubr.f32.mxu0 0.0
      %2464 = vmatmul.mubr.f32.gmra.mxu0 %v2307
      %v2465 = vpop.f32.mrf.mxu0
      %v2466 = vadd.f32 0.0, %v2465
      %v2467 = vpop.f32.mrf.mxu0
      %v2468 = vadd.f32 0.0, %v2467
      %2469 = vdwg.mxu0
      %v2470 = vadd.f32 %v2176, %v2376
      %v2471 = vadd.f32 %v2177, %v2378
      %v2472 = vadd.f32 %v2178, %v2382
      %v2473 = vadd.f32 %v2179, %v2384
      %v2474 = vadd.f32 %v2180, %v2388
      %v2475 = vadd.f32 %v2181, %v2390
      %v2476 = vadd.f32 %v2182, %v2394
      %v2477 = vadd.f32 %v2183, %v2396
      %v2478 = vadd.f32 %v2184, %v2400
      %v2479 = vadd.f32 %v2185, %v2402
      %v2480 = vadd.f32 %v2186, %v2406
      %v2481 = vadd.f32 %v2187, %v2408
      %v2482 = vadd.f32 %v2188, %v2412
      %v2483 = vadd.f32 %v2189, %v2414
      %v2484 = vadd.f32 %v2190, %v2418
      %v2485 = vadd.f32 %v2191, %v2420
      %v2486 = vadd.f32 %v2192, %v2424
      %v2487 = vadd.f32 %v2193, %v2426
      %v2488 = vadd.f32 %v2194, %v2430
      %v2489 = vadd.f32 %v2195, %v2432
      %v2490 = vadd.f32 %v2196, %v2436
      %v2491 = vadd.f32 %v2197, %v2438
      %v2492 = vadd.f32 %v2198, %v2442
      %v2493 = vadd.f32 %v2199, %v2444
      %v2494 = vadd.f32 %v2200, %v2448
      %v2495 = vadd.f32 %v2201, %v2450
      %v2496 = vadd.f32 %v2202, %v2454
      %v2497 = vadd.f32 %v2203, %v2456
      %v2498 = vadd.f32 %v2204, %v2460
      %v2499 = vadd.f32 %v2205, %v2462
      %v2500 = vadd.f32 %v2206, %v2466
      %v2501 = vadd.f32 %v2207, %v2468
      %v2502 = vlaneseq
      %v2503 = vshrl.u32 %v2502, 7
      %v2504 = vsub.s32 7, %v2503
      %v2505 = vrot.slane %v345, %v2504
      %v2506 = vlaneseq
      %v2507 = vshrl.u32 %v2506, 7
      %v2508 = vsub.s32 7, %v2507
      %v2509 = vrot.slane %v346, %v2508
      %2512 = vrot.lane.b32.xlu0 %v2505, 33
      %v2513 = vpop.permute.xlu0 %2512
      %2514 = vrot.lane.b32.xlu0 %v2509, 33
      %v2515 = vpop.permute.xlu0 %2514
      %vm2516 = vcmask 269312
      %v2517 = vsel %vm2516, %v2513, %v2515
      %v2521 = vmul.f32 %v736, %v2513
      %v2522 = vmul.f32 %v737, %v2517
      %v2523 = vmul.f32 %v738, %v2515
      %s2524 = scalar_lea.vmem %s3, 896
      %v2525 = vld [vmem:[%s2524] sm:$0xff]
      %v2526 = vld [vmem:[%s2524 + $0x8] sm:$0xff]
      %v2527 = vld [vmem:[%s2524 + $0x10] sm:$0xff]
      %v2528 = vld [vmem:[%s2524 + $0x18] sm:$0xff]
      %v2529 = vld [vmem:[%s2524 + $0x20] sm:$0xff]
      %v2530 = vld [vmem:[%s2524 + $0x28] sm:$0xff]
      %v2531 = vld [vmem:[%s2524 + $0x30] sm:$0xff]
      %v2532 = vld [vmem:[%s2524 + $0x38] sm:$0xff]
      %v2533 = vld [vmem:[%s2524 + $0x40] sm:$0xff]
      %v2534 = vld [vmem:[%s2524 + $0x48] sm:$0xff]
      %v2535 = vld [vmem:[%s2524 + $0x50] sm:$0xff]
      %v2536 = vld [vmem:[%s2524 + $0x58] sm:$0xff]
      %v2537 = vld [vmem:[%s2524 + $0x60] sm:$0xff]
      %v2538 = vld [vmem:[%s2524 + $0x68] sm:$0xff]
      %v2539 = vld [vmem:[%s2524 + $0x70] sm:$0xff]
      %v2540 = vld [vmem:[%s2524 + $0x78] sm:$0xff]
      %2544 = vrot.lane.b32.xlu0 %v2521, 95
      %v2545 = vpop.permute.xlu0 %2544
      %2546 = vrot.lane.b32.xlu0 %v2522, 95
      %v2547 = vpop.permute.xlu0 %2546
      %2548 = vrot.lane.b32.xlu0 %v2523, 95
      %v2549 = vpop.permute.xlu0 %2548
      %vm2550 = vcmask 777216
      %v2551 = vsel %vm2550, %v2545, %v2547
      %v2552 = vsel %vm2550, %v2547, %v2549
      %v2556 = vsel %vm494, %v2525, 0
      %v2559 = vsel %vm494, %v2526, 0
      %v2562 = vsel %vm494, %v2527, 0
      %v2565 = vsel %vm494, %v2528, 0
      %v2568 = vsel %vm494, %v2529, 0
      %v2571 = vsel %vm494, %v2530, 0
      %v2574 = vsel %vm494, %v2531, 0
      %v2577 = vsel %vm494, %v2532, 0
      %v2580 = vsel %vm494, %v2533, 0
      %v2583 = vsel %vm494, %v2534, 0
      %v2586 = vsel %vm494, %v2535, 0
      %v2589 = vsel %vm494, %v2536, 0
      %v2592 = vsel %vm494, %v2537, 0
      %v2595 = vsel %vm494, %v2538, 0
      %v2598 = vsel %vm494, %v2539, 0
      %v2601 = vsel %vm494, %v2540, 0
      %2603 = vmatprep.subr.mxu0 0.0
      %2604 = vmatpush1.msra.mxu0 0.0
      %2605 = vmatprep.subr.mxu0 0.0
      %2606 = vmatpush1.msra.mxu0 0.0
      %2607 = vmatprep.subr.mxu0 0.0
      %2608 = vmatpush1.msra.mxu0 0.0
      %2609 = vmatprep.subr.mxu0 0.0
      %2610 = vmatpush1.msra.mxu0 0.0
      %2611 = vmatprep.subr.mxu0 0.0
      %2612 = vmatpush1.msra.mxu0 0.0
      %2613 = vmatprep.subr.mxu0 0.0
      %2614 = vmatpush1.msra.mxu0 0.0
      %2615 = vmatprep.subr.mxu0 0.0
      %2616 = vmatpush1.msra.mxu0 0.0
      %2617 = vmatprep.subr.mxu0 0.0
      %2618 = vmatpush1.msra.mxu0 0.0
      %2619 = vmatprep.subr.mxu0 0.0
      %2620 = vmatpush1.msra.mxu0 0.0
      %2621 = vmatprep.subr.mxu0 0.0
      %2622 = vmatpush1.msra.mxu0 0.0
      %2623 = vmatprep.subr.mxu0 0.0
      %2624 = vmatpush1.msra.mxu0 0.0
      %2625 = vmatprep.subr.mxu0 0.0
      %2626 = vmatpush1.msra.mxu0 0.0
      %2627 = vmatprep.subr.mxu0 0.0
      %2628 = vmatpush1.msra.mxu0 0.0
      %2629 = vmatprep.subr.mxu0 0.0
      %2630 = vmatpush1.msra.mxu0 0.0
      %2631 = vmatprep.subr.mxu0 0.0
      %2632 = vmatpush1.msra.mxu0 0.0
      %2633 = vmatprep.subr.mxu0 %v2552
      %2634 = vmatpush1.msra.mxu0 %v2551
      %2635 = vmatprep.subr.mxu0 0.0
      %2636 = vmatpush2.msra.mxu0 0.0
      %2637 = vmatprep.subr.mxu0 0.0
      %2638 = vmatpush2.msra.mxu0 0.0
      %2639 = vmatprep.subr.mxu0 0.0
      %2640 = vmatpush2.msra.mxu0 0.0
      %2641 = vmatprep.subr.mxu0 0.0
      %2642 = vmatpush2.msra.mxu0 0.0
      %2643 = vmatprep.subr.mxu0 0.0
      %2644 = vmatpush2.msra.mxu0 0.0
      %2645 = vmatprep.subr.mxu0 0.0
      %2646 = vmatpush2.msra.mxu0 0.0
      %2647 = vmatprep.subr.mxu0 0.0
      %2648 = vmatpush2.msra.mxu0 0.0
      %2649 = vmatprep.subr.mxu0 0.0
      %2650 = vmatpush2.msra.mxu0 0.0
      %2651 = vmatprep.subr.mxu0 0.0
      %2652 = vmatpush2.msra.mxu0 0.0
      %2653 = vmatprep.subr.mxu0 0.0
      %2654 = vmatpush2.msra.mxu0 0.0
      %2655 = vmatprep.subr.mxu0 0.0
      %2656 = vmatpush2.msra.mxu0 0.0
      %2657 = vmatprep.subr.mxu0 0.0
      %2658 = vmatpush2.msra.mxu0 0.0
      %2659 = vmatprep.subr.mxu0 0.0
      %2660 = vmatpush2.msra.mxu0 0.0
      %2661 = vmatprep.subr.mxu0 0.0
      %2662 = vmatpush2.msra.mxu0 0.0
      %2663 = vmatprep.subr.mxu0 0.0
      %2664 = vmatpush2.msra.mxu0 0.0
      %2665 = vmatprep.subr.mxu0 0.0
      %2666 = vmatpush2.msra.mxu0 0.0
      %2667 = vmatprep.mubr.f32.mxu0 0.0
      %2668 = vmatmul.mubr.f32.gmra.mxu0 %v2556
      %v2669 = vpop.f32.mrf.mxu0
      %v2670 = vadd.f32 0.0, %v2669
      %v2671 = vpop.f32.mrf.mxu0
      %v2672 = vadd.f32 0.0, %v2671
      %2673 = vmatprep.mubr.f32.mxu0 0.0
      %2674 = vmatmul.mubr.f32.gmra.mxu0 %v2559
      %v2675 = vpop.f32.mrf.mxu0
      %v2676 = vadd.f32 0.0, %v2675
      %v2677 = vpop.f32.mrf.mxu0
      %v2678 = vadd.f32 0.0, %v2677
      %2679 = vmatprep.mubr.f32.mxu0 0.0
      %2680 = vmatmul.mubr.f32.gmra.mxu0 %v2562
      %v2681 = vpop.f32.mrf.mxu0
      %v2682 = vadd.f32 0.0, %v2681
      %v2683 = vpop.f32.mrf.mxu0
      %v2684 = vadd.f32 0.0, %v2683
      %2685 = vmatprep.mubr.f32.mxu0 0.0
      %2686 = vmatmul.mubr.f32.gmra.mxu0 %v2565
      %v2687 = vpop.f32.mrf.mxu0
      %v2688 = vadd.f32 0.0, %v2687
      %v2689 = vpop.f32.mrf.mxu0
      %v2690 = vadd.f32 0.0, %v2689
      %2691 = vmatprep.mubr.f32.mxu0 0.0
      %2692 = vmatmul.mubr.f32.gmra.mxu0 %v2568
      %v2693 = vpop.f32.mrf.mxu0
      %v2694 = vadd.f32 0.0, %v2693
      %v2695 = vpop.f32.mrf.mxu0
      %v2696 = vadd.f32 0.0, %v2695
      %2697 = vmatprep.mubr.f32.mxu0 0.0
      %2698 = vmatmul.mubr.f32.gmra.mxu0 %v2571
      %v2699 = vpop.f32.mrf.mxu0
      %v2700 = vadd.f32 0.0, %v2699
      %v2701 = vpop.f32.mrf.mxu0
      %v2702 = vadd.f32 0.0, %v2701
      %2703 = vmatprep.mubr.f32.mxu0 0.0
      %2704 = vmatmul.mubr.f32.gmra.mxu0 %v2574
      %v2705 = vpop.f32.mrf.mxu0
      %v2706 = vadd.f32 0.0, %v2705
      %v2707 = vpop.f32.mrf.mxu0
      %v2708 = vadd.f32 0.0, %v2707
      %2709 = vmatprep.mubr.f32.mxu0 0.0
      %2710 = vmatmul.mubr.f32.gmra.mxu0 %v2577
      %v2711 = vpop.f32.mrf.mxu0
      %v2712 = vadd.f32 0.0, %v2711
      %v2713 = vpop.f32.mrf.mxu0
      %v2714 = vadd.f32 0.0, %v2713
      %2715 = vmatprep.mubr.f32.mxu0 0.0
      %2716 = vmatmul.mubr.f32.gmra.mxu0 %v2580
      %v2717 = vpop.f32.mrf.mxu0
      %v2718 = vadd.f32 0.0, %v2717
      %v2719 = vpop.f32.mrf.mxu0
      %v2720 = vadd.f32 0.0, %v2719
      %2721 = vmatprep.mubr.f32.mxu0 0.0
      %2722 = vmatmul.mubr.f32.gmra.mxu0 %v2583
      %v2723 = vpop.f32.mrf.mxu0
      %v2724 = vadd.f32 0.0, %v2723
      %v2725 = vpop.f32.mrf.mxu0
      %v2726 = vadd.f32 0.0, %v2725
      %2727 = vmatprep.mubr.f32.mxu0 0.0
      %2728 = vmatmul.mubr.f32.gmra.mxu0 %v2586
      %v2729 = vpop.f32.mrf.mxu0
      %v2730 = vadd.f32 0.0, %v2729
      %v2731 = vpop.f32.mrf.mxu0
      %v2732 = vadd.f32 0.0, %v2731
      %2733 = vmatprep.mubr.f32.mxu0 0.0
      %2734 = vmatmul.mubr.f32.gmra.mxu0 %v2589
      %v2735 = vpop.f32.mrf.mxu0
      %v2736 = vadd.f32 0.0, %v2735
      %v2737 = vpop.f32.mrf.mxu0
      %v2738 = vadd.f32 0.0, %v2737
      %2739 = vmatprep.mubr.f32.mxu0 0.0
      %2740 = vmatmul.mubr.f32.gmra.mxu0 %v2592
      %v2741 = vpop.f32.mrf.mxu0
      %v2742 = vadd.f32 0.0, %v2741
      %v2743 = vpop.f32.mrf.mxu0
      %v2744 = vadd.f32 0.0, %v2743
      %2745 = vmatprep.mubr.f32.mxu0 0.0
      %2746 = vmatmul.mubr.f32.gmra.mxu0 %v2595
      %v2747 = vpop.f32.mrf.mxu0
      %v2748 = vadd.f32 0.0, %v2747
      %v2749 = vpop.f32.mrf.mxu0
      %v2750 = vadd.f32 0.0, %v2749
      %2751 = vmatprep.mubr.f32.mxu0 0.0
      %2752 = vmatmul.mubr.f32.gmra.mxu0 %v2598
      %v2753 = vpop.f32.mrf.mxu0
      %v2754 = vadd.f32 0.0, %v2753
      %v2755 = vpop.f32.mrf.mxu0
      %v2756 = vadd.f32 0.0, %v2755
      %2757 = vmatprep.mubr.f32.mxu0 0.0
      %2758 = vmatmul.mubr.f32.gmra.mxu0 %v2601
      %v2759 = vpop.f32.mrf.mxu0
      %v2760 = vadd.f32 0.0, %v2759
      %v2761 = vpop.f32.mrf.mxu0
      %v2762 = vadd.f32 0.0, %v2761
      %2763 = vdwg.mxu0
      %v2764 = vadd.f32 %v2470, %v2670
      %v2765 = vadd.f32 %v2471, %v2672
      %v2766 = vadd.f32 %v2472, %v2676
      %v2767 = vadd.f32 %v2473, %v2678
      %v2768 = vadd.f32 %v2474, %v2682
      %v2769 = vadd.f32 %v2475, %v2684
      %v2770 = vadd.f32 %v2476, %v2688
      %v2771 = vadd.f32 %v2477, %v2690
      %v2772 = vadd.f32 %v2478, %v2694
      %v2773 = vadd.f32 %v2479, %v2696
      %v2774 = vadd.f32 %v2480, %v2700
      %v2775 = vadd.f32 %v2481, %v2702
      %v2776 = vadd.f32 %v2482, %v2706
      %v2777 = vadd.f32 %v2483, %v2708
      %v2778 = vadd.f32 %v2484, %v2712
      %v2779 = vadd.f32 %v2485, %v2714
      %v2780 = vadd.f32 %v2486, %v2718
      %v2781 = vadd.f32 %v2487, %v2720
      %v2782 = vadd.f32 %v2488, %v2724
      %v2783 = vadd.f32 %v2489, %v2726
      %v2784 = vadd.f32 %v2490, %v2730
      %v2785 = vadd.f32 %v2491, %v2732
      %v2786 = vadd.f32 %v2492, %v2736
      %v2787 = vadd.f32 %v2493, %v2738
      %v2788 = vadd.f32 %v2494, %v2742
      %v2789 = vadd.f32 %v2495, %v2744
      %v2790 = vadd.f32 %v2496, %v2748
      %v2791 = vadd.f32 %v2497, %v2750
      %v2792 = vadd.f32 %v2498, %v2754
      %v2793 = vadd.f32 %v2499, %v2756
      %v2794 = vadd.f32 %v2500, %v2760
      %v2795 = vadd.f32 %v2501, %v2762
      %v2796 = vlaneseq
      %v2797 = vshrl.u32 %v2796, 7
      %v2798 = vsub.s32 0, %v2797
      %v2799 = vrot.slane %v347, %v2798
      %v2800 = vlaneseq
      %v2801 = vshrl.u32 %v2800, 7
      %v2802 = vsub.s32 0, %v2801
      %v2803 = vrot.slane %v348, %v2802
      %2806 = vrot.lane.b32.xlu0 %v2799, 34
      %v2807 = vpop.permute.xlu0 %2806
      %2808 = vrot.lane.b32.xlu0 %v2803, 34
      %v2809 = vpop.permute.xlu0 %2808
      %v2810 = vsel %vm351, %v2807, %v2809
      %v2814 = vmul.f32 %v736, %v2807
      %v2815 = vmul.f32 %v737, %v2810
      %v2816 = vmul.f32 %v738, %v2809
      %s2817 = scalar_lea.vmem %s3, 1024
      %v2818 = vld [vmem:[%s2817] sm:$0xff]
      %v2819 = vld [vmem:[%s2817 + $0x8] sm:$0xff]
      %v2820 = vld [vmem:[%s2817 + $0x10] sm:$0xff]
      %v2821 = vld [vmem:[%s2817 + $0x18] sm:$0xff]
      %v2822 = vld [vmem:[%s2817 + $0x20] sm:$0xff]
      %v2823 = vld [vmem:[%s2817 + $0x28] sm:$0xff]
      %v2824 = vld [vmem:[%s2817 + $0x30] sm:$0xff]
      %v2825 = vld [vmem:[%s2817 + $0x38] sm:$0xff]
      %v2826 = vld [vmem:[%s2817 + $0x40] sm:$0xff]
      %v2827 = vld [vmem:[%s2817 + $0x48] sm:$0xff]
      %v2828 = vld [vmem:[%s2817 + $0x50] sm:$0xff]
      %v2829 = vld [vmem:[%s2817 + $0x58] sm:$0xff]
      %v2830 = vld [vmem:[%s2817 + $0x60] sm:$0xff]
      %v2831 = vld [vmem:[%s2817 + $0x68] sm:$0xff]
      %v2832 = vld [vmem:[%s2817 + $0x70] sm:$0xff]
      %v2833 = vld [vmem:[%s2817 + $0x78] sm:$0xff]
      %2837 = vrot.lane.b32.xlu0 %v2814, 94
      %v2838 = vpop.permute.xlu0 %2837
      %2839 = vrot.lane.b32.xlu0 %v2815, 94
      %v2840 = vpop.permute.xlu0 %2839
      %2841 = vrot.lane.b32.xlu0 %v2816, 94
      %v2842 = vpop.permute.xlu0 %2841
      %vm2843 = vcmask 769024
      %v2844 = vsel %vm2843, %v2838, %v2840
      %v2845 = vsel %vm2843, %v2840, %v2842
      %v2849 = vsel %vm494, %v2818, 0
      %v2852 = vsel %vm494, %v2819, 0
      %v2855 = vsel %vm494, %v2820, 0
      %v2858 = vsel %vm494, %v2821, 0
      %v2861 = vsel %vm494, %v2822, 0
      %v2864 = vsel %vm494, %v2823, 0
      %v2867 = vsel %vm494, %v2824, 0
      %v2870 = vsel %vm494, %v2825, 0
      %v2873 = vsel %vm494, %v2826, 0
      %v2876 = vsel %vm494, %v2827, 0
      %v2879 = vsel %vm494, %v2828, 0
      %v2882 = vsel %vm494, %v2829, 0
      %v2885 = vsel %vm494, %v2830, 0
      %v2888 = vsel %vm494, %v2831, 0
      %v2891 = vsel %vm494, %v2832, 0
      %v2894 = vsel %vm494, %v2833, 0
      %2896 = vmatprep.subr.mxu0 0.0
      %2897 = vmatpush1.msra.mxu0 0.0
      %2898 = vmatprep.subr.mxu0 0.0
      %2899 = vmatpush1.msra.mxu0 0.0
      %2900 = vmatprep.subr.mxu0 0.0
      %2901 = vmatpush1.msra.mxu0 0.0
      %2902 = vmatprep.subr.mxu0 0.0
      %2903 = vmatpush1.msra.mxu0 0.0
      %2904 = vmatprep.subr.mxu0 0.0
      %2905 = vmatpush1.msra.mxu0 0.0
      %2906 = vmatprep.subr.mxu0 0.0
      %2907 = vmatpush1.msra.mxu0 0.0
      %2908 = vmatprep.subr.mxu0 0.0
      %2909 = vmatpush1.msra.mxu0 0.0
      %2910 = vmatprep.subr.mxu0 0.0
      %2911 = vmatpush1.msra.mxu0 0.0
      %2912 = vmatprep.subr.mxu0 0.0
      %2913 = vmatpush1.msra.mxu0 0.0
      %2914 = vmatprep.subr.mxu0 0.0
      %2915 = vmatpush1.msra.mxu0 0.0
      %2916 = vmatprep.subr.mxu0 0.0
      %2917 = vmatpush1.msra.mxu0 0.0
      %2918 = vmatprep.subr.mxu0 0.0
      %2919 = vmatpush1.msra.mxu0 0.0
      %2920 = vmatprep.subr.mxu0 0.0
      %2921 = vmatpush1.msra.mxu0 0.0
      %2922 = vmatprep.subr.mxu0 0.0
      %2923 = vmatpush1.msra.mxu0 0.0
      %2924 = vmatprep.subr.mxu0 0.0
      %2925 = vmatpush1.msra.mxu0 0.0
      %2926 = vmatprep.subr.mxu0 %v2845
      %2927 = vmatpush1.msra.mxu0 %v2844
      %2928 = vmatprep.subr.mxu0 0.0
      %2929 = vmatpush2.msra.mxu0 0.0
      %2930 = vmatprep.subr.mxu0 0.0
      %2931 = vmatpush2.msra.mxu0 0.0
      %2932 = vmatprep.subr.mxu0 0.0
      %2933 = vmatpush2.msra.mxu0 0.0
      %2934 = vmatprep.subr.mxu0 0.0
      %2935 = vmatpush2.msra.mxu0 0.0
      %2936 = vmatprep.subr.mxu0 0.0
      %2937 = vmatpush2.msra.mxu0 0.0
      %2938 = vmatprep.subr.mxu0 0.0
      %2939 = vmatpush2.msra.mxu0 0.0
      %2940 = vmatprep.subr.mxu0 0.0
      %2941 = vmatpush2.msra.mxu0 0.0
      %2942 = vmatprep.subr.mxu0 0.0
      %2943 = vmatpush2.msra.mxu0 0.0
      %2944 = vmatprep.subr.mxu0 0.0
      %2945 = vmatpush2.msra.mxu0 0.0
      %2946 = vmatprep.subr.mxu0 0.0
      %2947 = vmatpush2.msra.mxu0 0.0
      %2948 = vmatprep.subr.mxu0 0.0
      %2949 = vmatpush2.msra.mxu0 0.0
      %2950 = vmatprep.subr.mxu0 0.0
      %2951 = vmatpush2.msra.mxu0 0.0
      %2952 = vmatprep.subr.mxu0 0.0
      %2953 = vmatpush2.msra.mxu0 0.0
      %2954 = vmatprep.subr.mxu0 0.0
      %2955 = vmatpush2.msra.mxu0 0.0
      %2956 = vmatprep.subr.mxu0 0.0
      %2957 = vmatpush2.msra.mxu0 0.0
      %2958 = vmatprep.subr.mxu0 0.0
      %2959 = vmatpush2.msra.mxu0 0.0
      %2960 = vmatprep.mubr.f32.mxu0 0.0
      %2961 = vmatmul.mubr.f32.gmra.mxu0 %v2849
      %v2962 = vpop.f32.mrf.mxu0
      %v2963 = vadd.f32 0.0, %v2962
      %v2964 = vpop.f32.mrf.mxu0
      %v2965 = vadd.f32 0.0, %v2964
      %2966 = vmatprep.mubr.f32.mxu0 0.0
      %2967 = vmatmul.mubr.f32.gmra.mxu0 %v2852
      %v2968 = vpop.f32.mrf.mxu0
      %v2969 = vadd.f32 0.0, %v2968
      %v2970 = vpop.f32.mrf.mxu0
      %v2971 = vadd.f32 0.0, %v2970
      %2972 = vmatprep.mubr.f32.mxu0 0.0
      %2973 = vmatmul.mubr.f32.gmra.mxu0 %v2855
      %v2974 = vpop.f32.mrf.mxu0
      %v2975 = vadd.f32 0.0, %v2974
      %v2976 = vpop.f32.mrf.mxu0
      %v2977 = vadd.f32 0.0, %v2976
      %2978 = vmatprep.mubr.f32.mxu0 0.0
      %2979 = vmatmul.mubr.f32.gmra.mxu0 %v2858
      %v2980 = vpop.f32.mrf.mxu0
      %v2981 = vadd.f32 0.0, %v2980
      %v2982 = vpop.f32.mrf.mxu0
      %v2983 = vadd.f32 0.0, %v2982
      %2984 = vmatprep.mubr.f32.mxu0 0.0
      %2985 = vmatmul.mubr.f32.gmra.mxu0 %v2861
      %v2986 = vpop.f32.mrf.mxu0
      %v2987 = vadd.f32 0.0, %v2986
      %v2988 = vpop.f32.mrf.mxu0
      %v2989 = vadd.f32 0.0, %v2988
      %2990 = vmatprep.mubr.f32.mxu0 0.0
      %2991 = vmatmul.mubr.f32.gmra.mxu0 %v2864
      %v2992 = vpop.f32.mrf.mxu0
      %v2993 = vadd.f32 0.0, %v2992
      %v2994 = vpop.f32.mrf.mxu0
      %v2995 = vadd.f32 0.0, %v2994
      %2996 = vmatprep.mubr.f32.mxu0 0.0
      %2997 = vmatmul.mubr.f32.gmra.mxu0 %v2867
      %v2998 = vpop.f32.mrf.mxu0
      %v2999 = vadd.f32 0.0, %v2998
      %v3000 = vpop.f32.mrf.mxu0
      %v3001 = vadd.f32 0.0, %v3000
      %3002 = vmatprep.mubr.f32.mxu0 0.0
      %3003 = vmatmul.mubr.f32.gmra.mxu0 %v2870
      %v3004 = vpop.f32.mrf.mxu0
      %v3005 = vadd.f32 0.0, %v3004
      %v3006 = vpop.f32.mrf.mxu0
      %v3007 = vadd.f32 0.0, %v3006
      %3008 = vmatprep.mubr.f32.mxu0 0.0
      %3009 = vmatmul.mubr.f32.gmra.mxu0 %v2873
      %v3010 = vpop.f32.mrf.mxu0
      %v3011 = vadd.f32 0.0, %v3010
      %v3012 = vpop.f32.mrf.mxu0
      %v3013 = vadd.f32 0.0, %v3012
      %3014 = vmatprep.mubr.f32.mxu0 0.0
      %3015 = vmatmul.mubr.f32.gmra.mxu0 %v2876
      %v3016 = vpop.f32.mrf.mxu0
      %v3017 = vadd.f32 0.0, %v3016
      %v3018 = vpop.f32.mrf.mxu0
      %v3019 = vadd.f32 0.0, %v3018
      %3020 = vmatprep.mubr.f32.mxu0 0.0
      %3021 = vmatmul.mubr.f32.gmra.mxu0 %v2879
      %v3022 = vpop.f32.mrf.mxu0
      %v3023 = vadd.f32 0.0, %v3022
      %v3024 = vpop.f32.mrf.mxu0
      %v3025 = vadd.f32 0.0, %v3024
      %3026 = vmatprep.mubr.f32.mxu0 0.0
      %3027 = vmatmul.mubr.f32.gmra.mxu0 %v2882
      %v3028 = vpop.f32.mrf.mxu0
      %v3029 = vadd.f32 0.0, %v3028
      %v3030 = vpop.f32.mrf.mxu0
      %v3031 = vadd.f32 0.0, %v3030
      %3032 = vmatprep.mubr.f32.mxu0 0.0
      %3033 = vmatmul.mubr.f32.gmra.mxu0 %v2885
      %v3034 = vpop.f32.mrf.mxu0
      %v3035 = vadd.f32 0.0, %v3034
      %v3036 = vpop.f32.mrf.mxu0
      %v3037 = vadd.f32 0.0, %v3036
      %3038 = vmatprep.mubr.f32.mxu0 0.0
      %3039 = vmatmul.mubr.f32.gmra.mxu0 %v2888
      %v3040 = vpop.f32.mrf.mxu0
      %v3041 = vadd.f32 0.0, %v3040
      %v3042 = vpop.f32.mrf.mxu0
      %v3043 = vadd.f32 0.0, %v3042
      %3044 = vmatprep.mubr.f32.mxu0 0.0
      %3045 = vmatmul.mubr.f32.gmra.mxu0 %v2891
      %v3046 = vpop.f32.mrf.mxu0
      %v3047 = vadd.f32 0.0, %v3046
      %v3048 = vpop.f32.mrf.mxu0
      %v3049 = vadd.f32 0.0, %v3048
      %3050 = vmatprep.mubr.f32.mxu0 0.0
      %3051 = vmatmul.mubr.f32.gmra.mxu0 %v2894
      %v3052 = vpop.f32.mrf.mxu0
      %v3053 = vadd.f32 0.0, %v3052
      %v3054 = vpop.f32.mrf.mxu0
      %v3055 = vadd.f32 0.0, %v3054
      %3056 = vdwg.mxu0
      %v3057 = vadd.f32 %v2764, %v2963
      %v3058 = vadd.f32 %v2765, %v2965
      %v3059 = vadd.f32 %v2766, %v2969
      %v3060 = vadd.f32 %v2767, %v2971
      %v3061 = vadd.f32 %v2768, %v2975
      %v3062 = vadd.f32 %v2769, %v2977
      %v3063 = vadd.f32 %v2770, %v2981
      %v3064 = vadd.f32 %v2771, %v2983
      %v3065 = vadd.f32 %v2772, %v2987
      %v3066 = vadd.f32 %v2773, %v2989
      %v3067 = vadd.f32 %v2774, %v2993
      %v3068 = vadd.f32 %v2775, %v2995
      %v3069 = vadd.f32 %v2776, %v2999
      %v3070 = vadd.f32 %v2777, %v3001
      %v3071 = vadd.f32 %v2778, %v3005
      %v3072 = vadd.f32 %v2779, %v3007
      %v3073 = vadd.f32 %v2780, %v3011
      %v3074 = vadd.f32 %v2781, %v3013
      %v3075 = vadd.f32 %v2782, %v3017
      %v3076 = vadd.f32 %v2783, %v3019
      %v3077 = vadd.f32 %v2784, %v3023
      %v3078 = vadd.f32 %v2785, %v3025
      %v3079 = vadd.f32 %v2786, %v3029
      %v3080 = vadd.f32 %v2787, %v3031
      %v3081 = vadd.f32 %v2788, %v3035
      %v3082 = vadd.f32 %v2789, %v3037
      %v3083 = vadd.f32 %v2790, %v3041
      %v3084 = vadd.f32 %v2791, %v3043
      %v3085 = vadd.f32 %v2792, %v3047
      %v3086 = vadd.f32 %v2793, %v3049
      %v3087 = vadd.f32 %v2794, %v3053
      %v3088 = vadd.f32 %v2795, %v3055
      %v3089 = vmax.f32 %v3057, 0.0
      %v3090 = vmax.f32 %v3058, 0.0
      %v3091 = vmax.f32 %v3059, 0.0
      %v3092 = vmax.f32 %v3060, 0.0
      %v3093 = vmax.f32 %v3061, 0.0
      %v3094 = vmax.f32 %v3062, 0.0
      %v3095 = vmax.f32 %v3063, 0.0
      %v3096 = vmax.f32 %v3064, 0.0
      %v3097 = vmax.f32 %v3065, 0.0
      %v3098 = vmax.f32 %v3066, 0.0
      %v3099 = vmax.f32 %v3067, 0.0
      %v3100 = vmax.f32 %v3068, 0.0
      %v3101 = vmax.f32 %v3069, 0.0
      %v3102 = vmax.f32 %v3070, 0.0
      %v3103 = vmax.f32 %v3071, 0.0
      %v3104 = vmax.f32 %v3072, 0.0
      %v3105 = vmax.f32 %v3073, 0.0
      %v3106 = vmax.f32 %v3074, 0.0
      %v3107 = vmax.f32 %v3075, 0.0
      %v3108 = vmax.f32 %v3076, 0.0
      %v3109 = vmax.f32 %v3077, 0.0
      %v3110 = vmax.f32 %v3078, 0.0
      %v3111 = vmax.f32 %v3079, 0.0
      %v3112 = vmax.f32 %v3080, 0.0
      %v3113 = vmax.f32 %v3081, 0.0
      %v3114 = vmax.f32 %v3082, 0.0
      %v3115 = vmax.f32 %v3083, 0.0
      %v3116 = vmax.f32 %v3084, 0.0
      %v3117 = vmax.f32 %v3085, 0.0
      %v3118 = vmax.f32 %v3086, 0.0
      %v3119 = vmax.f32 %v3087, 0.0
      %v3120 = vmax.f32 %v3088, 0.0
      %3121 = vst [vmem:[#allocation3] sm:$0xff] 0.0
      %3122 = vst [vmem:[#allocation3 + $0x8] sm:$0xff] 0.0
      %3123 = vst.msk [vmem:[#allocation3 + $0x10] sm:$0xff] %vm351, 0.0
      %3124 = vst [vmem:[#allocation3 + $0x18] sm:$0xff] 0.0
      %3125 = vst [vmem:[#allocation3 + $0x20] sm:$0xff] 0.0
      %3126 = vst.msk [vmem:[#allocation3 + $0x28] sm:$0xff] %vm351, 0.0
      %3127 = vst [vmem:[#allocation3 + $0x30] sm:$0xff] 0.0
      %3128 = vst [vmem:[#allocation3 + $0x38] sm:$0xff] 0.0
      %3129 = vst.msk [vmem:[#allocation3 + $0x40] sm:$0xff] %vm351, 0.0
      %3130 = vst [vmem:[#allocation3 + $0x48] sm:$0xff] 0.0
      %3131 = vst [vmem:[#allocation3 + $0x50] sm:$0xff] 0.0
      %3132 = vst.msk [vmem:[#allocation3 + $0x58] sm:$0xff] %vm351, 0.0
      %3133 = vst [vmem:[#allocation3 + $0x60] sm:$0xff] 0.0
      %3134 = vst [vmem:[#allocation3 + $0x68] sm:$0xff] 0.0
      %3135 = vst.msk [vmem:[#allocation3 + $0x70] sm:$0xff] %vm351, 0.0
      %3136 = vst [vmem:[#allocation3 + $0x78] sm:$0xff] 0.0
      %3137 = vst [vmem:[#allocation3 + $0x80] sm:$0xff] 0.0
      %3138 = vst.msk [vmem:[#allocation3 + $0x88] sm:$0xff] %vm351, 0.0
      %3139 = vst [vmem:[#allocation3 + $0x90] sm:$0xff] 0.0
      %3140 = vst [vmem:[#allocation3 + $0x98] sm:$0xff] 0.0
      %3141 = vst.msk [vmem:[#allocation3 + $0xa0] sm:$0xff] %vm351, 0.0
      %3142 = vst [vmem:[#allocation3 + $0xa8] sm:$0xff] 0.0
      %3143 = vst [vmem:[#allocation3 + $0xb0] sm:$0xff] 0.0
      %3144 = vst.msk [vmem:[#allocation3 + $0xb8] sm:$0xff] %vm351, 0.0
      %3145 = vst [vmem:[#allocation3 + $0xc0] sm:$0xff] 0.0
      %3146 = vst [vmem:[#allocation3 + $0xc8] sm:$0xff] 0.0
      %3147 = vst.msk [vmem:[#allocation3 + $0xd0] sm:$0xff] %vm351, 0.0
      %3148 = vst [vmem:[#allocation3 + $0xd8] sm:$0xff] 0.0
      %3149 = vst [vmem:[#allocation3 + $0xe0] sm:$0xff] 0.0
      %3150 = vst.msk [vmem:[#allocation3 + $0xe8] sm:$0xff] %vm351, 0.0
      %3151 = vst [vmem:[#allocation3 + $0xf0] sm:$0xff] 0.0
      %3152 = vst [vmem:[#allocation3 + $0xf8] sm:$0xff] 0.0
      %3153 = vst.msk [vmem:[#allocation3 + $0x100] sm:$0xff] %vm351, 0.0
      %3154 = vst [vmem:[#allocation3 + $0x108] sm:$0xff] 0.0
      %3155 = vst [vmem:[#allocation3 + $0x110] sm:$0xff] 0.0
      %3156 = vst.msk [vmem:[#allocation3 + $0x118] sm:$0xff] %vm351, 0.0
      %3157 = vst [vmem:[#allocation3 + $0x120] sm:$0xff] 0.0
      %3158 = vst [vmem:[#allocation3 + $0x128] sm:$0xff] 0.0
      %3159 = vst.msk [vmem:[#allocation3 + $0x130] sm:$0xff] %vm351, 0.0
      %3160 = vst [vmem:[#allocation3 + $0x138] sm:$0xff] 0.0
      %3161 = vst [vmem:[#allocation3 + $0x140] sm:$0xff] 0.0
      %3162 = vst.msk [vmem:[#allocation3 + $0x148] sm:$0xff] %vm351, 0.0
      %3163 = vst [vmem:[#allocation3 + $0x150] sm:$0xff] 0.0
      %3164 = vst [vmem:[#allocation3 + $0x158] sm:$0xff] 0.0
      %3165 = vst.msk [vmem:[#allocation3 + $0x160] sm:$0xff] %vm351, 0.0
      %3166 = vst [vmem:[#allocation3 + $0x168] sm:$0xff] 0.0
      %3167 = vst [vmem:[#allocation3 + $0x170] sm:$0xff] 0.0
      %3168 = vst.msk [vmem:[#allocation3 + $0x178] sm:$0xff] %vm351, 0.0
      %3201 = vrot.lane.b32.xlu0 %v3089, 17
      %v3202 = vpop.permute.xlu0 %3201
      %3203 = vrot.lane.b32.xlu0 %v3090, 17
      %v3204 = vpop.permute.xlu0 %3203
      %3205 = vrot.lane.b32.xlu0 %v3091, 17
      %v3206 = vpop.permute.xlu0 %3205
      %3207 = vrot.lane.b32.xlu0 %v3092, 17
      %v3208 = vpop.permute.xlu0 %3207
      %3209 = vrot.lane.b32.xlu0 %v3093, 17
      %v3210 = vpop.permute.xlu0 %3209
      %3211 = vrot.lane.b32.xlu0 %v3094, 17
      %v3212 = vpop.permute.xlu0 %3211
      %3213 = vrot.lane.b32.xlu0 %v3095, 17
      %v3214 = vpop.permute.xlu0 %3213
      %3215 = vrot.lane.b32.xlu0 %v3096, 17
      %v3216 = vpop.permute.xlu0 %3215
      %3217 = vrot.lane.b32.xlu0 %v3097, 17
      %v3218 = vpop.permute.xlu0 %3217
      %3219 = vrot.lane.b32.xlu0 %v3098, 17
      %v3220 = vpop.permute.xlu0 %3219
      %3221 = vrot.lane.b32.xlu0 %v3099, 17
      %v3222 = vpop.permute.xlu0 %3221
      %3223 = vrot.lane.b32.xlu0 %v3100, 17
      %v3224 = vpop.permute.xlu0 %3223
      %3225 = vrot.lane.b32.xlu0 %v3101, 17
      %v3226 = vpop.permute.xlu0 %3225
      %3227 = vrot.lane.b32.xlu0 %v3102, 17
      %v3228 = vpop.permute.xlu0 %3227
      %3229 = vrot.lane.b32.xlu0 %v3103, 17
      %v3230 = vpop.permute.xlu0 %3229
      %3231 = vrot.lane.b32.xlu0 %v3104, 17
      %v3232 = vpop.permute.xlu0 %3231
      %3233 = vrot.lane.b32.xlu0 %v3105, 17
      %v3234 = vpop.permute.xlu0 %3233
      %3235 = vrot.lane.b32.xlu0 %v3106, 17
      %v3236 = vpop.permute.xlu0 %3235
      %3237 = vrot.lane.b32.xlu0 %v3107, 17
      %v3238 = vpop.permute.xlu0 %3237
      %3239 = vrot.lane.b32.xlu0 %v3108, 17
      %v3240 = vpop.permute.xlu0 %3239
      %3241 = vrot.lane.b32.xlu0 %v3109, 17
      %v3242 = vpop.permute.xlu0 %3241
      %3243 = vrot.lane.b32.xlu0 %v3110, 17
      %v3244 = vpop.permute.xlu0 %3243
      %3245 = vrot.lane.b32.xlu0 %v3111, 17
      %v3246 = vpop.permute.xlu0 %3245
      %3247 = vrot.lane.b32.xlu0 %v3112, 17
      %v3248 = vpop.permute.xlu0 %3247
      %3249 = vrot.lane.b32.xlu0 %v3113, 17
      %v3250 = vpop.permute.xlu0 %3249
      %3251 = vrot.lane.b32.xlu0 %v3114, 17
      %v3252 = vpop.permute.xlu0 %3251
      %3253 = vrot.lane.b32.xlu0 %v3115, 17
      %v3254 = vpop.permute.xlu0 %3253
      %3255 = vrot.lane.b32.xlu0 %v3116, 17
      %v3256 = vpop.permute.xlu0 %3255
      %3257 = vrot.lane.b32.xlu0 %v3117, 17
      %v3258 = vpop.permute.xlu0 %3257
      %3259 = vrot.lane.b32.xlu0 %v3118, 17
      %v3260 = vpop.permute.xlu0 %3259
      %3261 = vrot.lane.b32.xlu0 %v3119, 17
      %v3262 = vpop.permute.xlu0 %3261
      %3263 = vrot.lane.b32.xlu0 %v3120, 17
      %v3264 = vpop.permute.xlu0 %3263
      %v3265 = vsel %vm361, %v3202, %v3204
      %v3266 = vsel %vm361, %v3206, %v3208
      %v3267 = vsel %vm361, %v3210, %v3212
      %v3268 = vsel %vm361, %v3214, %v3216
      %v3269 = vsel %vm361, %v3218, %v3220
      %v3270 = vsel %vm361, %v3222, %v3224
      %v3271 = vsel %vm361, %v3226, %v3228
      %v3272 = vsel %vm361, %v3230, %v3232
      %v3273 = vsel %vm361, %v3234, %v3236
      %v3274 = vsel %vm361, %v3238, %v3240
      %v3275 = vsel %vm361, %v3242, %v3244
      %v3276 = vsel %vm361, %v3246, %v3248
      %v3277 = vsel %vm361, %v3250, %v3252
      %v3278 = vsel %vm361, %v3254, %v3256
      %v3279 = vsel %vm361, %v3258, %v3260
      %v3280 = vsel %vm361, %v3262, %v3264
      %3329 = vst.msk [vmem:[#allocation3] sm:$0xff] %vm366, %v3202
      %3330 = vst [vmem:[#allocation3 + $0x8] sm:$0xff] %v3265
      %3331 = vst.msk [vmem:[#allocation3 + $0x10] sm:$0xff] %vm361, %v3204
      %3332 = vst.msk [vmem:[#allocation3 + $0x18] sm:$0xff] %vm366, %v3206
      %3333 = vst [vmem:[#allocation3 + $0x20] sm:$0xff] %v3266
      %3334 = vst.msk [vmem:[#allocation3 + $0x28] sm:$0xff] %vm361, %v3208
      %3335 = vst.msk [vmem:[#allocation3 + $0x30] sm:$0xff] %vm366, %v3210
      %3336 = vst [vmem:[#allocation3 + $0x38] sm:$0xff] %v3267
      %3337 = vst.msk [vmem:[#allocation3 + $0x40] sm:$0xff] %vm361, %v3212
      %3338 = vst.msk [vmem:[#allocation3 + $0x48] sm:$0xff] %vm366, %v3214
      %3339 = vst [vmem:[#allocation3 + $0x50] sm:$0xff] %v3268
      %3340 = vst.msk [vmem:[#allocation3 + $0x58] sm:$0xff] %vm361, %v3216
      %3341 = vst.msk [vmem:[#allocation3 + $0x60] sm:$0xff] %vm366, %v3218
      %3342 = vst [vmem:[#allocation3 + $0x68] sm:$0xff] %v3269
      %3343 = vst.msk [vmem:[#allocation3 + $0x70] sm:$0xff] %vm361, %v3220
      %3344 = vst.msk [vmem:[#allocation3 + $0x78] sm:$0xff] %vm366, %v3222
      %3345 = vst [vmem:[#allocation3 + $0x80] sm:$0xff] %v3270
      %3346 = vst.msk [vmem:[#allocation3 + $0x88] sm:$0xff] %vm361, %v3224
      %3347 = vst.msk [vmem:[#allocation3 + $0x90] sm:$0xff] %vm366, %v3226
      %3348 = vst [vmem:[#allocation3 + $0x98] sm:$0xff] %v3271
      %3349 = vst.msk [vmem:[#allocation3 + $0xa0] sm:$0xff] %vm361, %v3228
      %3350 = vst.msk [vmem:[#allocation3 + $0xa8] sm:$0xff] %vm366, %v3230
      %3351 = vst [vmem:[#allocation3 + $0xb0] sm:$0xff] %v3272
      %3352 = vst.msk [vmem:[#allocation3 + $0xb8] sm:$0xff] %vm361, %v3232
      %3353 = vst.msk [vmem:[#allocation3 + $0xc0] sm:$0xff] %vm366, %v3234
      %3354 = vst [vmem:[#allocation3 + $0xc8] sm:$0xff] %v3273
      %3355 = vst.msk [vmem:[#allocation3 + $0xd0] sm:$0xff] %vm361, %v3236
      %3356 = vst.msk [vmem:[#allocation3 + $0xd8] sm:$0xff] %vm366, %v3238
      %3357 = vst [vmem:[#allocation3 + $0xe0] sm:$0xff] %v3274
      %3358 = vst.msk [vmem:[#allocation3 + $0xe8] sm:$0xff] %vm361, %v3240
      %3359 = vst.msk [vmem:[#allocation3 + $0xf0] sm:$0xff] %vm366, %v3242
      %3360 = vst [vmem:[#allocation3 + $0xf8] sm:$0xff] %v3275
      %3361 = vst.msk [vmem:[#allocation3 + $0x100] sm:$0xff] %vm361, %v3244
      %3362 = vst.msk [vmem:[#allocation3 + $0x108] sm:$0xff] %vm366, %v3246
      %3363 = vst [vmem:[#allocation3 + $0x110] sm:$0xff] %v3276
      %3364 = vst.msk [vmem:[#allocation3 + $0x118] sm:$0xff] %vm361, %v3248
      %3365 = vst.msk [vmem:[#allocation3 + $0x120] sm:$0xff] %vm366, %v3250
      %3366 = vst [vmem:[#allocation3 + $0x128] sm:$0xff] %v3277
      %3367 = vst.msk [vmem:[#allocation3 + $0x130] sm:$0xff] %vm361, %v3252
      %3368 = vst.msk [vmem:[#allocation3 + $0x138] sm:$0xff] %vm366, %v3254
      %3369 = vst [vmem:[#allocation3 + $0x140] sm:$0xff] %v3278
      %3370 = vst.msk [vmem:[#allocation3 + $0x148] sm:$0xff] %vm361, %v3256
      %3371 = vst.msk [vmem:[#allocation3 + $0x150] sm:$0xff] %vm366, %v3258
      %3372 = vst [vmem:[#allocation3 + $0x158] sm:$0xff] %v3279
      %3373 = vst.msk [vmem:[#allocation3 + $0x160] sm:$0xff] %vm361, %v3260
      %3374 = vst.msk [vmem:[#allocation3 + $0x168] sm:$0xff] %vm366, %v3262
      %3375 = vst [vmem:[#allocation3 + $0x170] sm:$0xff] %v3280
      %3376 = vst.msk [vmem:[#allocation3 + $0x178] sm:$0xff] %vm361, %v3264
      %v3377 = vld [vmem:[%s6] sm:$0xff]
      %3379 = vset.pattern.permute.xlu0 0
      %3380 = vperm.xlu0 %3379, %v3377
      %v3381 = vpop.permute.xlu0 %3380
      %v3383 = vld [vmem:[#allocation3] sm:$0xff]
      %v3384 = vld [vmem:[#allocation3 + $0x8] sm:$0xff]
      %v3385 = vld [vmem:[#allocation3 + $0x18] sm:$0xff]
      %v3386 = vld [vmem:[#allocation3 + $0x20] sm:$0xff]
      %v3387 = vld [vmem:[#allocation3 + $0x30] sm:$0xff]
      %v3388 = vld [vmem:[#allocation3 + $0x38] sm:$0xff]
      %v3389 = vld [vmem:[#allocation3 + $0x48] sm:$0xff]
      %v3390 = vld [vmem:[#allocation3 + $0x50] sm:$0xff]
      %v3391 = vld [vmem:[#allocation3 + $0x60] sm:$0xff]
      %v3392 = vld [vmem:[#allocation3 + $0x68] sm:$0xff]
      %v3393 = vld [vmem:[#allocation3 + $0x78] sm:$0xff]
      %v3394 = vld [vmem:[#allocation3 + $0x80] sm:$0xff]
      %v3395 = vld [vmem:[#allocation3 + $0x90] sm:$0xff]
      %v3396 = vld [vmem:[#allocation3 + $0x98] sm:$0xff]
      %v3397 = vld [vmem:[#allocation3 + $0xa8] sm:$0xff]
      %v3398 = vld [vmem:[#allocation3 + $0xb0] sm:$0xff]
      %v3399 = vld [vmem:[#allocation3 + $0xc0] sm:$0xff]
      %v3400 = vld [vmem:[#allocation3 + $0xc8] sm:$0xff]
      %v3401 = vld [vmem:[#allocation3 + $0xd8] sm:$0xff]
      %v3402 = vld [vmem:[#allocation3 + $0xe0] sm:$0xff]
      %v3403 = vld [vmem:[#allocation3 + $0xf0] sm:$0xff]
      %v3404 = vld [vmem:[#allocation3 + $0xf8] sm:$0xff]
      %v3405 = vld [vmem:[#allocation3 + $0x108] sm:$0xff]
      %v3406 = vld [vmem:[#allocation3 + $0x110] sm:$0xff]
      %v3407 = vld [vmem:[#allocation3 + $0x120] sm:$0xff]
      %v3408 = vld [vmem:[#allocation3 + $0x128] sm:$0xff]
      %v3409 = vld [vmem:[#allocation3 + $0x138] sm:$0xff]
      %v3410 = vld [vmem:[#allocation3 + $0x140] sm:$0xff]
      %v3411 = vld [vmem:[#allocation3 + $0x150] sm:$0xff]
      %v3412 = vld [vmem:[#allocation3 + $0x158] sm:$0xff]
      %v3413 = vld [vmem:[#allocation3 + $0x168] sm:$0xff]
      %v3414 = vld [vmem:[#allocation3 + $0x170] sm:$0xff]
      %v3415 = vld [vmem:[%s5] sm:$0xff]
      %3416 = vmatprep.subr.mxu0 %v3414
      %3417 = vmatpush1.msra.mxu0 %v3413
      %3418 = vmatprep.subr.mxu0 %v3412
      %3419 = vmatpush1.msra.mxu0 %v3411
      %3420 = vmatprep.subr.mxu0 %v3410
      %3421 = vmatpush1.msra.mxu0 %v3409
      %3422 = vmatprep.subr.mxu0 %v3408
      %3423 = vmatpush1.msra.mxu0 %v3407
      %3424 = vmatprep.subr.mxu0 %v3406
      %3425 = vmatpush1.msra.mxu0 %v3405
      %3426 = vmatprep.subr.mxu0 %v3404
      %3427 = vmatpush1.msra.mxu0 %v3403
      %3428 = vmatprep.subr.mxu0 %v3402
      %3429 = vmatpush1.msra.mxu0 %v3401
      %3430 = vmatprep.subr.mxu0 %v3400
      %3431 = vmatpush1.msra.mxu0 %v3399
      %3432 = vmatprep.subr.mxu0 %v3398
      %3433 = vmatpush1.msra.mxu0 %v3397
      %3434 = vmatprep.subr.mxu0 %v3396
      %3435 = vmatpush1.msra.mxu0 %v3395
      %3436 = vmatprep.subr.mxu0 %v3394
      %3437 = vmatpush1.msra.mxu0 %v3393
      %3438 = vmatprep.subr.mxu0 %v3392
      %3439 = vmatpush1.msra.mxu0 %v3391
      %3440 = vmatprep.subr.mxu0 %v3390
      %3441 = vmatpush1.msra.mxu0 %v3389
      %3442 = vmatprep.subr.mxu0 %v3388
      %3443 = vmatpush1.msra.mxu0 %v3387
      %3444 = vmatprep.subr.mxu0 %v3386
      %3445 = vmatpush1.msra.mxu0 %v3385
      %3446 = vmatprep.subr.mxu0 %v3384
      %3447 = vmatpush1.msra.mxu0 %v3383
      %3448 = vmatprep.subr.mxu0 0.0
      %3449 = vmatpush2.msra.mxu0 0.0
      %3450 = vmatprep.subr.mxu0 0.0
      %3451 = vmatpush2.msra.mxu0 0.0
      %3452 = vmatprep.subr.mxu0 0.0
      %3453 = vmatpush2.msra.mxu0 0.0
      %3454 = vmatprep.subr.mxu0 0.0
      %3455 = vmatpush2.msra.mxu0 0.0
      %3456 = vmatprep.subr.mxu0 0.0
      %3457 = vmatpush2.msra.mxu0 0.0
      %3458 = vmatprep.subr.mxu0 0.0
      %3459 = vmatpush2.msra.mxu0 0.0
      %3460 = vmatprep.subr.mxu0 0.0
      %3461 = vmatpush2.msra.mxu0 0.0
      %3462 = vmatprep.subr.mxu0 0.0
      %3463 = vmatpush2.msra.mxu0 0.0
      %3464 = vmatprep.subr.mxu0 0.0
      %3465 = vmatpush2.msra.mxu0 0.0
      %3466 = vmatprep.subr.mxu0 0.0
      %3467 = vmatpush2.msra.mxu0 0.0
      %3468 = vmatprep.subr.mxu0 0.0
      %3469 = vmatpush2.msra.mxu0 0.0
      %3470 = vmatprep.subr.mxu0 0.0
      %3471 = vmatpush2.msra.mxu0 0.0
      %3472 = vmatprep.subr.mxu0 0.0
      %3473 = vmatpush2.msra.mxu0 0.0
      %3474 = vmatprep.subr.mxu0 0.0
      %3475 = vmatpush2.msra.mxu0 0.0
      %3476 = vmatprep.subr.mxu0 0.0
      %3477 = vmatpush2.msra.mxu0 0.0
      %3478 = vmatprep.subr.mxu0 0.0
      %3479 = vmatpush2.msra.mxu0 0.0
      %3480 = vmatprep.mubr.f32.mxu0 0.0
      %3481 = vmatmul.mubr.f32.gmra.mxu0 %v3415
      %v3482 = vpop.f32.mrf.mxu0
      %v3483 = vadd.f32 0.0, %v3482
      %v3484 = vpop.f32.mrf.mxu0
      %v3485 = vadd.f32 0.0, %v3484
      %3486 = vdwg.mxu0
      %v3487 = vmul.f32 %v3483, %v471
      %v3488 = vmul.f32 %v3485, %v475
      %v3489 = vadd.f32 %v3381, %v3487
      %v3490 = vadd.f32 %v3381, %v3488
      %v3491 = vld [vmem:[#allocation3] sm:$0xff]
      %v3492 = vld [vmem:[#allocation3 + $0x8] sm:$0xff]
      %v3493 = vld [vmem:[#allocation3 + $0x10] sm:$0xff]
      %v3494 = vld [vmem:[#allocation3 + $0x18] sm:$0xff]
      %v3495 = vld [vmem:[#allocation3 + $0x20] sm:$0xff]
      %v3496 = vld [vmem:[#allocation3 + $0x28] sm:$0xff]
      %v3497 = vld [vmem:[#allocation3 + $0x30] sm:$0xff]
      %v3498 = vld [vmem:[#allocation3 + $0x38] sm:$0xff]
      %v3499 = vld [vmem:[#allocation3 + $0x40] sm:$0xff]
      %v3500 = vld [vmem:[#allocation3 + $0x48] sm:$0xff]
      %v3501 = vld [vmem:[#allocation3 + $0x50] sm:$0xff]
      %v3502 = vld [vmem:[#allocation3 + $0x58] sm:$0xff]
      %v3503 = vld [vmem:[#allocation3 + $0x60] sm:$0xff]
      %v3504 = vld [vmem:[#allocation3 + $0x68] sm:$0xff]
      %v3505 = vld [vmem:[#allocation3 + $0x70] sm:$0xff]
      %v3506 = vld [vmem:[#allocation3 + $0x78] sm:$0xff]
      %v3507 = vld [vmem:[#allocation3 + $0x80] sm:$0xff]
      %v3508 = vld [vmem:[#allocation3 + $0x88] sm:$0xff]
      %v3509 = vld [vmem:[#allocation3 + $0x90] sm:$0xff]
      %v3510 = vld [vmem:[#allocation3 + $0x98] sm:$0xff]
      %v3511 = vld [vmem:[#allocation3 + $0xa0] sm:$0xff]
      %v3512 = vld [vmem:[#allocation3 + $0xa8] sm:$0xff]
      %v3513 = vld [vmem:[#allocation3 + $0xb0] sm:$0xff]
      %v3514 = vld [vmem:[#allocation3 + $0xb8] sm:$0xff]
      %v3515 = vld [vmem:[#allocation3 + $0xc0] sm:$0xff]
      %v3516 = vld [vmem:[#allocation3 + $0xc8] sm:$0xff]
      %v3517 = vld [vmem:[#allocation3 + $0xd0] sm:$0xff]
      %v3518 = vld [vmem:[#allocation3 + $0xd8] sm:$0xff]
      %v3519 = vld [vmem:[#allocation3 + $0xe0] sm:$0xff]
      %v3520 = vld [vmem:[#allocation3 + $0xe8] sm:$0xff]
      %v3521 = vld [vmem:[#allocation3 + $0xf0] sm:$0xff]
      %v3522 = vld [vmem:[#allocation3 + $0xf8] sm:$0xff]
      %v3523 = vld [vmem:[#allocation3 + $0x100] sm:$0xff]
      %v3524 = vld [vmem:[#allocation3 + $0x108] sm:$0xff]
      %v3525 = vld [vmem:[#allocation3 + $0x110] sm:$0xff]
      %v3526 = vld [vmem:[#allocation3 + $0x118] sm:$0xff]
      %v3527 = vld [vmem:[#allocation3 + $0x120] sm:$0xff]
      %v3528 = vld [vmem:[#allocation3 + $0x128] sm:$0xff]
      %v3529 = vld [vmem:[#allocation3 + $0x130] sm:$0xff]
      %v3530 = vld [vmem:[#allocation3 + $0x138] sm:$0xff]
      %v3531 = vld [vmem:[#allocation3 + $0x140] sm:$0xff]
      %v3532 = vld [vmem:[#allocation3 + $0x148] sm:$0xff]
      %v3533 = vld [vmem:[#allocation3 + $0x150] sm:$0xff]
      %v3534 = vld [vmem:[#allocation3 + $0x158] sm:$0xff]
      %v3535 = vld [vmem:[#allocation3 + $0x160] sm:$0xff]
      %v3536 = vld [vmem:[#allocation3 + $0x168] sm:$0xff]
      %v3537 = vld [vmem:[#allocation3 + $0x170] sm:$0xff]
      %v3538 = vld [vmem:[#allocation3 + $0x178] sm:$0xff]
      %s3539 = scalar_lea.vmem %s5, 8
      %v3540 = vld [vmem:[%s3539] sm:$0xff]
      %3589 = vrot.lane.b32.xlu0 %v3491, 127
      %v3590 = vpop.permute.xlu0 %3589
      %3591 = vrot.lane.b32.xlu0 %v3492, 127
      %v3592 = vpop.permute.xlu0 %3591
      %3593 = vrot.lane.b32.xlu0 %v3493, 127
      %v3594 = vpop.permute.xlu0 %3593
      %3595 = vrot.lane.b32.xlu0 %v3494, 127
      %v3596 = vpop.permute.xlu0 %3595
      %3597 = vrot.lane.b32.xlu0 %v3495, 127
      %v3598 = vpop.permute.xlu0 %3597
      %3599 = vrot.lane.b32.xlu0 %v3496, 127
      %v3600 = vpop.permute.xlu0 %3599
      %3601 = vrot.lane.b32.xlu0 %v3497, 127
      %v3602 = vpop.permute.xlu0 %3601
      %3603 = vrot.lane.b32.xlu0 %v3498, 127
      %v3604 = vpop.permute.xlu0 %3603
      %3605 = vrot.lane.b32.xlu0 %v3499, 127
      %v3606 = vpop.permute.xlu0 %3605
      %3607 = vrot.lane.b32.xlu0 %v3500, 127
      %v3608 = vpop.permute.xlu0 %3607
      %3609 = vrot.lane.b32.xlu0 %v3501, 127
      %v3610 = vpop.permute.xlu0 %3609
      %3611 = vrot.lane.b32.xlu0 %v3502, 127
      %v3612 = vpop.permute.xlu0 %3611
      %3613 = vrot.lane.b32.xlu0 %v3503, 127
      %v3614 = vpop.permute.xlu0 %3613
      %3615 = vrot.lane.b32.xlu0 %v3504, 127
      %v3616 = vpop.permute.xlu0 %3615
      %3617 = vrot.lane.b32.xlu0 %v3505, 127
      %v3618 = vpop.permute.xlu0 %3617
      %3619 = vrot.lane.b32.xlu0 %v3506, 127
      %v3620 = vpop.permute.xlu0 %3619
      %3621 = vrot.lane.b32.xlu0 %v3507, 127
      %v3622 = vpop.permute.xlu0 %3621
      %3623 = vrot.lane.b32.xlu0 %v3508, 127
      %v3624 = vpop.permute.xlu0 %3623
      %3625 = vrot.lane.b32.xlu0 %v3509, 127
      %v3626 = vpop.permute.xlu0 %3625
      %3627 = vrot.lane.b32.xlu0 %v3510, 127
      %v3628 = vpop.permute.xlu0 %3627
      %3629 = vrot.lane.b32.xlu0 %v3511, 127
      %v3630 = vpop.permute.xlu0 %3629
      %3631 = vrot.lane.b32.xlu0 %v3512, 127
      %v3632 = vpop.permute.xlu0 %3631
      %3633 = vrot.lane.b32.xlu0 %v3513, 127
      %v3634 = vpop.permute.xlu0 %3633
      %3635 = vrot.lane.b32.xlu0 %v3514, 127
      %v3636 = vpop.permute.xlu0 %3635
      %3637 = vrot.lane.b32.xlu0 %v3515, 127
      %v3638 = vpop.permute.xlu0 %3637
      %3639 = vrot.lane.b32.xlu0 %v3516, 127
      %v3640 = vpop.permute.xlu0 %3639
      %3641 = vrot.lane.b32.xlu0 %v3517, 127
      %v3642 = vpop.permute.xlu0 %3641
      %3643 = vrot.lane.b32.xlu0 %v3518, 127
      %v3644 = vpop.permute.xlu0 %3643
      %3645 = vrot.lane.b32.xlu0 %v3519, 127
      %v3646 = vpop.permute.xlu0 %3645
      %3647 = vrot.lane.b32.xlu0 %v3520, 127
      %v3648 = vpop.permute.xlu0 %3647
      %3649 = vrot.lane.b32.xlu0 %v3521, 127
      %v3650 = vpop.permute.xlu0 %3649
      %3651 = vrot.lane.b32.xlu0 %v3522, 127
      %v3652 = vpop.permute.xlu0 %3651
      %3653 = vrot.lane.b32.xlu0 %v3523, 127
      %v3654 = vpop.permute.xlu0 %3653
      %3655 = vrot.lane.b32.xlu0 %v3524, 127
      %v3656 = vpop.permute.xlu0 %3655
      %3657 = vrot.lane.b32.xlu0 %v3525, 127
      %v3658 = vpop.permute.xlu0 %3657
      %3659 = vrot.lane.b32.xlu0 %v3526, 127
      %v3660 = vpop.permute.xlu0 %3659
      %3661 = vrot.lane.b32.xlu0 %v3527, 127
      %v3662 = vpop.permute.xlu0 %3661
      %3663 = vrot.lane.b32.xlu0 %v3528, 127
      %v3664 = vpop.permute.xlu0 %3663
      %3665 = vrot.lane.b32.xlu0 %v3529, 127
      %v3666 = vpop.permute.xlu0 %3665
      %3667 = vrot.lane.b32.xlu0 %v3530, 127
      %v3668 = vpop.permute.xlu0 %3667
      %3669 = vrot.lane.b32.xlu0 %v3531, 127
      %v3670 = vpop.permute.xlu0 %3669
      %3671 = vrot.lane.b32.xlu0 %v3532, 127
      %v3672 = vpop.permute.xlu0 %3671
      %3673 = vrot.lane.b32.xlu0 %v3533, 127
      %v3674 = vpop.permute.xlu0 %3673
      %3675 = vrot.lane.b32.xlu0 %v3534, 127
      %v3676 = vpop.permute.xlu0 %3675
      %3677 = vrot.lane.b32.xlu0 %v3535, 127
      %v3678 = vpop.permute.xlu0 %3677
      %3679 = vrot.lane.b32.xlu0 %v3536, 127
      %v3680 = vpop.permute.xlu0 %3679
      %3681 = vrot.lane.b32.xlu0 %v3537, 127
      %v3682 = vpop.permute.xlu0 %3681
      %3683 = vrot.lane.b32.xlu0 %v3538, 127
      %v3684 = vpop.permute.xlu0 %3683
      %v3685 = vsel %vm787, %v3590, %v3592
      %v3686 = vsel %vm787, %v3592, %v3594
      %v3687 = vsel %vm787, %v3596, %v3598
      %v3688 = vsel %vm787, %v3598, %v3600
      %v3689 = vsel %vm787, %v3602, %v3604
      %v3690 = vsel %vm787, %v3604, %v3606
      %v3691 = vsel %vm787, %v3608, %v3610
      %v3692 = vsel %vm787, %v3610, %v3612
      %v3693 = vsel %vm787, %v3614, %v3616
      %v3694 = vsel %vm787, %v3616, %v3618
      %v3695 = vsel %vm787, %v3620, %v3622
      %v3696 = vsel %vm787, %v3622, %v3624
      %v3697 = vsel %vm787, %v3626, %v3628
      %v3698 = vsel %vm787, %v3628, %v3630
      %v3699 = vsel %vm787, %v3632, %v3634
      %v3700 = vsel %vm787, %v3634, %v3636
      %v3701 = vsel %vm787, %v3638, %v3640
      %v3702 = vsel %vm787, %v3640, %v3642
      %v3703 = vsel %vm787, %v3644, %v3646
      %v3704 = vsel %vm787, %v3646, %v3648
      %v3705 = vsel %vm787, %v3650, %v3652
      %v3706 = vsel %vm787, %v3652, %v3654
      %v3707 = vsel %vm787, %v3656, %v3658
      %v3708 = vsel %vm787, %v3658, %v3660
      %v3709 = vsel %vm787, %v3662, %v3664
      %v3710 = vsel %vm787, %v3664, %v3666
      %v3711 = vsel %vm787, %v3668, %v3670
      %v3712 = vsel %vm787, %v3670, %v3672
      %v3713 = vsel %vm787, %v3674, %v3676
      %v3714 = vsel %vm787, %v3676, %v3678
      %v3715 = vsel %vm787, %v3680, %v3682
      %v3716 = vsel %vm787, %v3682, %v3684
      %3749 = vmatprep.subr.mxu0 %v3716
      %3750 = vmatpush1.msra.mxu0 %v3715
      %3751 = vmatprep.subr.mxu0 %v3714
      %3752 = vmatpush1.msra.mxu0 %v3713
      %3753 = vmatprep.subr.mxu0 %v3712
      %3754 = vmatpush1.msra.mxu0 %v3711
      %3755 = vmatprep.subr.mxu0 %v3710
      %3756 = vmatpush1.msra.mxu0 %v3709
      %3757 = vmatprep.subr.mxu0 %v3708
      %3758 = vmatpush1.msra.mxu0 %v3707
      %3759 = vmatprep.subr.mxu0 %v3706
      %3760 = vmatpush1.msra.mxu0 %v3705
      %3761 = vmatprep.subr.mxu0 %v3704
      %3762 = vmatpush1.msra.mxu0 %v3703
      %3763 = vmatprep.subr.mxu0 %v3702
      %3764 = vmatpush1.msra.mxu0 %v3701
      %3765 = vmatprep.subr.mxu0 %v3700
      %3766 = vmatpush1.msra.mxu0 %v3699
      %3767 = vmatprep.subr.mxu0 %v3698
      %3768 = vmatpush1.msra.mxu0 %v3697
      %3769 = vmatprep.subr.mxu0 %v3696
      %3770 = vmatpush1.msra.mxu0 %v3695
      %3771 = vmatprep.subr.mxu0 %v3694
      %3772 = vmatpush1.msra.mxu0 %v3693
      %3773 = vmatprep.subr.mxu0 %v3692
      %3774 = vmatpush1.msra.mxu0 %v3691
      %3775 = vmatprep.subr.mxu0 %v3690
      %3776 = vmatpush1.msra.mxu0 %v3689
      %3777 = vmatprep.subr.mxu0 %v3688
      %3778 = vmatpush1.msra.mxu0 %v3687
      %3779 = vmatprep.subr.mxu0 %v3686
      %3780 = vmatpush1.msra.mxu0 %v3685
      %3781 = vmatprep.subr.mxu0 0.0
      %3782 = vmatpush2.msra.mxu0 0.0
      %3783 = vmatprep.subr.mxu0 0.0
      %3784 = vmatpush2.msra.mxu0 0.0
      %3785 = vmatprep.subr.mxu0 0.0
      %3786 = vmatpush2.msra.mxu0 0.0
      %3787 = vmatprep.subr.mxu0 0.0
      %3788 = vmatpush2.msra.mxu0 0.0
      %3789 = vmatprep.subr.mxu0 0.0
      %3790 = vmatpush2.msra.mxu0 0.0
      %3791 = vmatprep.subr.mxu0 0.0
      %3792 = vmatpush2.msra.mxu0 0.0
      %3793 = vmatprep.subr.mxu0 0.0
      %3794 = vmatpush2.msra.mxu0 0.0
      %3795 = vmatprep.subr.mxu0 0.0
      %3796 = vmatpush2.msra.mxu0 0.0
      %3797 = vmatprep.subr.mxu0 0.0
      %3798 = vmatpush2.msra.mxu0 0.0
      %3799 = vmatprep.subr.mxu0 0.0
      %3800 = vmatpush2.msra.mxu0 0.0
      %3801 = vmatprep.subr.mxu0 0.0
      %3802 = vmatpush2.msra.mxu0 0.0
      %3803 = vmatprep.subr.mxu0 0.0
      %3804 = vmatpush2.msra.mxu0 0.0
      %3805 = vmatprep.subr.mxu0 0.0
      %3806 = vmatpush2.msra.mxu0 0.0
      %3807 = vmatprep.subr.mxu0 0.0
      %3808 = vmatpush2.msra.mxu0 0.0
      %3809 = vmatprep.subr.mxu0 0.0
      %3810 = vmatpush2.msra.mxu0 0.0
      %3811 = vmatprep.subr.mxu0 0.0
      %3812 = vmatpush2.msra.mxu0 0.0
      %3813 = vmatprep.mubr.f32.mxu0 0.0
      %3814 = vmatmul.mubr.f32.gmra.mxu0 %v3540
      %v3815 = vpop.f32.mrf.mxu0
      %v3816 = vadd.f32 0.0, %v3815
      %v3817 = vpop.f32.mrf.mxu0
      %v3818 = vadd.f32 0.0, %v3817
      %3819 = vdwg.mxu0
      %v3820 = vmul.f32 %v3816, %v742
      %v3821 = vmul.f32 %v3818, %v746
      %v3822 = vadd.f32 %v3489, %v3820
      %v3823 = vadd.f32 %v3490, %v3821
      %s3824 = scalar_lea.vmem %s5, 16
      %v3825 = vld [vmem:[%s3824] sm:$0xff]
      %3826 = vrot.lane.b32.xlu0 %v3491, 126
      %v3827 = vpop.permute.xlu0 %3826
      %3828 = vrot.lane.b32.xlu0 %v3492, 126
      %v3829 = vpop.permute.xlu0 %3828
      %3830 = vrot.lane.b32.xlu0 %v3493, 126
      %v3831 = vpop.permute.xlu0 %3830
      %3832 = vrot.lane.b32.xlu0 %v3494, 126
      %v3833 = vpop.permute.xlu0 %3832
      %3834 = vrot.lane.b32.xlu0 %v3495, 126
      %v3835 = vpop.permute.xlu0 %3834
      %3836 = vrot.lane.b32.xlu0 %v3496, 126
      %v3837 = vpop.permute.xlu0 %3836
      %3838 = vrot.lane.b32.xlu0 %v3497, 126
      %v3839 = vpop.permute.xlu0 %3838
      %3840 = vrot.lane.b32.xlu0 %v3498, 126
      %v3841 = vpop.permute.xlu0 %3840
      %3842 = vrot.lane.b32.xlu0 %v3499, 126
      %v3843 = vpop.permute.xlu0 %3842
      %3844 = vrot.lane.b32.xlu0 %v3500, 126
      %v3845 = vpop.permute.xlu0 %3844
      %3846 = vrot.lane.b32.xlu0 %v3501, 126
      %v3847 = vpop.permute.xlu0 %3846
      %3848 = vrot.lane.b32.xlu0 %v3502, 126
      %v3849 = vpop.permute.xlu0 %3848
      %3850 = vrot.lane.b32.xlu0 %v3503, 126
      %v3851 = vpop.permute.xlu0 %3850
      %3852 = vrot.lane.b32.xlu0 %v3504, 126
      %v3853 = vpop.permute.xlu0 %3852
      %3854 = vrot.lane.b32.xlu0 %v3505, 126
      %v3855 = vpop.permute.xlu0 %3854
      %3856 = vrot.lane.b32.xlu0 %v3506, 126
      %v3857 = vpop.permute.xlu0 %3856
      %3858 = vrot.lane.b32.xlu0 %v3507, 126
      %v3859 = vpop.permute.xlu0 %3858
      %3860 = vrot.lane.b32.xlu0 %v3508, 126
      %v3861 = vpop.permute.xlu0 %3860
      %3862 = vrot.lane.b32.xlu0 %v3509, 126
      %v3863 = vpop.permute.xlu0 %3862
      %3864 = vrot.lane.b32.xlu0 %v3510, 126
      %v3865 = vpop.permute.xlu0 %3864
      %3866 = vrot.lane.b32.xlu0 %v3511, 126
      %v3867 = vpop.permute.xlu0 %3866
      %3868 = vrot.lane.b32.xlu0 %v3512, 126
      %v3869 = vpop.permute.xlu0 %3868
      %3870 = vrot.lane.b32.xlu0 %v3513, 126
      %v3871 = vpop.permute.xlu0 %3870
      %3872 = vrot.lane.b32.xlu0 %v3514, 126
      %v3873 = vpop.permute.xlu0 %3872
      %3874 = vrot.lane.b32.xlu0 %v3515, 126
      %v3875 = vpop.permute.xlu0 %3874
      %3876 = vrot.lane.b32.xlu0 %v3516, 126
      %v3877 = vpop.permute.xlu0 %3876
      %3878 = vrot.lane.b32.xlu0 %v3517, 126
      %v3879 = vpop.permute.xlu0 %3878
      %3880 = vrot.lane.b32.xlu0 %v3518, 126
      %v3881 = vpop.permute.xlu0 %3880
      %3882 = vrot.lane.b32.xlu0 %v3519, 126
      %v3883 = vpop.permute.xlu0 %3882
      %3884 = vrot.lane.b32.xlu0 %v3520, 126
      %v3885 = vpop.permute.xlu0 %3884
      %3886 = vrot.lane.b32.xlu0 %v3521, 126
      %v3887 = vpop.permute.xlu0 %3886
      %3888 = vrot.lane.b32.xlu0 %v3522, 126
      %v3889 = vpop.permute.xlu0 %3888
      %3890 = vrot.lane.b32.xlu0 %v3523, 126
      %v3891 = vpop.permute.xlu0 %3890
      %3892 = vrot.lane.b32.xlu0 %v3524, 126
      %v3893 = vpop.permute.xlu0 %3892
      %3894 = vrot.lane.b32.xlu0 %v3525, 126
      %v3895 = vpop.permute.xlu0 %3894
      %3896 = vrot.lane.b32.xlu0 %v3526, 126
      %v3897 = vpop.permute.xlu0 %3896
      %3898 = vrot.lane.b32.xlu0 %v3527, 126
      %v3899 = vpop.permute.xlu0 %3898
      %3900 = vrot.lane.b32.xlu0 %v3528, 126
      %v3901 = vpop.permute.xlu0 %3900
      %3902 = vrot.lane.b32.xlu0 %v3529, 126
      %v3903 = vpop.permute.xlu0 %3902
      %3904 = vrot.lane.b32.xlu0 %v3530, 126
      %v3905 = vpop.permute.xlu0 %3904
      %3906 = vrot.lane.b32.xlu0 %v3531, 126
      %v3907 = vpop.permute.xlu0 %3906
      %3908 = vrot.lane.b32.xlu0 %v3532, 126
      %v3909 = vpop.permute.xlu0 %3908
      %3910 = vrot.lane.b32.xlu0 %v3533, 126
      %v3911 = vpop.permute.xlu0 %3910
      %3912 = vrot.lane.b32.xlu0 %v3534, 126
      %v3913 = vpop.permute.xlu0 %3912
      %3914 = vrot.lane.b32.xlu0 %v3535, 126
      %v3915 = vpop.permute.xlu0 %3914
      %3916 = vrot.lane.b32.xlu0 %v3536, 126
      %v3917 = vpop.permute.xlu0 %3916
      %3918 = vrot.lane.b32.xlu0 %v3537, 126
      %v3919 = vpop.permute.xlu0 %3918
      %3920 = vrot.lane.b32.xlu0 %v3538, 126
      %v3921 = vpop.permute.xlu0 %3920
      %v3922 = vsel %vm1081, %v3827, %v3829
      %v3923 = vsel %vm1081, %v3829, %v3831
      %v3924 = vsel %vm1081, %v3833, %v3835
      %v3925 = vsel %vm1081, %v3835, %v3837
      %v3926 = vsel %vm1081, %v3839, %v3841
      %v3927 = vsel %vm1081, %v3841, %v3843
      %v3928 = vsel %vm1081, %v3845, %v3847
      %v3929 = vsel %vm1081, %v3847, %v3849
      %v3930 = vsel %vm1081, %v3851, %v3853
      %v3931 = vsel %vm1081, %v3853, %v3855
      %v3932 = vsel %vm1081, %v3857, %v3859
      %v3933 = vsel %vm1081, %v3859, %v3861
      %v3934 = vsel %vm1081, %v3863, %v3865
      %v3935 = vsel %vm1081, %v3865, %v3867
      %v3936 = vsel %vm1081, %v3869, %v3871
      %v3937 = vsel %vm1081, %v3871, %v3873
      %v3938 = vsel %vm1081, %v3875, %v3877
      %v3939 = vsel %vm1081, %v3877, %v3879
      %v3940 = vsel %vm1081, %v3881, %v3883
      %v3941 = vsel %vm1081, %v3883, %v3885
      %v3942 = vsel %vm1081, %v3887, %v3889
      %v3943 = vsel %vm1081, %v3889, %v3891
      %v3944 = vsel %vm1081, %v3893, %v3895
      %v3945 = vsel %vm1081, %v3895, %v3897
      %v3946 = vsel %vm1081, %v3899, %v3901
      %v3947 = vsel %vm1081, %v3901, %v3903
      %v3948 = vsel %vm1081, %v3905, %v3907
      %v3949 = vsel %vm1081, %v3907, %v3909
      %v3950 = vsel %vm1081, %v3911, %v3913
      %v3951 = vsel %vm1081, %v3913, %v3915
      %v3952 = vsel %vm1081, %v3917, %v3919
      %v3953 = vsel %vm1081, %v3919, %v3921
      %3986 = vmatprep.subr.mxu0 %v3953
      %3987 = vmatpush1.msra.mxu0 %v3952
      %3988 = vmatprep.subr.mxu0 %v3951
      %3989 = vmatpush1.msra.mxu0 %v3950
      %3990 = vmatprep.subr.mxu0 %v3949
      %3991 = vmatpush1.msra.mxu0 %v3948
      %3992 = vmatprep.subr.mxu0 %v3947
      %3993 = vmatpush1.msra.mxu0 %v3946
      %3994 = vmatprep.subr.mxu0 %v3945
      %3995 = vmatpush1.msra.mxu0 %v3944
      %3996 = vmatprep.subr.mxu0 %v3943
      %3997 = vmatpush1.msra.mxu0 %v3942
      %3998 = vmatprep.subr.mxu0 %v3941
      %3999 = vmatpush1.msra.mxu0 %v3940
      %4000 = vmatprep.subr.mxu0 %v3939
      %4001 = vmatpush1.msra.mxu0 %v3938
      %4002 = vmatprep.subr.mxu0 %v3937
      %4003 = vmatpush1.msra.mxu0 %v3936
      %4004 = vmatprep.subr.mxu0 %v3935
      %4005 = vmatpush1.msra.mxu0 %v3934
      %4006 = vmatprep.subr.mxu0 %v3933
      %4007 = vmatpush1.msra.mxu0 %v3932
      %4008 = vmatprep.subr.mxu0 %v3931
      %4009 = vmatpush1.msra.mxu0 %v3930
      %4010 = vmatprep.subr.mxu0 %v3929
      %4011 = vmatpush1.msra.mxu0 %v3928
      %4012 = vmatprep.subr.mxu0 %v3927
      %4013 = vmatpush1.msra.mxu0 %v3926
      %4014 = vmatprep.subr.mxu0 %v3925
      %4015 = vmatpush1.msra.mxu0 %v3924
      %4016 = vmatprep.subr.mxu0 %v3923
      %4017 = vmatpush1.msra.mxu0 %v3922
      %4018 = vmatprep.subr.mxu0 0.0
      %4019 = vmatpush2.msra.mxu0 0.0
      %4020 = vmatprep.subr.mxu0 0.0
      %4021 = vmatpush2.msra.mxu0 0.0
      %4022 = vmatprep.subr.mxu0 0.0
      %4023 = vmatpush2.msra.mxu0 0.0
      %4024 = vmatprep.subr.mxu0 0.0
      %4025 = vmatpush2.msra.mxu0 0.0
      %4026 = vmatprep.subr.mxu0 0.0
      %4027 = vmatpush2.msra.mxu0 0.0
      %4028 = vmatprep.subr.mxu0 0.0
      %4029 = vmatpush2.msra.mxu0 0.0
      %4030 = vmatprep.subr.mxu0 0.0
      %4031 = vmatpush2.msra.mxu0 0.0
      %4032 = vmatprep.subr.mxu0 0.0
      %4033 = vmatpush2.msra.mxu0 0.0
      %4034 = vmatprep.subr.mxu0 0.0
      %4035 = vmatpush2.msra.mxu0 0.0
      %4036 = vmatprep.subr.mxu0 0.0
      %4037 = vmatpush2.msra.mxu0 0.0
      %4038 = vmatprep.subr.mxu0 0.0
      %4039 = vmatpush2.msra.mxu0 0.0
      %4040 = vmatprep.subr.mxu0 0.0
      %4041 = vmatpush2.msra.mxu0 0.0
      %4042 = vmatprep.subr.mxu0 0.0
      %4043 = vmatpush2.msra.mxu0 0.0
      %4044 = vmatprep.subr.mxu0 0.0
      %4045 = vmatpush2.msra.mxu0 0.0
      %4046 = vmatprep.subr.mxu0 0.0
      %4047 = vmatpush2.msra.mxu0 0.0
      %4048 = vmatprep.subr.mxu0 0.0
      %4049 = vmatpush2.msra.mxu0 0.0
      %4050 = vmatprep.mubr.f32.mxu0 0.0
      %4051 = vmatmul.mubr.f32.gmra.mxu0 %v3825
      %v4052 = vpop.f32.mrf.mxu0
      %v4053 = vadd.f32 0.0, %v4052
      %v4054 = vpop.f32.mrf.mxu0
      %v4055 = vadd.f32 0.0, %v4054
      %4056 = vdwg.mxu0
      %v4057 = vmul.f32 %v4053, %v1036
      %v4058 = vmul.f32 %v4055, %v1040
      %v4059 = vadd.f32 %v3822, %v4057
      %v4060 = vadd.f32 %v3823, %v4058
      %s4061 = scalar_lea.vmem %s5, 24
      %v4062 = vld [vmem:[%s4061] sm:$0xff]
      %4063 = vrot.lane.b32.xlu0 %v3491, 112
      %v4064 = vpop.permute.xlu0 %4063
      %4065 = vrot.lane.b32.xlu0 %v3492, 112
      %v4066 = vpop.permute.xlu0 %4065
      %4067 = vrot.lane.b32.xlu0 %v3493, 112
      %v4068 = vpop.permute.xlu0 %4067
      %4069 = vrot.lane.b32.xlu0 %v3494, 112
      %v4070 = vpop.permute.xlu0 %4069
      %4071 = vrot.lane.b32.xlu0 %v3495, 112
      %v4072 = vpop.permute.xlu0 %4071
      %4073 = vrot.lane.b32.xlu0 %v3496, 112
      %v4074 = vpop.permute.xlu0 %4073
      %4075 = vrot.lane.b32.xlu0 %v3497, 112
      %v4076 = vpop.permute.xlu0 %4075
      %4077 = vrot.lane.b32.xlu0 %v3498, 112
      %v4078 = vpop.permute.xlu0 %4077
      %4079 = vrot.lane.b32.xlu0 %v3499, 112
      %v4080 = vpop.permute.xlu0 %4079
      %4081 = vrot.lane.b32.xlu0 %v3500, 112
      %v4082 = vpop.permute.xlu0 %4081
      %4083 = vrot.lane.b32.xlu0 %v3501, 112
      %v4084 = vpop.permute.xlu0 %4083
      %4085 = vrot.lane.b32.xlu0 %v3502, 112
      %v4086 = vpop.permute.xlu0 %4085
      %4087 = vrot.lane.b32.xlu0 %v3503, 112
      %v4088 = vpop.permute.xlu0 %4087
      %4089 = vrot.lane.b32.xlu0 %v3504, 112
      %v4090 = vpop.permute.xlu0 %4089
      %4091 = vrot.lane.b32.xlu0 %v3505, 112
      %v4092 = vpop.permute.xlu0 %4091
      %4093 = vrot.lane.b32.xlu0 %v3506, 112
      %v4094 = vpop.permute.xlu0 %4093
      %4095 = vrot.lane.b32.xlu0 %v3507, 112
      %v4096 = vpop.permute.xlu0 %4095
      %4097 = vrot.lane.b32.xlu0 %v3508, 112
      %v4098 = vpop.permute.xlu0 %4097
      %4099 = vrot.lane.b32.xlu0 %v3509, 112
      %v4100 = vpop.permute.xlu0 %4099
      %4101 = vrot.lane.b32.xlu0 %v3510, 112
      %v4102 = vpop.permute.xlu0 %4101
      %4103 = vrot.lane.b32.xlu0 %v3511, 112
      %v4104 = vpop.permute.xlu0 %4103
      %4105 = vrot.lane.b32.xlu0 %v3512, 112
      %v4106 = vpop.permute.xlu0 %4105
      %4107 = vrot.lane.b32.xlu0 %v3513, 112
      %v4108 = vpop.permute.xlu0 %4107
      %4109 = vrot.lane.b32.xlu0 %v3514, 112
      %v4110 = vpop.permute.xlu0 %4109
      %4111 = vrot.lane.b32.xlu0 %v3515, 112
      %v4112 = vpop.permute.xlu0 %4111
      %4113 = vrot.lane.b32.xlu0 %v3516, 112
      %v4114 = vpop.permute.xlu0 %4113
      %4115 = vrot.lane.b32.xlu0 %v3517, 112
      %v4116 = vpop.permute.xlu0 %4115
      %4117 = vrot.lane.b32.xlu0 %v3518, 112
      %v4118 = vpop.permute.xlu0 %4117
      %4119 = vrot.lane.b32.xlu0 %v3519, 112
      %v4120 = vpop.permute.xlu0 %4119
      %4121 = vrot.lane.b32.xlu0 %v3520, 112
      %v4122 = vpop.permute.xlu0 %4121
      %4123 = vrot.lane.b32.xlu0 %v3521, 112
      %v4124 = vpop.permute.xlu0 %4123
      %4125 = vrot.lane.b32.xlu0 %v3522, 112
      %v4126 = vpop.permute.xlu0 %4125
      %4127 = vrot.lane.b32.xlu0 %v3523, 112
      %v4128 = vpop.permute.xlu0 %4127
      %4129 = vrot.lane.b32.xlu0 %v3524, 112
      %v4130 = vpop.permute.xlu0 %4129
      %4131 = vrot.lane.b32.xlu0 %v3525, 112
      %v4132 = vpop.permute.xlu0 %4131
      %4133 = vrot.lane.b32.xlu0 %v3526, 112
      %v4134 = vpop.permute.xlu0 %4133
      %4135 = vrot.lane.b32.xlu0 %v3527, 112
      %v4136 = vpop.permute.xlu0 %4135
      %4137 = vrot.lane.b32.xlu0 %v3528, 112
      %v4138 = vpop.permute.xlu0 %4137
      %4139 = vrot.lane.b32.xlu0 %v3529, 112
      %v4140 = vpop.permute.xlu0 %4139
      %4141 = vrot.lane.b32.xlu0 %v3530, 112
      %v4142 = vpop.permute.xlu0 %4141
      %4143 = vrot.lane.b32.xlu0 %v3531, 112
      %v4144 = vpop.permute.xlu0 %4143
      %4145 = vrot.lane.b32.xlu0 %v3532, 112
      %v4146 = vpop.permute.xlu0 %4145
      %4147 = vrot.lane.b32.xlu0 %v3533, 112
      %v4148 = vpop.permute.xlu0 %4147
      %4149 = vrot.lane.b32.xlu0 %v3534, 112
      %v4150 = vpop.permute.xlu0 %4149
      %4151 = vrot.lane.b32.xlu0 %v3535, 112
      %v4152 = vpop.permute.xlu0 %4151
      %4153 = vrot.lane.b32.xlu0 %v3536, 112
      %v4154 = vpop.permute.xlu0 %4153
      %4155 = vrot.lane.b32.xlu0 %v3537, 112
      %v4156 = vpop.permute.xlu0 %4155
      %4157 = vrot.lane.b32.xlu0 %v3538, 112
      %v4158 = vpop.permute.xlu0 %4157
      %v4159 = vsel %vm1375, %v4064, %v4066
      %v4160 = vsel %vm1375, %v4066, %v4068
      %v4161 = vsel %vm1375, %v4070, %v4072
      %v4162 = vsel %vm1375, %v4072, %v4074
      %v4163 = vsel %vm1375, %v4076, %v4078
      %v4164 = vsel %vm1375, %v4078, %v4080
      %v4165 = vsel %vm1375, %v4082, %v4084
      %v4166 = vsel %vm1375, %v4084, %v4086
      %v4167 = vsel %vm1375, %v4088, %v4090
      %v4168 = vsel %vm1375, %v4090, %v4092
      %v4169 = vsel %vm1375, %v4094, %v4096
      %v4170 = vsel %vm1375, %v4096, %v4098
      %v4171 = vsel %vm1375, %v4100, %v4102
      %v4172 = vsel %vm1375, %v4102, %v4104
      %v4173 = vsel %vm1375, %v4106, %v4108
      %v4174 = vsel %vm1375, %v4108, %v4110
      %v4175 = vsel %vm1375, %v4112, %v4114
      %v4176 = vsel %vm1375, %v4114, %v4116
      %v4177 = vsel %vm1375, %v4118, %v4120
      %v4178 = vsel %vm1375, %v4120, %v4122
      %v4179 = vsel %vm1375, %v4124, %v4126
      %v4180 = vsel %vm1375, %v4126, %v4128
      %v4181 = vsel %vm1375, %v4130, %v4132
      %v4182 = vsel %vm1375, %v4132, %v4134
      %v4183 = vsel %vm1375, %v4136, %v4138
      %v4184 = vsel %vm1375, %v4138, %v4140
      %v4185 = vsel %vm1375, %v4142, %v4144
      %v4186 = vsel %vm1375, %v4144, %v4146
      %v4187 = vsel %vm1375, %v4148, %v4150
      %v4188 = vsel %vm1375, %v4150, %v4152
      %v4189 = vsel %vm1375, %v4154, %v4156
      %v4190 = vsel %vm1375, %v4156, %v4158
      %4223 = vmatprep.subr.mxu0 %v4190
      %4224 = vmatpush1.msra.mxu0 %v4189
      %4225 = vmatprep.subr.mxu0 %v4188
      %4226 = vmatpush1.msra.mxu0 %v4187
      %4227 = vmatprep.subr.mxu0 %v4186
      %4228 = vmatpush1.msra.mxu0 %v4185
      %4229 = vmatprep.subr.mxu0 %v4184
      %4230 = vmatpush1.msra.mxu0 %v4183
      %4231 = vmatprep.subr.mxu0 %v4182
      %4232 = vmatpush1.msra.mxu0 %v4181
      %4233 = vmatprep.subr.mxu0 %v4180
      %4234 = vmatpush1.msra.mxu0 %v4179
      %4235 = vmatprep.subr.mxu0 %v4178
      %4236 = vmatpush1.msra.mxu0 %v4177
      %4237 = vmatprep.subr.mxu0 %v4176
      %4238 = vmatpush1.msra.mxu0 %v4175
      %4239 = vmatprep.subr.mxu0 %v4174
      %4240 = vmatpush1.msra.mxu0 %v4173
      %4241 = vmatprep.subr.mxu0 %v4172
      %4242 = vmatpush1.msra.mxu0 %v4171
      %4243 = vmatprep.subr.mxu0 %v4170
      %4244 = vmatpush1.msra.mxu0 %v4169
      %4245 = vmatprep.subr.mxu0 %v4168
      %4246 = vmatpush1.msra.mxu0 %v4167
      %4247 = vmatprep.subr.mxu0 %v4166
      %4248 = vmatpush1.msra.mxu0 %v4165
      %4249 = vmatprep.subr.mxu0 %v4164
      %4250 = vmatpush1.msra.mxu0 %v4163
      %4251 = vmatprep.subr.mxu0 %v4162
      %4252 = vmatpush1.msra.mxu0 %v4161
      %4253 = vmatprep.subr.mxu0 %v4160
      %4254 = vmatpush1.msra.mxu0 %v4159
      %4255 = vmatprep.subr.mxu0 0.0
      %4256 = vmatpush2.msra.mxu0 0.0
      %4257 = vmatprep.subr.mxu0 0.0
      %4258 = vmatpush2.msra.mxu0 0.0
      %4259 = vmatprep.subr.mxu0 0.0
      %4260 = vmatpush2.msra.mxu0 0.0
      %4261 = vmatprep.subr.mxu0 0.0
      %4262 = vmatpush2.msra.mxu0 0.0
      %4263 = vmatprep.subr.mxu0 0.0
      %4264 = vmatpush2.msra.mxu0 0.0
      %4265 = vmatprep.subr.mxu0 0.0
      %4266 = vmatpush2.msra.mxu0 0.0
      %4267 = vmatprep.subr.mxu0 0.0
      %4268 = vmatpush2.msra.mxu0 0.0
      %4269 = vmatprep.subr.mxu0 0.0
      %4270 = vmatpush2.msra.mxu0 0.0
      %4271 = vmatprep.subr.mxu0 0.0
      %4272 = vmatpush2.msra.mxu0 0.0
      %4273 = vmatprep.subr.mxu0 0.0
      %4274 = vmatpush2.msra.mxu0 0.0
      %4275 = vmatprep.subr.mxu0 0.0
      %4276 = vmatpush2.msra.mxu0 0.0
      %4277 = vmatprep.subr.mxu0 0.0
      %4278 = vmatpush2.msra.mxu0 0.0
      %4279 = vmatprep.subr.mxu0 0.0
      %4280 = vmatpush2.msra.mxu0 0.0
      %4281 = vmatprep.subr.mxu0 0.0
      %4282 = vmatpush2.msra.mxu0 0.0
      %4283 = vmatprep.subr.mxu0 0.0
      %4284 = vmatpush2.msra.mxu0 0.0
      %4285 = vmatprep.subr.mxu0 0.0
      %4286 = vmatpush2.msra.mxu0 0.0
      %4287 = vmatprep.mubr.f32.mxu0 0.0
      %4288 = vmatmul.mubr.f32.gmra.mxu0 %v4062
      %v4289 = vpop.f32.mrf.mxu0
      %v4290 = vadd.f32 0.0, %v4289
      %v4291 = vpop.f32.mrf.mxu0
      %v4292 = vadd.f32 0.0, %v4291
      %4293 = vdwg.mxu0
      %v4294 = vmul.f32 %v4290, %v1330
      %v4295 = vmul.f32 %v4292, %v1334
      %v4296 = vadd.f32 %v4059, %v4294
      %v4297 = vadd.f32 %v4060, %v4295
      %s4298 = scalar_lea.vmem %s5, 32
      %v4299 = vld [vmem:[%s4298] sm:$0xff]
      %4300 = vrot.lane.b32.xlu0 %v3491, 111
      %v4301 = vpop.permute.xlu0 %4300
      %4302 = vrot.lane.b32.xlu0 %v3492, 111
      %v4303 = vpop.permute.xlu0 %4302
      %4304 = vrot.lane.b32.xlu0 %v3493, 111
      %v4305 = vpop.permute.xlu0 %4304
      %4306 = vrot.lane.b32.xlu0 %v3494, 111
      %v4307 = vpop.permute.xlu0 %4306
      %4308 = vrot.lane.b32.xlu0 %v3495, 111
      %v4309 = vpop.permute.xlu0 %4308
      %4310 = vrot.lane.b32.xlu0 %v3496, 111
      %v4311 = vpop.permute.xlu0 %4310
      %4312 = vrot.lane.b32.xlu0 %v3497, 111
      %v4313 = vpop.permute.xlu0 %4312
      %4314 = vrot.lane.b32.xlu0 %v3498, 111
      %v4315 = vpop.permute.xlu0 %4314
      %4316 = vrot.lane.b32.xlu0 %v3499, 111
      %v4317 = vpop.permute.xlu0 %4316
      %4318 = vrot.lane.b32.xlu0 %v3500, 111
      %v4319 = vpop.permute.xlu0 %4318
      %4320 = vrot.lane.b32.xlu0 %v3501, 111
      %v4321 = vpop.permute.xlu0 %4320
      %4322 = vrot.lane.b32.xlu0 %v3502, 111
      %v4323 = vpop.permute.xlu0 %4322
      %4324 = vrot.lane.b32.xlu0 %v3503, 111
      %v4325 = vpop.permute.xlu0 %4324
      %4326 = vrot.lane.b32.xlu0 %v3504, 111
      %v4327 = vpop.permute.xlu0 %4326
      %4328 = vrot.lane.b32.xlu0 %v3505, 111
      %v4329 = vpop.permute.xlu0 %4328
      %4330 = vrot.lane.b32.xlu0 %v3506, 111
      %v4331 = vpop.permute.xlu0 %4330
      %4332 = vrot.lane.b32.xlu0 %v3507, 111
      %v4333 = vpop.permute.xlu0 %4332
      %4334 = vrot.lane.b32.xlu0 %v3508, 111
      %v4335 = vpop.permute.xlu0 %4334
      %4336 = vrot.lane.b32.xlu0 %v3509, 111
      %v4337 = vpop.permute.xlu0 %4336
      %4338 = vrot.lane.b32.xlu0 %v3510, 111
      %v4339 = vpop.permute.xlu0 %4338
      %4340 = vrot.lane.b32.xlu0 %v3511, 111
      %v4341 = vpop.permute.xlu0 %4340
      %4342 = vrot.lane.b32.xlu0 %v3512, 111
      %v4343 = vpop.permute.xlu0 %4342
      %4344 = vrot.lane.b32.xlu0 %v3513, 111
      %v4345 = vpop.permute.xlu0 %4344
      %4346 = vrot.lane.b32.xlu0 %v3514, 111
      %v4347 = vpop.permute.xlu0 %4346
      %4348 = vrot.lane.b32.xlu0 %v3515, 111
      %v4349 = vpop.permute.xlu0 %4348
      %4350 = vrot.lane.b32.xlu0 %v3516, 111
      %v4351 = vpop.permute.xlu0 %4350
      %4352 = vrot.lane.b32.xlu0 %v3517, 111
      %v4353 = vpop.permute.xlu0 %4352
      %4354 = vrot.lane.b32.xlu0 %v3518, 111
      %v4355 = vpop.permute.xlu0 %4354
      %4356 = vrot.lane.b32.xlu0 %v3519, 111
      %v4357 = vpop.permute.xlu0 %4356
      %4358 = vrot.lane.b32.xlu0 %v3520, 111
      %v4359 = vpop.permute.xlu0 %4358
      %4360 = vrot.lane.b32.xlu0 %v3521, 111
      %v4361 = vpop.permute.xlu0 %4360
      %4362 = vrot.lane.b32.xlu0 %v3522, 111
      %v4363 = vpop.permute.xlu0 %4362
      %4364 = vrot.lane.b32.xlu0 %v3523, 111
      %v4365 = vpop.permute.xlu0 %4364
      %4366 = vrot.lane.b32.xlu0 %v3524, 111
      %v4367 = vpop.permute.xlu0 %4366
      %4368 = vrot.lane.b32.xlu0 %v3525, 111
      %v4369 = vpop.permute.xlu0 %4368
      %4370 = vrot.lane.b32.xlu0 %v3526, 111
      %v4371 = vpop.permute.xlu0 %4370
      %4372 = vrot.lane.b32.xlu0 %v3527, 111
      %v4373 = vpop.permute.xlu0 %4372
      %4374 = vrot.lane.b32.xlu0 %v3528, 111
      %v4375 = vpop.permute.xlu0 %4374
      %4376 = vrot.lane.b32.xlu0 %v3529, 111
      %v4377 = vpop.permute.xlu0 %4376
      %4378 = vrot.lane.b32.xlu0 %v3530, 111
      %v4379 = vpop.permute.xlu0 %4378
      %4380 = vrot.lane.b32.xlu0 %v3531, 111
      %v4381 = vpop.permute.xlu0 %4380
      %4382 = vrot.lane.b32.xlu0 %v3532, 111
      %v4383 = vpop.permute.xlu0 %4382
      %4384 = vrot.lane.b32.xlu0 %v3533, 111
      %v4385 = vpop.permute.xlu0 %4384
      %4386 = vrot.lane.b32.xlu0 %v3534, 111
      %v4387 = vpop.permute.xlu0 %4386
      %4388 = vrot.lane.b32.xlu0 %v3535, 111
      %v4389 = vpop.permute.xlu0 %4388
      %4390 = vrot.lane.b32.xlu0 %v3536, 111
      %v4391 = vpop.permute.xlu0 %4390
      %4392 = vrot.lane.b32.xlu0 %v3537, 111
      %v4393 = vpop.permute.xlu0 %4392
      %4394 = vrot.lane.b32.xlu0 %v3538, 111
      %v4395 = vpop.permute.xlu0 %4394
      %v4396 = vsel %vm1668, %v4301, %v4303
      %v4397 = vsel %vm1668, %v4303, %v4305
      %v4398 = vsel %vm1668, %v4307, %v4309
      %v4399 = vsel %vm1668, %v4309, %v4311
      %v4400 = vsel %vm1668, %v4313, %v4315
      %v4401 = vsel %vm1668, %v4315, %v4317
      %v4402 = vsel %vm1668, %v4319, %v4321
      %v4403 = vsel %vm1668, %v4321, %v4323
      %v4404 = vsel %vm1668, %v4325, %v4327
      %v4405 = vsel %vm1668, %v4327, %v4329
      %v4406 = vsel %vm1668, %v4331, %v4333
      %v4407 = vsel %vm1668, %v4333, %v4335
      %v4408 = vsel %vm1668, %v4337, %v4339
      %v4409 = vsel %vm1668, %v4339, %v4341
      %v4410 = vsel %vm1668, %v4343, %v4345
      %v4411 = vsel %vm1668, %v4345, %v4347
      %v4412 = vsel %vm1668, %v4349, %v4351
      %v4413 = vsel %vm1668, %v4351, %v4353
      %v4414 = vsel %vm1668, %v4355, %v4357
      %v4415 = vsel %vm1668, %v4357, %v4359
      %v4416 = vsel %vm1668, %v4361, %v4363
      %v4417 = vsel %vm1668, %v4363, %v4365
      %v4418 = vsel %vm1668, %v4367, %v4369
      %v4419 = vsel %vm1668, %v4369, %v4371
      %v4420 = vsel %vm1668, %v4373, %v4375
      %v4421 = vsel %vm1668, %v4375, %v4377
      %v4422 = vsel %vm1668, %v4379, %v4381
      %v4423 = vsel %vm1668, %v4381, %v4383
      %v4424 = vsel %vm1668, %v4385, %v4387
      %v4425 = vsel %vm1668, %v4387, %v4389
      %v4426 = vsel %vm1668, %v4391, %v4393
      %v4427 = vsel %vm1668, %v4393, %v4395
      %4460 = vmatprep.subr.mxu0 %v4427
      %4461 = vmatpush1.msra.mxu0 %v4426
      %4462 = vmatprep.subr.mxu0 %v4425
      %4463 = vmatpush1.msra.mxu0 %v4424
      %4464 = vmatprep.subr.mxu0 %v4423
      %4465 = vmatpush1.msra.mxu0 %v4422
      %4466 = vmatprep.subr.mxu0 %v4421
      %4467 = vmatpush1.msra.mxu0 %v4420
      %4468 = vmatprep.subr.mxu0 %v4419
      %4469 = vmatpush1.msra.mxu0 %v4418
      %4470 = vmatprep.subr.mxu0 %v4417
      %4471 = vmatpush1.msra.mxu0 %v4416
      %4472 = vmatprep.subr.mxu0 %v4415
      %4473 = vmatpush1.msra.mxu0 %v4414
      %4474 = vmatprep.subr.mxu0 %v4413
      %4475 = vmatpush1.msra.mxu0 %v4412
      %4476 = vmatprep.subr.mxu0 %v4411
      %4477 = vmatpush1.msra.mxu0 %v4410
      %4478 = vmatprep.subr.mxu0 %v4409
      %4479 = vmatpush1.msra.mxu0 %v4408
      %4480 = vmatprep.subr.mxu0 %v4407
      %4481 = vmatpush1.msra.mxu0 %v4406
      %4482 = vmatprep.subr.mxu0 %v4405
      %4483 = vmatpush1.msra.mxu0 %v4404
      %4484 = vmatprep.subr.mxu0 %v4403
      %4485 = vmatpush1.msra.mxu0 %v4402
      %4486 = vmatprep.subr.mxu0 %v4401
      %4487 = vmatpush1.msra.mxu0 %v4400
      %4488 = vmatprep.subr.mxu0 %v4399
      %4489 = vmatpush1.msra.mxu0 %v4398
      %4490 = vmatprep.subr.mxu0 %v4397
      %4491 = vmatpush1.msra.mxu0 %v4396
      %4492 = vmatprep.subr.mxu0 0.0
      %4493 = vmatpush2.msra.mxu0 0.0
      %4494 = vmatprep.subr.mxu0 0.0
      %4495 = vmatpush2.msra.mxu0 0.0
      %4496 = vmatprep.subr.mxu0 0.0
      %4497 = vmatpush2.msra.mxu0 0.0
      %4498 = vmatprep.subr.mxu0 0.0
      %4499 = vmatpush2.msra.mxu0 0.0
      %4500 = vmatprep.subr.mxu0 0.0
      %4501 = vmatpush2.msra.mxu0 0.0
      %4502 = vmatprep.subr.mxu0 0.0
      %4503 = vmatpush2.msra.mxu0 0.0
      %4504 = vmatprep.subr.mxu0 0.0
      %4505 = vmatpush2.msra.mxu0 0.0
      %4506 = vmatprep.subr.mxu0 0.0
      %4507 = vmatpush2.msra.mxu0 0.0
      %4508 = vmatprep.subr.mxu0 0.0
      %4509 = vmatpush2.msra.mxu0 0.0
      %4510 = vmatprep.subr.mxu0 0.0
      %4511 = vmatpush2.msra.mxu0 0.0
      %4512 = vmatprep.subr.mxu0 0.0
      %4513 = vmatpush2.msra.mxu0 0.0
      %4514 = vmatprep.subr.mxu0 0.0
      %4515 = vmatpush2.msra.mxu0 0.0
      %4516 = vmatprep.subr.mxu0 0.0
      %4517 = vmatpush2.msra.mxu0 0.0
      %4518 = vmatprep.subr.mxu0 0.0
      %4519 = vmatpush2.msra.mxu0 0.0
      %4520 = vmatprep.subr.mxu0 0.0
      %4521 = vmatpush2.msra.mxu0 0.0
      %4522 = vmatprep.subr.mxu0 0.0
      %4523 = vmatpush2.msra.mxu0 0.0
      %4524 = vmatprep.mubr.f32.mxu0 0.0
      %4525 = vmatmul.mubr.f32.gmra.mxu0 %v4299
      %v4526 = vpop.f32.mrf.mxu0
      %v4527 = vadd.f32 0.0, %v4526
      %v4528 = vpop.f32.mrf.mxu0
      %v4529 = vadd.f32 0.0, %v4528
      %4530 = vdwg.mxu0
      %v4531 = vmul.f32 %v4527, %v1624
      %v4532 = vmul.f32 %v4529, %v1628
      %v4533 = vadd.f32 %v4296, %v4531
      %v4534 = vadd.f32 %v4297, %v4532
      %s4535 = scalar_lea.vmem %s5, 40
      %v4536 = vld [vmem:[%s4535] sm:$0xff]
      %4537 = vrot.lane.b32.xlu0 %v3491, 110
      %v4538 = vpop.permute.xlu0 %4537
      %4539 = vrot.lane.b32.xlu0 %v3492, 110
      %v4540 = vpop.permute.xlu0 %4539
      %4541 = vrot.lane.b32.xlu0 %v3493, 110
      %v4542 = vpop.permute.xlu0 %4541
      %4543 = vrot.lane.b32.xlu0 %v3494, 110
      %v4544 = vpop.permute.xlu0 %4543
      %4545 = vrot.lane.b32.xlu0 %v3495, 110
      %v4546 = vpop.permute.xlu0 %4545
      %4547 = vrot.lane.b32.xlu0 %v3496, 110
      %v4548 = vpop.permute.xlu0 %4547
      %4549 = vrot.lane.b32.xlu0 %v3497, 110
      %v4550 = vpop.permute.xlu0 %4549
      %4551 = vrot.lane.b32.xlu0 %v3498, 110
      %v4552 = vpop.permute.xlu0 %4551
      %4553 = vrot.lane.b32.xlu0 %v3499, 110
      %v4554 = vpop.permute.xlu0 %4553
      %4555 = vrot.lane.b32.xlu0 %v3500, 110
      %v4556 = vpop.permute.xlu0 %4555
      %4557 = vrot.lane.b32.xlu0 %v3501, 110
      %v4558 = vpop.permute.xlu0 %4557
      %4559 = vrot.lane.b32.xlu0 %v3502, 110
      %v4560 = vpop.permute.xlu0 %4559
      %4561 = vrot.lane.b32.xlu0 %v3503, 110
      %v4562 = vpop.permute.xlu0 %4561
      %4563 = vrot.lane.b32.xlu0 %v3504, 110
      %v4564 = vpop.permute.xlu0 %4563
      %4565 = vrot.lane.b32.xlu0 %v3505, 110
      %v4566 = vpop.permute.xlu0 %4565
      %4567 = vrot.lane.b32.xlu0 %v3506, 110
      %v4568 = vpop.permute.xlu0 %4567
      %4569 = vrot.lane.b32.xlu0 %v3507, 110
      %v4570 = vpop.permute.xlu0 %4569
      %4571 = vrot.lane.b32.xlu0 %v3508, 110
      %v4572 = vpop.permute.xlu0 %4571
      %4573 = vrot.lane.b32.xlu0 %v3509, 110
      %v4574 = vpop.permute.xlu0 %4573
      %4575 = vrot.lane.b32.xlu0 %v3510, 110
      %v4576 = vpop.permute.xlu0 %4575
      %4577 = vrot.lane.b32.xlu0 %v3511, 110
      %v4578 = vpop.permute.xlu0 %4577
      %4579 = vrot.lane.b32.xlu0 %v3512, 110
      %v4580 = vpop.permute.xlu0 %4579
      %4581 = vrot.lane.b32.xlu0 %v3513, 110
      %v4582 = vpop.permute.xlu0 %4581
      %4583 = vrot.lane.b32.xlu0 %v3514, 110
      %v4584 = vpop.permute.xlu0 %4583
      %4585 = vrot.lane.b32.xlu0 %v3515, 110
      %v4586 = vpop.permute.xlu0 %4585
      %4587 = vrot.lane.b32.xlu0 %v3516, 110
      %v4588 = vpop.permute.xlu0 %4587
      %4589 = vrot.lane.b32.xlu0 %v3517, 110
      %v4590 = vpop.permute.xlu0 %4589
      %4591 = vrot.lane.b32.xlu0 %v3518, 110
      %v4592 = vpop.permute.xlu0 %4591
      %4593 = vrot.lane.b32.xlu0 %v3519, 110
      %v4594 = vpop.permute.xlu0 %4593
      %4595 = vrot.lane.b32.xlu0 %v3520, 110
      %v4596 = vpop.permute.xlu0 %4595
      %4597 = vrot.lane.b32.xlu0 %v3521, 110
      %v4598 = vpop.permute.xlu0 %4597
      %4599 = vrot.lane.b32.xlu0 %v3522, 110
      %v4600 = vpop.permute.xlu0 %4599
      %4601 = vrot.lane.b32.xlu0 %v3523, 110
      %v4602 = vpop.permute.xlu0 %4601
      %4603 = vrot.lane.b32.xlu0 %v3524, 110
      %v4604 = vpop.permute.xlu0 %4603
      %4605 = vrot.lane.b32.xlu0 %v3525, 110
      %v4606 = vpop.permute.xlu0 %4605
      %4607 = vrot.lane.b32.xlu0 %v3526, 110
      %v4608 = vpop.permute.xlu0 %4607
      %4609 = vrot.lane.b32.xlu0 %v3527, 110
      %v4610 = vpop.permute.xlu0 %4609
      %4611 = vrot.lane.b32.xlu0 %v3528, 110
      %v4612 = vpop.permute.xlu0 %4611
      %4613 = vrot.lane.b32.xlu0 %v3529, 110
      %v4614 = vpop.permute.xlu0 %4613
      %4615 = vrot.lane.b32.xlu0 %v3530, 110
      %v4616 = vpop.permute.xlu0 %4615
      %4617 = vrot.lane.b32.xlu0 %v3531, 110
      %v4618 = vpop.permute.xlu0 %4617
      %4619 = vrot.lane.b32.xlu0 %v3532, 110
      %v4620 = vpop.permute.xlu0 %4619
      %4621 = vrot.lane.b32.xlu0 %v3533, 110
      %v4622 = vpop.permute.xlu0 %4621
      %4623 = vrot.lane.b32.xlu0 %v3534, 110
      %v4624 = vpop.permute.xlu0 %4623
      %4625 = vrot.lane.b32.xlu0 %v3535, 110
      %v4626 = vpop.permute.xlu0 %4625
      %4627 = vrot.lane.b32.xlu0 %v3536, 110
      %v4628 = vpop.permute.xlu0 %4627
      %4629 = vrot.lane.b32.xlu0 %v3537, 110
      %v4630 = vpop.permute.xlu0 %4629
      %4631 = vrot.lane.b32.xlu0 %v3538, 110
      %v4632 = vpop.permute.xlu0 %4631
      %v4633 = vsel %vm1962, %v4538, %v4540
      %v4634 = vsel %vm1962, %v4540, %v4542
      %v4635 = vsel %vm1962, %v4544, %v4546
      %v4636 = vsel %vm1962, %v4546, %v4548
      %v4637 = vsel %vm1962, %v4550, %v4552
      %v4638 = vsel %vm1962, %v4552, %v4554
      %v4639 = vsel %vm1962, %v4556, %v4558
      %v4640 = vsel %vm1962, %v4558, %v4560
      %v4641 = vsel %vm1962, %v4562, %v4564
      %v4642 = vsel %vm1962, %v4564, %v4566
      %v4643 = vsel %vm1962, %v4568, %v4570
      %v4644 = vsel %vm1962, %v4570, %v4572
      %v4645 = vsel %vm1962, %v4574, %v4576
      %v4646 = vsel %vm1962, %v4576, %v4578
      %v4647 = vsel %vm1962, %v4580, %v4582
      %v4648 = vsel %vm1962, %v4582, %v4584
      %v4649 = vsel %vm1962, %v4586, %v4588
      %v4650 = vsel %vm1962, %v4588, %v4590
      %v4651 = vsel %vm1962, %v4592, %v4594
      %v4652 = vsel %vm1962, %v4594, %v4596
      %v4653 = vsel %vm1962, %v4598, %v4600
      %v4654 = vsel %vm1962, %v4600, %v4602
      %v4655 = vsel %vm1962, %v4604, %v4606
      %v4656 = vsel %vm1962, %v4606, %v4608
      %v4657 = vsel %vm1962, %v4610, %v4612
      %v4658 = vsel %vm1962, %v4612, %v4614
      %v4659 = vsel %vm1962, %v4616, %v4618
      %v4660 = vsel %vm1962, %v4618, %v4620
      %v4661 = vsel %vm1962, %v4622, %v4624
      %v4662 = vsel %vm1962, %v4624, %v4626
      %v4663 = vsel %vm1962, %v4628, %v4630
      %v4664 = vsel %vm1962, %v4630, %v4632
      %4697 = vmatprep.subr.mxu0 %v4664
      %4698 = vmatpush1.msra.mxu0 %v4663
      %4699 = vmatprep.subr.mxu0 %v4662
      %4700 = vmatpush1.msra.mxu0 %v4661
      %4701 = vmatprep.subr.mxu0 %v4660
      %4702 = vmatpush1.msra.mxu0 %v4659
      %4703 = vmatprep.subr.mxu0 %v4658
      %4704 = vmatpush1.msra.mxu0 %v4657
      %4705 = vmatprep.subr.mxu0 %v4656
      %4706 = vmatpush1.msra.mxu0 %v4655
      %4707 = vmatprep.subr.mxu0 %v4654
      %4708 = vmatpush1.msra.mxu0 %v4653
      %4709 = vmatprep.subr.mxu0 %v4652
      %4710 = vmatpush1.msra.mxu0 %v4651
      %4711 = vmatprep.subr.mxu0 %v4650
      %4712 = vmatpush1.msra.mxu0 %v4649
      %4713 = vmatprep.subr.mxu0 %v4648
      %4714 = vmatpush1.msra.mxu0 %v4647
      %4715 = vmatprep.subr.mxu0 %v4646
      %4716 = vmatpush1.msra.mxu0 %v4645
      %4717 = vmatprep.subr.mxu0 %v4644
      %4718 = vmatpush1.msra.mxu0 %v4643
      %4719 = vmatprep.subr.mxu0 %v4642
      %4720 = vmatpush1.msra.mxu0 %v4641
      %4721 = vmatprep.subr.mxu0 %v4640
      %4722 = vmatpush1.msra.mxu0 %v4639
      %4723 = vmatprep.subr.mxu0 %v4638
      %4724 = vmatpush1.msra.mxu0 %v4637
      %4725 = vmatprep.subr.mxu0 %v4636
      %4726 = vmatpush1.msra.mxu0 %v4635
      %4727 = vmatprep.subr.mxu0 %v4634
      %4728 = vmatpush1.msra.mxu0 %v4633
      %4729 = vmatprep.subr.mxu0 0.0
      %4730 = vmatpush2.msra.mxu0 0.0
      %4731 = vmatprep.subr.mxu0 0.0
      %4732 = vmatpush2.msra.mxu0 0.0
      %4733 = vmatprep.subr.mxu0 0.0
      %4734 = vmatpush2.msra.mxu0 0.0
      %4735 = vmatprep.subr.mxu0 0.0
      %4736 = vmatpush2.msra.mxu0 0.0
      %4737 = vmatprep.subr.mxu0 0.0
      %4738 = vmatpush2.msra.mxu0 0.0
      %4739 = vmatprep.subr.mxu0 0.0
      %4740 = vmatpush2.msra.mxu0 0.0
      %4741 = vmatprep.subr.mxu0 0.0
      %4742 = vmatpush2.msra.mxu0 0.0
      %4743 = vmatprep.subr.mxu0 0.0
      %4744 = vmatpush2.msra.mxu0 0.0
      %4745 = vmatprep.subr.mxu0 0.0
      %4746 = vmatpush2.msra.mxu0 0.0
      %4747 = vmatprep.subr.mxu0 0.0
      %4748 = vmatpush2.msra.mxu0 0.0
      %4749 = vmatprep.subr.mxu0 0.0
      %4750 = vmatpush2.msra.mxu0 0.0
      %4751 = vmatprep.subr.mxu0 0.0
      %4752 = vmatpush2.msra.mxu0 0.0
      %4753 = vmatprep.subr.mxu0 0.0
      %4754 = vmatpush2.msra.mxu0 0.0
      %4755 = vmatprep.subr.mxu0 0.0
      %4756 = vmatpush2.msra.mxu0 0.0
      %4757 = vmatprep.subr.mxu0 0.0
      %4758 = vmatpush2.msra.mxu0 0.0
      %4759 = vmatprep.subr.mxu0 0.0
      %4760 = vmatpush2.msra.mxu0 0.0
      %4761 = vmatprep.mubr.f32.mxu0 0.0
      %4762 = vmatmul.mubr.f32.gmra.mxu0 %v4536
      %v4763 = vpop.f32.mrf.mxu0
      %v4764 = vadd.f32 0.0, %v4763
      %v4765 = vpop.f32.mrf.mxu0
      %v4766 = vadd.f32 0.0, %v4765
      %4767 = vdwg.mxu0
      %v4768 = vmul.f32 %v4764, %v1917
      %v4769 = vmul.f32 %v4766, %v1921
      %v4770 = vadd.f32 %v4533, %v4768
      %v4771 = vadd.f32 %v4534, %v4769
      %s4772 = scalar_lea.vmem %s5, 48
      %v4773 = vld [vmem:[%s4772] sm:$0xff]
      %4774 = vrot.lane.b32.xlu0 %v3491, 96
      %v4775 = vpop.permute.xlu0 %4774
      %4776 = vrot.lane.b32.xlu0 %v3492, 96
      %v4777 = vpop.permute.xlu0 %4776
      %4778 = vrot.lane.b32.xlu0 %v3493, 96
      %v4779 = vpop.permute.xlu0 %4778
      %4780 = vrot.lane.b32.xlu0 %v3494, 96
      %v4781 = vpop.permute.xlu0 %4780
      %4782 = vrot.lane.b32.xlu0 %v3495, 96
      %v4783 = vpop.permute.xlu0 %4782
      %4784 = vrot.lane.b32.xlu0 %v3496, 96
      %v4785 = vpop.permute.xlu0 %4784
      %4786 = vrot.lane.b32.xlu0 %v3497, 96
      %v4787 = vpop.permute.xlu0 %4786
      %4788 = vrot.lane.b32.xlu0 %v3498, 96
      %v4789 = vpop.permute.xlu0 %4788
      %4790 = vrot.lane.b32.xlu0 %v3499, 96
      %v4791 = vpop.permute.xlu0 %4790
      %4792 = vrot.lane.b32.xlu0 %v3500, 96
      %v4793 = vpop.permute.xlu0 %4792
      %4794 = vrot.lane.b32.xlu0 %v3501, 96
      %v4795 = vpop.permute.xlu0 %4794
      %4796 = vrot.lane.b32.xlu0 %v3502, 96
      %v4797 = vpop.permute.xlu0 %4796
      %4798 = vrot.lane.b32.xlu0 %v3503, 96
      %v4799 = vpop.permute.xlu0 %4798
      %4800 = vrot.lane.b32.xlu0 %v3504, 96
      %v4801 = vpop.permute.xlu0 %4800
      %4802 = vrot.lane.b32.xlu0 %v3505, 96
      %v4803 = vpop.permute.xlu0 %4802
      %4804 = vrot.lane.b32.xlu0 %v3506, 96
      %v4805 = vpop.permute.xlu0 %4804
      %4806 = vrot.lane.b32.xlu0 %v3507, 96
      %v4807 = vpop.permute.xlu0 %4806
      %4808 = vrot.lane.b32.xlu0 %v3508, 96
      %v4809 = vpop.permute.xlu0 %4808
      %4810 = vrot.lane.b32.xlu0 %v3509, 96
      %v4811 = vpop.permute.xlu0 %4810
      %4812 = vrot.lane.b32.xlu0 %v3510, 96
      %v4813 = vpop.permute.xlu0 %4812
      %4814 = vrot.lane.b32.xlu0 %v3511, 96
      %v4815 = vpop.permute.xlu0 %4814
      %4816 = vrot.lane.b32.xlu0 %v3512, 96
      %v4817 = vpop.permute.xlu0 %4816
      %4818 = vrot.lane.b32.xlu0 %v3513, 96
      %v4819 = vpop.permute.xlu0 %4818
      %4820 = vrot.lane.b32.xlu0 %v3514, 96
      %v4821 = vpop.permute.xlu0 %4820
      %4822 = vrot.lane.b32.xlu0 %v3515, 96
      %v4823 = vpop.permute.xlu0 %4822
      %4824 = vrot.lane.b32.xlu0 %v3516, 96
      %v4825 = vpop.permute.xlu0 %4824
      %4826 = vrot.lane.b32.xlu0 %v3517, 96
      %v4827 = vpop.permute.xlu0 %4826
      %4828 = vrot.lane.b32.xlu0 %v3518, 96
      %v4829 = vpop.permute.xlu0 %4828
      %4830 = vrot.lane.b32.xlu0 %v3519, 96
      %v4831 = vpop.permute.xlu0 %4830
      %4832 = vrot.lane.b32.xlu0 %v3520, 96
      %v4833 = vpop.permute.xlu0 %4832
      %4834 = vrot.lane.b32.xlu0 %v3521, 96
      %v4835 = vpop.permute.xlu0 %4834
      %4836 = vrot.lane.b32.xlu0 %v3522, 96
      %v4837 = vpop.permute.xlu0 %4836
      %4838 = vrot.lane.b32.xlu0 %v3523, 96
      %v4839 = vpop.permute.xlu0 %4838
      %4840 = vrot.lane.b32.xlu0 %v3524, 96
      %v4841 = vpop.permute.xlu0 %4840
      %4842 = vrot.lane.b32.xlu0 %v3525, 96
      %v4843 = vpop.permute.xlu0 %4842
      %4844 = vrot.lane.b32.xlu0 %v3526, 96
      %v4845 = vpop.permute.xlu0 %4844
      %4846 = vrot.lane.b32.xlu0 %v3527, 96
      %v4847 = vpop.permute.xlu0 %4846
      %4848 = vrot.lane.b32.xlu0 %v3528, 96
      %v4849 = vpop.permute.xlu0 %4848
      %4850 = vrot.lane.b32.xlu0 %v3529, 96
      %v4851 = vpop.permute.xlu0 %4850
      %4852 = vrot.lane.b32.xlu0 %v3530, 96
      %v4853 = vpop.permute.xlu0 %4852
      %4854 = vrot.lane.b32.xlu0 %v3531, 96
      %v4855 = vpop.permute.xlu0 %4854
      %4856 = vrot.lane.b32.xlu0 %v3532, 96
      %v4857 = vpop.permute.xlu0 %4856
      %4858 = vrot.lane.b32.xlu0 %v3533, 96
      %v4859 = vpop.permute.xlu0 %4858
      %4860 = vrot.lane.b32.xlu0 %v3534, 96
      %v4861 = vpop.permute.xlu0 %4860
      %4862 = vrot.lane.b32.xlu0 %v3535, 96
      %v4863 = vpop.permute.xlu0 %4862
      %4864 = vrot.lane.b32.xlu0 %v3536, 96
      %v4865 = vpop.permute.xlu0 %4864
      %4866 = vrot.lane.b32.xlu0 %v3537, 96
      %v4867 = vpop.permute.xlu0 %4866
      %4868 = vrot.lane.b32.xlu0 %v3538, 96
      %v4869 = vpop.permute.xlu0 %4868
      %v4870 = vsel %vm2256, %v4775, %v4777
      %v4871 = vsel %vm2256, %v4777, %v4779
      %v4872 = vsel %vm2256, %v4781, %v4783
      %v4873 = vsel %vm2256, %v4783, %v4785
      %v4874 = vsel %vm2256, %v4787, %v4789
      %v4875 = vsel %vm2256, %v4789, %v4791
      %v4876 = vsel %vm2256, %v4793, %v4795
      %v4877 = vsel %vm2256, %v4795, %v4797
      %v4878 = vsel %vm2256, %v4799, %v4801
      %v4879 = vsel %vm2256, %v4801, %v4803
      %v4880 = vsel %vm2256, %v4805, %v4807
      %v4881 = vsel %vm2256, %v4807, %v4809
      %v4882 = vsel %vm2256, %v4811, %v4813
      %v4883 = vsel %vm2256, %v4813, %v4815
      %v4884 = vsel %vm2256, %v4817, %v4819
      %v4885 = vsel %vm2256, %v4819, %v4821
      %v4886 = vsel %vm2256, %v4823, %v4825
      %v4887 = vsel %vm2256, %v4825, %v4827
      %v4888 = vsel %vm2256, %v4829, %v4831
      %v4889 = vsel %vm2256, %v4831, %v4833
      %v4890 = vsel %vm2256, %v4835, %v4837
      %v4891 = vsel %vm2256, %v4837, %v4839
      %v4892 = vsel %vm2256, %v4841, %v4843
      %v4893 = vsel %vm2256, %v4843, %v4845
      %v4894 = vsel %vm2256, %v4847, %v4849
      %v4895 = vsel %vm2256, %v4849, %v4851
      %v4896 = vsel %vm2256, %v4853, %v4855
      %v4897 = vsel %vm2256, %v4855, %v4857
      %v4898 = vsel %vm2256, %v4859, %v4861
      %v4899 = vsel %vm2256, %v4861, %v4863
      %v4900 = vsel %vm2256, %v4865, %v4867
      %v4901 = vsel %vm2256, %v4867, %v4869
      %4934 = vmatprep.subr.mxu0 %v4901
      %4935 = vmatpush1.msra.mxu0 %v4900
      %4936 = vmatprep.subr.mxu0 %v4899
      %4937 = vmatpush1.msra.mxu0 %v4898
      %4938 = vmatprep.subr.mxu0 %v4897
      %4939 = vmatpush1.msra.mxu0 %v4896
      %4940 = vmatprep.subr.mxu0 %v4895
      %4941 = vmatpush1.msra.mxu0 %v4894
      %4942 = vmatprep.subr.mxu0 %v4893
      %4943 = vmatpush1.msra.mxu0 %v4892
      %4944 = vmatprep.subr.mxu0 %v4891
      %4945 = vmatpush1.msra.mxu0 %v4890
      %4946 = vmatprep.subr.mxu0 %v4889
      %4947 = vmatpush1.msra.mxu0 %v4888
      %4948 = vmatprep.subr.mxu0 %v4887
      %4949 = vmatpush1.msra.mxu0 %v4886
      %4950 = vmatprep.subr.mxu0 %v4885
      %4951 = vmatpush1.msra.mxu0 %v4884
      %4952 = vmatprep.subr.mxu0 %v4883
      %4953 = vmatpush1.msra.mxu0 %v4882
      %4954 = vmatprep.subr.mxu0 %v4881
      %4955 = vmatpush1.msra.mxu0 %v4880
      %4956 = vmatprep.subr.mxu0 %v4879
      %4957 = vmatpush1.msra.mxu0 %v4878
      %4958 = vmatprep.subr.mxu0 %v4877
      %4959 = vmatpush1.msra.mxu0 %v4876
      %4960 = vmatprep.subr.mxu0 %v4875
      %4961 = vmatpush1.msra.mxu0 %v4874
      %4962 = vmatprep.subr.mxu0 %v4873
      %4963 = vmatpush1.msra.mxu0 %v4872
      %4964 = vmatprep.subr.mxu0 %v4871
      %4965 = vmatpush1.msra.mxu0 %v4870
      %4966 = vmatprep.subr.mxu0 0.0
      %4967 = vmatpush2.msra.mxu0 0.0
      %4968 = vmatprep.subr.mxu0 0.0
      %4969 = vmatpush2.msra.mxu0 0.0
      %4970 = vmatprep.subr.mxu0 0.0
      %4971 = vmatpush2.msra.mxu0 0.0
      %4972 = vmatprep.subr.mxu0 0.0
      %4973 = vmatpush2.msra.mxu0 0.0
      %4974 = vmatprep.subr.mxu0 0.0
      %4975 = vmatpush2.msra.mxu0 0.0
      %4976 = vmatprep.subr.mxu0 0.0
      %4977 = vmatpush2.msra.mxu0 0.0
      %4978 = vmatprep.subr.mxu0 0.0
      %4979 = vmatpush2.msra.mxu0 0.0
      %4980 = vmatprep.subr.mxu0 0.0
      %4981 = vmatpush2.msra.mxu0 0.0
      %4982 = vmatprep.subr.mxu0 0.0
      %4983 = vmatpush2.msra.mxu0 0.0
      %4984 = vmatprep.subr.mxu0 0.0
      %4985 = vmatpush2.msra.mxu0 0.0
      %4986 = vmatprep.subr.mxu0 0.0
      %4987 = vmatpush2.msra.mxu0 0.0
      %4988 = vmatprep.subr.mxu0 0.0
      %4989 = vmatpush2.msra.mxu0 0.0
      %4990 = vmatprep.subr.mxu0 0.0
      %4991 = vmatpush2.msra.mxu0 0.0
      %4992 = vmatprep.subr.mxu0 0.0
      %4993 = vmatpush2.msra.mxu0 0.0
      %4994 = vmatprep.subr.mxu0 0.0
      %4995 = vmatpush2.msra.mxu0 0.0
      %4996 = vmatprep.subr.mxu0 0.0
      %4997 = vmatpush2.msra.mxu0 0.0
      %4998 = vmatprep.mubr.f32.mxu0 0.0
      %4999 = vmatmul.mubr.f32.gmra.mxu0 %v4773
      %v5000 = vpop.f32.mrf.mxu0
      %v5001 = vadd.f32 0.0, %v5000
      %v5002 = vpop.f32.mrf.mxu0
      %v5003 = vadd.f32 0.0, %v5002
      %5004 = vdwg.mxu0
      %v5005 = vmul.f32 %v5001, %v2211
      %v5006 = vmul.f32 %v5003, %v2215
      %v5007 = vadd.f32 %v4770, %v5005
      %v5008 = vadd.f32 %v4771, %v5006
      %s5009 = scalar_lea.vmem %s5, 56
      %v5010 = vld [vmem:[%s5009] sm:$0xff]
      %5011 = vrot.lane.b32.xlu0 %v3491, 95
      %v5012 = vpop.permute.xlu0 %5011
      %5013 = vrot.lane.b32.xlu0 %v3492, 95
      %v5014 = vpop.permute.xlu0 %5013
      %5015 = vrot.lane.b32.xlu0 %v3493, 95
      %v5016 = vpop.permute.xlu0 %5015
      %5017 = vrot.lane.b32.xlu0 %v3494, 95
      %v5018 = vpop.permute.xlu0 %5017
      %5019 = vrot.lane.b32.xlu0 %v3495, 95
      %v5020 = vpop.permute.xlu0 %5019
      %5021 = vrot.lane.b32.xlu0 %v3496, 95
      %v5022 = vpop.permute.xlu0 %5021
      %5023 = vrot.lane.b32.xlu0 %v3497, 95
      %v5024 = vpop.permute.xlu0 %5023
      %5025 = vrot.lane.b32.xlu0 %v3498, 95
      %v5026 = vpop.permute.xlu0 %5025
      %5027 = vrot.lane.b32.xlu0 %v3499, 95
      %v5028 = vpop.permute.xlu0 %5027
      %5029 = vrot.lane.b32.xlu0 %v3500, 95
      %v5030 = vpop.permute.xlu0 %5029
      %5031 = vrot.lane.b32.xlu0 %v3501, 95
      %v5032 = vpop.permute.xlu0 %5031
      %5033 = vrot.lane.b32.xlu0 %v3502, 95
      %v5034 = vpop.permute.xlu0 %5033
      %5035 = vrot.lane.b32.xlu0 %v3503, 95
      %v5036 = vpop.permute.xlu0 %5035
      %5037 = vrot.lane.b32.xlu0 %v3504, 95
      %v5038 = vpop.permute.xlu0 %5037
      %5039 = vrot.lane.b32.xlu0 %v3505, 95
      %v5040 = vpop.permute.xlu0 %5039
      %5041 = vrot.lane.b32.xlu0 %v3506, 95
      %v5042 = vpop.permute.xlu0 %5041
      %5043 = vrot.lane.b32.xlu0 %v3507, 95
      %v5044 = vpop.permute.xlu0 %5043
      %5045 = vrot.lane.b32.xlu0 %v3508, 95
      %v5046 = vpop.permute.xlu0 %5045
      %5047 = vrot.lane.b32.xlu0 %v3509, 95
      %v5048 = vpop.permute.xlu0 %5047
      %5049 = vrot.lane.b32.xlu0 %v3510, 95
      %v5050 = vpop.permute.xlu0 %5049
      %5051 = vrot.lane.b32.xlu0 %v3511, 95
      %v5052 = vpop.permute.xlu0 %5051
      %5053 = vrot.lane.b32.xlu0 %v3512, 95
      %v5054 = vpop.permute.xlu0 %5053
      %5055 = vrot.lane.b32.xlu0 %v3513, 95
      %v5056 = vpop.permute.xlu0 %5055
      %5057 = vrot.lane.b32.xlu0 %v3514, 95
      %v5058 = vpop.permute.xlu0 %5057
      %5059 = vrot.lane.b32.xlu0 %v3515, 95
      %v5060 = vpop.permute.xlu0 %5059
      %5061 = vrot.lane.b32.xlu0 %v3516, 95
      %v5062 = vpop.permute.xlu0 %5061
      %5063 = vrot.lane.b32.xlu0 %v3517, 95
      %v5064 = vpop.permute.xlu0 %5063
      %5065 = vrot.lane.b32.xlu0 %v3518, 95
      %v5066 = vpop.permute.xlu0 %5065
      %5067 = vrot.lane.b32.xlu0 %v3519, 95
      %v5068 = vpop.permute.xlu0 %5067
      %5069 = vrot.lane.b32.xlu0 %v3520, 95
      %v5070 = vpop.permute.xlu0 %5069
      %5071 = vrot.lane.b32.xlu0 %v3521, 95
      %v5072 = vpop.permute.xlu0 %5071
      %5073 = vrot.lane.b32.xlu0 %v3522, 95
      %v5074 = vpop.permute.xlu0 %5073
      %5075 = vrot.lane.b32.xlu0 %v3523, 95
      %v5076 = vpop.permute.xlu0 %5075
      %5077 = vrot.lane.b32.xlu0 %v3524, 95
      %v5078 = vpop.permute.xlu0 %5077
      %5079 = vrot.lane.b32.xlu0 %v3525, 95
      %v5080 = vpop.permute.xlu0 %5079
      %5081 = vrot.lane.b32.xlu0 %v3526, 95
      %v5082 = vpop.permute.xlu0 %5081
      %5083 = vrot.lane.b32.xlu0 %v3527, 95
      %v5084 = vpop.permute.xlu0 %5083
      %5085 = vrot.lane.b32.xlu0 %v3528, 95
      %v5086 = vpop.permute.xlu0 %5085
      %5087 = vrot.lane.b32.xlu0 %v3529, 95
      %v5088 = vpop.permute.xlu0 %5087
      %5089 = vrot.lane.b32.xlu0 %v3530, 95
      %v5090 = vpop.permute.xlu0 %5089
      %5091 = vrot.lane.b32.xlu0 %v3531, 95
      %v5092 = vpop.permute.xlu0 %5091
      %5093 = vrot.lane.b32.xlu0 %v3532, 95
      %v5094 = vpop.permute.xlu0 %5093
      %5095 = vrot.lane.b32.xlu0 %v3533, 95
      %v5096 = vpop.permute.xlu0 %5095
      %5097 = vrot.lane.b32.xlu0 %v3534, 95
      %v5098 = vpop.permute.xlu0 %5097
      %5099 = vrot.lane.b32.xlu0 %v3535, 95
      %v5100 = vpop.permute.xlu0 %5099
      %5101 = vrot.lane.b32.xlu0 %v3536, 95
      %v5102 = vpop.permute.xlu0 %5101
      %5103 = vrot.lane.b32.xlu0 %v3537, 95
      %v5104 = vpop.permute.xlu0 %5103
      %5105 = vrot.lane.b32.xlu0 %v3538, 95
      %v5106 = vpop.permute.xlu0 %5105
      %v5107 = vsel %vm2550, %v5012, %v5014
      %v5108 = vsel %vm2550, %v5014, %v5016
      %v5109 = vsel %vm2550, %v5018, %v5020
      %v5110 = vsel %vm2550, %v5020, %v5022
      %v5111 = vsel %vm2550, %v5024, %v5026
      %v5112 = vsel %vm2550, %v5026, %v5028
      %v5113 = vsel %vm2550, %v5030, %v5032
      %v5114 = vsel %vm2550, %v5032, %v5034
      %v5115 = vsel %vm2550, %v5036, %v5038
      %v5116 = vsel %vm2550, %v5038, %v5040
      %v5117 = vsel %vm2550, %v5042, %v5044
      %v5118 = vsel %vm2550, %v5044, %v5046
      %v5119 = vsel %vm2550, %v5048, %v5050
      %v5120 = vsel %vm2550, %v5050, %v5052
      %v5121 = vsel %vm2550, %v5054, %v5056
      %v5122 = vsel %vm2550, %v5056, %v5058
      %v5123 = vsel %vm2550, %v5060, %v5062
      %v5124 = vsel %vm2550, %v5062, %v5064
      %v5125 = vsel %vm2550, %v5066, %v5068
      %v5126 = vsel %vm2550, %v5068, %v5070
      %v5127 = vsel %vm2550, %v5072, %v5074
      %v5128 = vsel %vm2550, %v5074, %v5076
      %v5129 = vsel %vm2550, %v5078, %v5080
      %v5130 = vsel %vm2550, %v5080, %v5082
      %v5131 = vsel %vm2550, %v5084, %v5086
      %v5132 = vsel %vm2550, %v5086, %v5088
      %v5133 = vsel %vm2550, %v5090, %v5092
      %v5134 = vsel %vm2550, %v5092, %v5094
      %v5135 = vsel %vm2550, %v5096, %v5098
      %v5136 = vsel %vm2550, %v5098, %v5100
      %v5137 = vsel %vm2550, %v5102, %v5104
      %v5138 = vsel %vm2550, %v5104, %v5106
      %5171 = vmatprep.subr.mxu0 %v5138
      %5172 = vmatpush1.msra.mxu0 %v5137
      %5173 = vmatprep.subr.mxu0 %v5136
      %5174 = vmatpush1.msra.mxu0 %v5135
      %5175 = vmatprep.subr.mxu0 %v5134
      %5176 = vmatpush1.msra.mxu0 %v5133
      %5177 = vmatprep.subr.mxu0 %v5132
      %5178 = vmatpush1.msra.mxu0 %v5131
      %5179 = vmatprep.subr.mxu0 %v5130
      %5180 = vmatpush1.msra.mxu0 %v5129
      %5181 = vmatprep.subr.mxu0 %v5128
      %5182 = vmatpush1.msra.mxu0 %v5127
      %5183 = vmatprep.subr.mxu0 %v5126
      %5184 = vmatpush1.msra.mxu0 %v5125
      %5185 = vmatprep.subr.mxu0 %v5124
      %5186 = vmatpush1.msra.mxu0 %v5123
      %5187 = vmatprep.subr.mxu0 %v5122
      %5188 = vmatpush1.msra.mxu0 %v5121
      %5189 = vmatprep.subr.mxu0 %v5120
      %5190 = vmatpush1.msra.mxu0 %v5119
      %5191 = vmatprep.subr.mxu0 %v5118
      %5192 = vmatpush1.msra.mxu0 %v5117
      %5193 = vmatprep.subr.mxu0 %v5116
      %5194 = vmatpush1.msra.mxu0 %v5115
      %5195 = vmatprep.subr.mxu0 %v5114
      %5196 = vmatpush1.msra.mxu0 %v5113
      %5197 = vmatprep.subr.mxu0 %v5112
      %5198 = vmatpush1.msra.mxu0 %v5111
      %5199 = vmatprep.subr.mxu0 %v5110
      %5200 = vmatpush1.msra.mxu0 %v5109
      %5201 = vmatprep.subr.mxu0 %v5108
      %5202 = vmatpush1.msra.mxu0 %v5107
      %5203 = vmatprep.subr.mxu0 0.0
      %5204 = vmatpush2.msra.mxu0 0.0
      %5205 = vmatprep.subr.mxu0 0.0
      %5206 = vmatpush2.msra.mxu0 0.0
      %5207 = vmatprep.subr.mxu0 0.0
      %5208 = vmatpush2.msra.mxu0 0.0
      %5209 = vmatprep.subr.mxu0 0.0
      %5210 = vmatpush2.msra.mxu0 0.0
      %5211 = vmatprep.subr.mxu0 0.0
      %5212 = vmatpush2.msra.mxu0 0.0
      %5213 = vmatprep.subr.mxu0 0.0
      %5214 = vmatpush2.msra.mxu0 0.0
      %5215 = vmatprep.subr.mxu0 0.0
      %5216 = vmatpush2.msra.mxu0 0.0
      %5217 = vmatprep.subr.mxu0 0.0
      %5218 = vmatpush2.msra.mxu0 0.0
      %5219 = vmatprep.subr.mxu0 0.0
      %5220 = vmatpush2.msra.mxu0 0.0
      %5221 = vmatprep.subr.mxu0 0.0
      %5222 = vmatpush2.msra.mxu0 0.0
      %5223 = vmatprep.subr.mxu0 0.0
      %5224 = vmatpush2.msra.mxu0 0.0
      %5225 = vmatprep.subr.mxu0 0.0
      %5226 = vmatpush2.msra.mxu0 0.0
      %5227 = vmatprep.subr.mxu0 0.0
      %5228 = vmatpush2.msra.mxu0 0.0
      %5229 = vmatprep.subr.mxu0 0.0
      %5230 = vmatpush2.msra.mxu0 0.0
      %5231 = vmatprep.subr.mxu0 0.0
      %5232 = vmatpush2.msra.mxu0 0.0
      %5233 = vmatprep.subr.mxu0 0.0
      %5234 = vmatpush2.msra.mxu0 0.0
      %5235 = vmatprep.mubr.f32.mxu0 0.0
      %5236 = vmatmul.mubr.f32.gmra.mxu0 %v5010
      %v5237 = vpop.f32.mrf.mxu0
      %v5238 = vadd.f32 0.0, %v5237
      %v5239 = vpop.f32.mrf.mxu0
      %v5240 = vadd.f32 0.0, %v5239
      %5241 = vdwg.mxu0
      %v5242 = vmul.f32 %v5238, %v2505
      %v5243 = vmul.f32 %v5240, %v2509
      %v5244 = vadd.f32 %v5007, %v5242
      %v5245 = vadd.f32 %v5008, %v5243
      %s5246 = scalar_lea.vmem %s5, 64
      %v5247 = vld [vmem:[%s5246] sm:$0xff]
      %5248 = vrot.lane.b32.xlu0 %v3491, 94
      %v5249 = vpop.permute.xlu0 %5248
      %5250 = vrot.lane.b32.xlu0 %v3492, 94
      %v5251 = vpop.permute.xlu0 %5250
      %5252 = vrot.lane.b32.xlu0 %v3493, 94
      %v5253 = vpop.permute.xlu0 %5252
      %5254 = vrot.lane.b32.xlu0 %v3494, 94
      %v5255 = vpop.permute.xlu0 %5254
      %5256 = vrot.lane.b32.xlu0 %v3495, 94
      %v5257 = vpop.permute.xlu0 %5256
      %5258 = vrot.lane.b32.xlu0 %v3496, 94
      %v5259 = vpop.permute.xlu0 %5258
      %5260 = vrot.lane.b32.xlu0 %v3497, 94
      %v5261 = vpop.permute.xlu0 %5260
      %5262 = vrot.lane.b32.xlu0 %v3498, 94
      %v5263 = vpop.permute.xlu0 %5262
      %5264 = vrot.lane.b32.xlu0 %v3499, 94
      %v5265 = vpop.permute.xlu0 %5264
      %5266 = vrot.lane.b32.xlu0 %v3500, 94
      %v5267 = vpop.permute.xlu0 %5266
      %5268 = vrot.lane.b32.xlu0 %v3501, 94
      %v5269 = vpop.permute.xlu0 %5268
      %5270 = vrot.lane.b32.xlu0 %v3502, 94
      %v5271 = vpop.permute.xlu0 %5270
      %5272 = vrot.lane.b32.xlu0 %v3503, 94
      %v5273 = vpop.permute.xlu0 %5272
      %5274 = vrot.lane.b32.xlu0 %v3504, 94
      %v5275 = vpop.permute.xlu0 %5274
      %5276 = vrot.lane.b32.xlu0 %v3505, 94
      %v5277 = vpop.permute.xlu0 %5276
      %5278 = vrot.lane.b32.xlu0 %v3506, 94
      %v5279 = vpop.permute.xlu0 %5278
      %5280 = vrot.lane.b32.xlu0 %v3507, 94
      %v5281 = vpop.permute.xlu0 %5280
      %5282 = vrot.lane.b32.xlu0 %v3508, 94
      %v5283 = vpop.permute.xlu0 %5282
      %5284 = vrot.lane.b32.xlu0 %v3509, 94
      %v5285 = vpop.permute.xlu0 %5284
      %5286 = vrot.lane.b32.xlu0 %v3510, 94
      %v5287 = vpop.permute.xlu0 %5286
      %5288 = vrot.lane.b32.xlu0 %v3511, 94
      %v5289 = vpop.permute.xlu0 %5288
      %5290 = vrot.lane.b32.xlu0 %v3512, 94
      %v5291 = vpop.permute.xlu0 %5290
      %5292 = vrot.lane.b32.xlu0 %v3513, 94
      %v5293 = vpop.permute.xlu0 %5292
      %5294 = vrot.lane.b32.xlu0 %v3514, 94
      %v5295 = vpop.permute.xlu0 %5294
      %5296 = vrot.lane.b32.xlu0 %v3515, 94
      %v5297 = vpop.permute.xlu0 %5296
      %5298 = vrot.lane.b32.xlu0 %v3516, 94
      %v5299 = vpop.permute.xlu0 %5298
      %5300 = vrot.lane.b32.xlu0 %v3517, 94
      %v5301 = vpop.permute.xlu0 %5300
      %5302 = vrot.lane.b32.xlu0 %v3518, 94
      %v5303 = vpop.permute.xlu0 %5302
      %5304 = vrot.lane.b32.xlu0 %v3519, 94
      %v5305 = vpop.permute.xlu0 %5304
      %5306 = vrot.lane.b32.xlu0 %v3520, 94
      %v5307 = vpop.permute.xlu0 %5306
      %5308 = vrot.lane.b32.xlu0 %v3521, 94
      %v5309 = vpop.permute.xlu0 %5308
      %5310 = vrot.lane.b32.xlu0 %v3522, 94
      %v5311 = vpop.permute.xlu0 %5310
      %5312 = vrot.lane.b32.xlu0 %v3523, 94
      %v5313 = vpop.permute.xlu0 %5312
      %5314 = vrot.lane.b32.xlu0 %v3524, 94
      %v5315 = vpop.permute.xlu0 %5314
      %5316 = vrot.lane.b32.xlu0 %v3525, 94
      %v5317 = vpop.permute.xlu0 %5316
      %5318 = vrot.lane.b32.xlu0 %v3526, 94
      %v5319 = vpop.permute.xlu0 %5318
      %5320 = vrot.lane.b32.xlu0 %v3527, 94
      %v5321 = vpop.permute.xlu0 %5320
      %5322 = vrot.lane.b32.xlu0 %v3528, 94
      %v5323 = vpop.permute.xlu0 %5322
      %5324 = vrot.lane.b32.xlu0 %v3529, 94
      %v5325 = vpop.permute.xlu0 %5324
      %5326 = vrot.lane.b32.xlu0 %v3530, 94
      %v5327 = vpop.permute.xlu0 %5326
      %5328 = vrot.lane.b32.xlu0 %v3531, 94
      %v5329 = vpop.permute.xlu0 %5328
      %5330 = vrot.lane.b32.xlu0 %v3532, 94
      %v5331 = vpop.permute.xlu0 %5330
      %5332 = vrot.lane.b32.xlu0 %v3533, 94
      %v5333 = vpop.permute.xlu0 %5332
      %5334 = vrot.lane.b32.xlu0 %v3534, 94
      %v5335 = vpop.permute.xlu0 %5334
      %5336 = vrot.lane.b32.xlu0 %v3535, 94
      %v5337 = vpop.permute.xlu0 %5336
      %5338 = vrot.lane.b32.xlu0 %v3536, 94
      %v5339 = vpop.permute.xlu0 %5338
      %5340 = vrot.lane.b32.xlu0 %v3537, 94
      %v5341 = vpop.permute.xlu0 %5340
      %5342 = vrot.lane.b32.xlu0 %v3538, 94
      %v5343 = vpop.permute.xlu0 %5342
      %v5344 = vsel %vm2843, %v5249, %v5251
      %v5345 = vsel %vm2843, %v5251, %v5253
      %v5346 = vsel %vm2843, %v5255, %v5257
      %v5347 = vsel %vm2843, %v5257, %v5259
      %v5348 = vsel %vm2843, %v5261, %v5263
      %v5349 = vsel %vm2843, %v5263, %v5265
      %v5350 = vsel %vm2843, %v5267, %v5269
      %v5351 = vsel %vm2843, %v5269, %v5271
      %v5352 = vsel %vm2843, %v5273, %v5275
      %v5353 = vsel %vm2843, %v5275, %v5277
      %v5354 = vsel %vm2843, %v5279, %v5281
      %v5355 = vsel %vm2843, %v5281, %v5283
      %v5356 = vsel %vm2843, %v5285, %v5287
      %v5357 = vsel %vm2843, %v5287, %v5289
      %v5358 = vsel %vm2843, %v5291, %v5293
      %v5359 = vsel %vm2843, %v5293, %v5295
      %v5360 = vsel %vm2843, %v5297, %v5299
      %v5361 = vsel %vm2843, %v5299, %v5301
      %v5362 = vsel %vm2843, %v5303, %v5305
      %v5363 = vsel %vm2843, %v5305, %v5307
      %v5364 = vsel %vm2843, %v5309, %v5311
      %v5365 = vsel %vm2843, %v5311, %v5313
      %v5366 = vsel %vm2843, %v5315, %v5317
      %v5367 = vsel %vm2843, %v5317, %v5319
      %v5368 = vsel %vm2843, %v5321, %v5323
      %v5369 = vsel %vm2843, %v5323, %v5325
      %v5370 = vsel %vm2843, %v5327, %v5329
      %v5371 = vsel %vm2843, %v5329, %v5331
      %v5372 = vsel %vm2843, %v5333, %v5335
      %v5373 = vsel %vm2843, %v5335, %v5337
      %v5374 = vsel %vm2843, %v5339, %v5341
      %v5375 = vsel %vm2843, %v5341, %v5343
      %5408 = vmatprep.subr.mxu0 %v5375
      %5409 = vmatpush1.msra.mxu0 %v5374
      %5410 = vmatprep.subr.mxu0 %v5373
      %5411 = vmatpush1.msra.mxu0 %v5372
      %5412 = vmatprep.subr.mxu0 %v5371
      %5413 = vmatpush1.msra.mxu0 %v5370
      %5414 = vmatprep.subr.mxu0 %v5369
      %5415 = vmatpush1.msra.mxu0 %v5368
      %5416 = vmatprep.subr.mxu0 %v5367
      %5417 = vmatpush1.msra.mxu0 %v5366
      %5418 = vmatprep.subr.mxu0 %v5365
      %5419 = vmatpush1.msra.mxu0 %v5364
      %5420 = vmatprep.subr.mxu0 %v5363
      %5421 = vmatpush1.msra.mxu0 %v5362
      %5422 = vmatprep.subr.mxu0 %v5361
      %5423 = vmatpush1.msra.mxu0 %v5360
      %5424 = vmatprep.subr.mxu0 %v5359
      %5425 = vmatpush1.msra.mxu0 %v5358
      %5426 = vmatprep.subr.mxu0 %v5357
      %5427 = vmatpush1.msra.mxu0 %v5356
      %5428 = vmatprep.subr.mxu0 %v5355
      %5429 = vmatpush1.msra.mxu0 %v5354
      %5430 = vmatprep.subr.mxu0 %v5353
      %5431 = vmatpush1.msra.mxu0 %v5352
      %5432 = vmatprep.subr.mxu0 %v5351
      %5433 = vmatpush1.msra.mxu0 %v5350
      %5434 = vmatprep.subr.mxu0 %v5349
      %5435 = vmatpush1.msra.mxu0 %v5348
      %5436 = vmatprep.subr.mxu0 %v5347
      %5437 = vmatpush1.msra.mxu0 %v5346
      %5438 = vmatprep.subr.mxu0 %v5345
      %5439 = vmatpush1.msra.mxu0 %v5344
      %5440 = vmatprep.subr.mxu0 0.0
      %5441 = vmatpush2.msra.mxu0 0.0
      %5442 = vmatprep.subr.mxu0 0.0
      %5443 = vmatpush2.msra.mxu0 0.0
      %5444 = vmatprep.subr.mxu0 0.0
      %5445 = vmatpush2.msra.mxu0 0.0
      %5446 = vmatprep.subr.mxu0 0.0
      %5447 = vmatpush2.msra.mxu0 0.0
      %5448 = vmatprep.subr.mxu0 0.0
      %5449 = vmatpush2.msra.mxu0 0.0
      %5450 = vmatprep.subr.mxu0 0.0
      %5451 = vmatpush2.msra.mxu0 0.0
      %5452 = vmatprep.subr.mxu0 0.0
      %5453 = vmatpush2.msra.mxu0 0.0
      %5454 = vmatprep.subr.mxu0 0.0
      %5455 = vmatpush2.msra.mxu0 0.0
      %5456 = vmatprep.subr.mxu0 0.0
      %5457 = vmatpush2.msra.mxu0 0.0
      %5458 = vmatprep.subr.mxu0 0.0
      %5459 = vmatpush2.msra.mxu0 0.0
      %5460 = vmatprep.subr.mxu0 0.0
      %5461 = vmatpush2.msra.mxu0 0.0
      %5462 = vmatprep.subr.mxu0 0.0
      %5463 = vmatpush2.msra.mxu0 0.0
      %5464 = vmatprep.subr.mxu0 0.0
      %5465 = vmatpush2.msra.mxu0 0.0
      %5466 = vmatprep.subr.mxu0 0.0
      %5467 = vmatpush2.msra.mxu0 0.0
      %5468 = vmatprep.subr.mxu0 0.0
      %5469 = vmatpush2.msra.mxu0 0.0
      %5470 = vmatprep.subr.mxu0 0.0
      %5471 = vmatpush2.msra.mxu0 0.0
      %5472 = vmatprep.mubr.f32.mxu0 0.0
      %5473 = vmatmul.mubr.f32.gmra.mxu0 %v5247
      %v5474 = vpop.f32.mrf.mxu0
      %v5475 = vadd.f32 0.0, %v5474
      %v5476 = vpop.f32.mrf.mxu0
      %v5477 = vadd.f32 0.0, %v5476
      %5478 = vdwg.mxu0
      %v5479 = vmul.f32 %v5475, %v2799
      %v5480 = vmul.f32 %v5477, %v2803
      %v5481 = vadd.f32 %v5244, %v5479
      %v5482 = vadd.f32 %v5245, %v5480
      %v5483 = vadd.f32 %v5481, 1.0
      %v5484 = vadd.f32 %v5482, 1.0
      %v5487 = vcombine.low %v5483, %v5484
      %v5489 = vmul.f32 %v344, %v5487
      %v5492 = vcombine.high %v5481, %v5482
      %v5494 = vadd.f32 %v5489, %v5492
      %5495 = vst [vmem:[%s298] sm:$0xff] %v5494
      %p5496 = scmp.lt.s32.totalorder %s18, 1
      %s5497 = scalar_select %p5496, %s18, 1
      %s5498 = smul.addr %s5497, 2
      %s5499 = smul.addr %s5498, 4
      %s5500 = scalar_lea.vmem %s7, %s5499
      // Predicated region
      $region49: #{spade_forward.1} parent=47 // pred_check
        %p5501 = pneg %p193
      $region50: #{spade_forward.1} parent=47 // pred_check_branch
        %5503 = sbr.rel (%p5501) target = $region52
      $region51: #{spade_forward.1} parent=47 // pred_region
        _
      $region52: #{spade_forward.1} parent=47 // pred_fallthru
        _
    $region48: #{spade_forward.1} parent=5 // pred_fallthru
      _
    %p5504 = scmp.le.s32.totalorder 2, %s13
    // Predicated region
    $region53: #{spade_forward.1} parent=5 // pred_check
      %p5505 = pneg %p5504
    $region54: #{spade_forward.1} parent=5 // pred_check_branch
      %5507 = sbr.rel (%p5505) target = $region56
    $region55: #{spade_forward.1} parent=5 // pred_region
      %s5508 = ssub.s32 %s13, 2
      // Predicated region
      $region57: #{spade_forward.1} parent=55 // pred_check
        %p5509 = pneg %p199
      $region58: #{spade_forward.1} parent=55 // pred_check_branch
        %5511 = sbr.rel (%p5509) target = $region60
      $region59: #{spade_forward.1} parent=55 // pred_region
        %p5512 = scmp.lt.s32.totalorder %s19, 1
        %s5513 = scalar_select %p5512, %s19, 1
        %s5514 = smul.addr %s5513, 2
        %s5515 = smul.addr %s5514, 4
        %s5516 = scalar_lea.vmem %s7, %s5515
      $region60: #{spade_forward.1} parent=55 // pred_fallthru
        _
    $region56: #{spade_forward.1} parent=5 // pred_fallthru
      _
  $region6: #{spade_forward.1} parent=0 // loop_footer
    %s17 = sadd.s32 1, %s13
  $region7: #{spade_forward.1} parent=0 // loop_footer_branch
    %12 = sbr.rel target = $region3
  $region8: #{spade_forward.1} parent=0 // loop_exit
    _

</llo_original>
